<compile_context>
chip_gen: v6e
topology: v6e:2x2x1
jax: 0.10.0
libtpu: 0.0.40
codegen_flags: <defaults>
</compile_context>

<pallas_src>
from functools import partial

import numpy as np

import jax
import jax.numpy as jnp
from jax.experimental import pallas as pl
from jax.experimental.pallas import tpu as pltpu


# --------------------------------------------------------------------------
# Fused LeNet kernel: one batch-tile per grid step, everything stays in VMEM.
# --------------------------------------------------------------------------

def _lenet_kernel(b_tile, dot_dtype, x_ref, w1_ref, rp_ref, w2_ref, m1_ref,
                  w23_ref, bias_ref, o_ref):
    f32 = jnp.float32
    B = b_tile
    x = x_ref[...]                                         # (B, 28, 28) f32

    # conv1 + ReLU: 5 kernel rows K-fused into one (B*24,140)@(140,144) dot.
    lhs1 = jnp.concatenate([x[:, i:i + 24, :] for i in range(5)], axis=-1)
    lhs1 = lhs1.reshape(B * 24, 5 * 28).astype(dot_dtype)
    y1 = jnp.dot(lhs1, w1_ref[...], preferred_element_type=f32)
    y1 = jnp.maximum(y1 + bias_ref[0:1, :], 0.0)           # (B*24, 144)

    # stage-1 2x2 avg-pool: rows via one block-diagonal matmul over the tile
    # (12 real + 4 zero rows per image keep the reshape tile-aligned);
    # column pooling is folded into the conv2 band weights at prep time.
    a1 = jnp.dot(rp_ref[...], y1.astype(dot_dtype), preferred_element_type=f32)
    a1 = a1.reshape(B, 16, 144)

    # conv2 + ReLU: 5 kernel rows K-fused into one (B*8,720)@(720,128) dot.
    lhs2 = jnp.concatenate([a1[:, i:i + 8, :] for i in range(5)], axis=-1)
    lhs2 = lhs2.reshape(B * 8, 5 * 144).astype(dot_dtype)
    y2 = jnp.dot(lhs2, w2_ref[...], preferred_element_type=f32)
    y2 = jnp.maximum(y2 + bias_ref[1:2, 0:128], 0.0)       # (B*8, 128)

    # fc1 + ReLU: stage-2 avg-pool + NCHW flatten are folded into m1, so the
    # LHS is just each image's 8 conv2 rows laid out along lanes (B, 1024).
    y2 = y2.reshape(B, 8, 128)
    lhs3 = jnp.concatenate([y2[:, r, :] for r in range(8)], axis=-1)
    h1 = jnp.dot(lhs3.astype(dot_dtype), m1_ref[...], preferred_element_type=f32)
    h1 = jnp.maximum(h1 + bias_ref[2:3, 0:128], 0.0)       # (B, 128)

    # fc2 + fc3 collapsed into a single affine map at prep time.
    out = jnp.dot(h1.astype(dot_dtype), w23_ref[...], preferred_element_type=f32)
    o_ref[...] = out + bias_ref[3:4, 0:128]                # lane-dense (B,128)


# --------------------------------------------------------------------------
# One-time host-side parameter prep: banded/K-fused conv matrices, pooling
# and flatten folds, fc2+fc3 collapse, 128-lane padding, bf16 weight storage.
# --------------------------------------------------------------------------

def prepare_params(p, dot_dtype=jnp.bfloat16):
    f32 = np.float32
    w1 = np.asarray(p['conv1_w'], f32)   # (6, 1, 5, 5)
    b1 = np.asarray(p['conv1_b'], f32)   # (6,)
    w2 = np.asarray(p['conv2_w'], f32)   # (16, 6, 5, 5)
    b2 = np.asarray(p['conv2_b'], f32)   # (16,)
    l1w = np.asarray(p['l1_w'], f32)     # (120, 256)
    l1b = np.asarray(p['l1_b'], f32)
    l2w = np.asarray(p['l2_w'], f32)     # (84, 120)
    l2b = np.asarray(p['l2_b'], f32)
    l3w = np.asarray(p['l3_w'], f32)     # (10, 84)
    l3b = np.asarray(p['l3_b'], f32)

    # conv1, K-fused banded matrix (5*28, 24*6); output lanes f1 = q*6 + o.
    W1 = np.zeros((5, 28, 24 * 6), f32)
    for i in range(5):
        for q in range(24):
            for j in range(5):
                W1[i, q + j, q * 6:q * 6 + 6] = w1[:, 0, i, j]
    W1 = W1.reshape(5 * 28, 24 * 6)

    # stage-1 column pooling fold: lanes f1 = q*6+o (144) -> g1 = o*12+q' (72).
    P1 = np.zeros((24 * 6, 6 * 12), f32)
    for o in range(6):
        for qp in range(12):
            P1[(2 * qp) * 6 + o, o * 12 + qp] = 0.5
            P1[(2 * qp + 1) * 6 + o, o * 12 + qp] = 0.5

    # conv2 banded (input lanes g1 = c*12+q', output lanes f2 = o*8+q),
    # with the stage-1 column pooling folded in, then K-fused to (720, 128).
    W2r = np.zeros((5, 6 * 12, 16 * 8), f32)
    for i in range(5):
        for c in range(6):
            for q in range(8):
                for j in range(5):
                    W2r[i, c * 12 + q + j, q::8] = w2[:, c, i, j]
    W2 = np.einsum('fg,igm->ifm', P1, W2r).reshape(5 * 144, 128)

    # fc1 with stage-2 avg-pool (rows & cols) + NCHW flatten folded in:
    # y2 flat index r*128 + o*8 + q  ->  0.25 * l1w[:, o*16 + (r//2)*4 + (q//2)]
    M1 = np.zeros((8 * 128, 128), f32)
    for r in range(8):
        for o in range(16):
            for q in range(8):
                M1[r * 128 + o * 8 + q, :120] = \
                    0.25 * l1w[:, o * 16 + (r // 2) * 4 + (q // 2)]

    # fc2 + fc3 collapsed into one affine map (no activation between them).
    W23 = np.zeros((128, 128), f32)
    W23[:120, :10] = l2w.T @ l3w.T
    b23 = np.zeros((128,), f32)
    b23[:10] = l2b @ l3w.T + l3b

    # packed biases (kept f32): row0=conv1, row1=conv2, row2=fc1, row3=fc2+3.
    BIAS = np.zeros((4, 144), f32)
    BIAS[0, :144] = np.tile(b1, 24)        # lane q*6+o -> b1[o]
    BIAS[1, :128] = np.repeat(b2, 8)       # lane o*8+q -> b2[o]
    BIAS[2, :120] = l1b
    BIAS[3, :128] = b23

    return {
        'W1': jnp.asarray(W1, dot_dtype),
        'W2': jnp.asarray(W2, dot_dtype),
        'M1': jnp.asarray(M1, dot_dtype),
        'W23': jnp.asarray(W23, dot_dtype),
        'BIAS': jnp.asarray(BIAS, jnp.float32),
    }


def _row_pool1(b_tile, dtype):
    """Block-diagonal stage-1 row-pooling matrix for a whole batch tile.

    Maps (b*24 + s) -> (b*16 + r):  row r<12 gets 0.5*(row 2r) + 0.5*(row 2r+1),
    rows 12..15 per image are zero padding (keeps reshapes tile-aligned).
    """
    rp = np.zeros((b_tile * 16, b_tile * 24), np.float32)
    for b in range(b_tile):
        for r in range(12):
            rp[b * 16 + r, b * 24 + 2 * r] = 0.5
            rp[b * 16 + r, b * 24 + 2 * r + 1] = 0.5
    return jnp.asarray(rp, dtype)


def lenet_forward(x, wp, b_tile=8):
    """x: (N, 1, 28, 28) float32, wp: prepare_params(...) dict -> (N, 10)."""
    N = x.shape[0]
    assert x.shape[1:] == (1, 28, 28)
    # Keep the grid >= 2 steps when possible (v7x has two TensorCores).
    B = int(min(b_tile, max(1, (N + 1) // 2)))
    npad = -(-N // B) * B
    dot_dtype = wp['W1'].dtype

    x2 = x.astype(jnp.float32).reshape(N, 28, 28)
    if npad != N:
        x2 = jnp.concatenate(
            [x2, jnp.zeros((npad - N, 28, 28), jnp.float32)], axis=0)

    rp1 = _row_pool1(B, dot_dtype)
    consts = (wp['W1'], rp1, wp['W2'], wp['M1'], wp['W23'], wp['BIAS'])

    def const_spec(c):
        nd = c.ndim
        return pl.BlockSpec(c.shape, lambda n, nd=nd: (0,) * nd)

    out = pl.pallas_call(
        partial(_lenet_kernel, B, dot_dtype),
        out_shape=jax.ShapeDtypeStruct((npad, 128), jnp.float32),
        grid=(npad // B,),
        in_specs=[pl.BlockSpec((B, 28, 28), lambda n: (n, 0, 0))]
                 + [const_spec(c) for c in consts],
        out_specs=pl.BlockSpec((B, 128), lambda n: (n, 0)),
        compiler_params=pltpu.CompilerParams(
            dimension_semantics=("parallel",),
            vmem_limit_bytes=32 * 1024 * 1024),
    )(x2, *consts)
    # kernel writes lane-dense (B,128) blocks; slice the 10 real logits here.
    return out[:N, :10]


# --------------------------------------------------------------------------
# Pure-JAX reference (original module semantics) for validation.
# --------------------------------------------------------------------------

def lenet_reference(x, p):
    def conv(x, w, b):
        y = jax.lax.conv_general_dilated(
            x, w, (1, 1), 'VALID',
            dimension_numbers=('NCHW', 'OIHW', 'NCHW'))
        return y + b.reshape(1, -1, 1, 1)

    def pool(x):
        N, C, H, W = x.shape
        return x.reshape(N, C, H // 2, 2, W // 2, 2).mean(axis=(3, 5))

    y = jax.nn.relu(conv(x, p['conv1_w'], p['conv1_b']))
    y = pool(y)
    y = jax.nn.relu(conv(y, p['conv2_w'], p['conv2_b']))
    y = pool(y)
    y = y.reshape(x.shape[0], -1)
    y = jax.nn.relu(y @ p['l1_w'].T + p['l1_b'])
    y = y @ p['l2_w'].T + p['l2_b']
    y = y @ p['l3_w'].T + p['l3_b']
    return y


# --------------------------------------------------------------------------
# Deterministic parameter init (shapes from the PyTorch module __init__).
# --------------------------------------------------------------------------

def init_params(key):
    def uniform(k, shape, fan_in):
        bound = 1.0 / float(fan_in) ** 0.5
        return jax.random.uniform(k, shape, jnp.float32, -bound, bound)

    ks = jax.random.split(key, 10)
    return {
        'conv1_w': uniform(ks[0], (6, 1, 5, 5), 25),
        'conv1_b': uniform(ks[1], (6,), 25),
        'conv2_w': uniform(ks[2], (16, 6, 5, 5), 150),
        'conv2_b': uniform(ks[3], (16,), 150),
        'l1_w': uniform(ks[4], (120, 256), 256),
        'l1_b': uniform(ks[5], (120,), 256),
        'l2_w': uniform(ks[6], (84, 120), 120),
        'l2_b': uniform(ks[7], (84,), 120),
        'l3_w': uniform(ks[8], (10, 84), 84),
        'l3_b': uniform(ks[9], (10,), 84),
    }


if __name__ == "__main__":
    key = jax.random.PRNGKey(0)
    pkey, xkey = jax.random.split(key)
    params = init_params(pkey)
    # NCHW, 28x28 single-channel input (linear1 expects 16*4*4 = 256).
    # Batch 16 -> two grid steps of 8 images (keeps both v7x TCs busy).
    x = jax.random.normal(xkey, (16, 1, 28, 28), jnp.float32)

    prepped = prepare_params(params)          # one-time host-side weight prep
    fwd = jax.jit(lenet_forward)
    out = jax.block_until_ready(fwd(x, prepped))
    assert out.shape == (16, 10) and out.dtype == jnp.float32

    ref = lenet_reference(x, params)
    max_err = float(jnp.max(jnp.abs(out - ref)))
    # bf16 MXU operands (f32 accumulate): allow a few bf16 ulps of drift;
    # any structural/indexing bug would produce O(0.1) errors and still fail.
    if not jnp.allclose(out, ref, atol=1e-2, rtol=1e-2):
        raise AssertionError(
            f"Pallas LeNet output mismatch vs JAX reference (max abs err {max_err})")

    print("KERNEL_OK")
</pallas_src>

<mosaic_0001>
module attributes {stable_mosaic.version = 11 : i64} {
  func.func @_lenet_kernel(%arg0: i32, %arg1: memref<8x28x28xf32, #tpu.memory_space<vmem>>, %arg2: memref<140x144xbf16, #tpu.memory_space<vmem>>, %arg3: memref<128x192xbf16, #tpu.memory_space<vmem>>, %arg4: memref<720x128xbf16, #tpu.memory_space<vmem>>, %arg5: memref<1024x128xbf16, #tpu.memory_space<vmem>>, %arg6: memref<128x128xbf16, #tpu.memory_space<vmem>>, %arg7: memref<4x144xf32, #tpu.memory_space<vmem>>, %arg8: memref<8x128xf32, #tpu.memory_space<vmem>>) attributes {dimension_semantics = [#tpu.dimension_semantics<parallel>], iteration_bounds = array<i64: 2>, scalar_prefetch = 0 : i64, scratch_operands = 0 : i64, tpu.core_type = #tpu.core_type<tc>, window_params = [{transform_indices = @transform_0, window_bounds = array<i64: 8, 28, 28>}, {pipeline_mode = #tpu.pipeline_mode<synchronous>, transform_indices = @transform_1, window_bounds = array<i64: 140, 144>}, {pipeline_mode = #tpu.pipeline_mode<synchronous>, transform_indices = @transform_2, window_bounds = array<i64: 128, 192>}, {pipeline_mode = #tpu.pipeline_mode<synchronous>, transform_indices = @transform_3, window_bounds = array<i64: 720, 128>}, {pipeline_mode = #tpu.pipeline_mode<synchronous>, transform_indices = @transform_4, window_bounds = array<i64: 1024, 128>}, {pipeline_mode = #tpu.pipeline_mode<synchronous>, transform_indices = @transform_5, window_bounds = array<i64: 128, 128>}, {pipeline_mode = #tpu.pipeline_mode<synchronous>, transform_indices = @transform_6, window_bounds = array<i64: 4, 144>}, {transform_indices = @transform_7, window_bounds = array<i64: 8, 128>}]} {
    %c0 = arith.constant 0 : index
    %c0_0 = arith.constant 0 : index
    %c0_1 = arith.constant 0 : index
    %0 = vector.load %arg1[%c0, %c0_0, %c0_1] : memref<8x28x28xf32, #tpu.memory_space<vmem>>, vector<8x28x28xf32>
    %1 = vector.extract_strided_slice %0 {offsets = [0, 0, 0], sizes = [8, 24, 28], strides = [1, 1, 1]} : vector<8x28x28xf32> to vector<8x24x28xf32>
    %2 = vector.extract_strided_slice %0 {offsets = [0, 1, 0], sizes = [8, 24, 28], strides = [1, 1, 1]} : vector<8x28x28xf32> to vector<8x24x28xf32>
    %3 = vector.extract_strided_slice %0 {offsets = [0, 2, 0], sizes = [8, 24, 28], strides = [1, 1, 1]} : vector<8x28x28xf32> to vector<8x24x28xf32>
    %4 = vector.extract_strided_slice %0 {offsets = [0, 3, 0], sizes = [8, 24, 28], strides = [1, 1, 1]} : vector<8x28x28xf32> to vector<8x24x28xf32>
    %5 = vector.extract_strided_slice %0 {offsets = [0, 4, 0], sizes = [8, 24, 28], strides = [1, 1, 1]} : vector<8x28x28xf32> to vector<8x24x28xf32>
    %6 = tpu.concatenate %1, %2, %3, %4, %5 in 2 : vector<8x24x28xf32>, vector<8x24x28xf32>, vector<8x24x28xf32>, vector<8x24x28xf32>, vector<8x24x28xf32> -> vector<8x24x140xf32>
    %7 = vector.shape_cast %6 : vector<8x24x140xf32> to vector<192x140xf32>
    %8 = arith.truncf %7 : vector<192x140xf32> to vector<192x140xbf16>
    %c0_2 = arith.constant 0 : index
    %c0_3 = arith.constant 0 : index
    %9 = vector.load %arg2[%c0_2, %c0_3] : memref<140x144xbf16, #tpu.memory_space<vmem>>, vector<140x144xbf16>
    %cst = arith.constant dense<0.000000e+00> : vector<192x144xf32>
    %10 = tpu.matmul %8, %9, %cst {dimension_numbers = #tpu.dot_dimension_numbers<[1], [0], [0], [1], [0, 0, 1, 1], [], []>} : vector<192x140xbf16>, vector<140x144xbf16>, vector<192x144xf32> -> vector<192x144xf32>
    %c0_4 = arith.constant 0 : index
    %c0_5 = arith.constant 0 : index
    %11 = vector.load %arg7[%c0_4, %c0_5] : memref<4x144xf32, #tpu.memory_space<vmem>>, vector<1x144xf32>
    %12 = vector.broadcast %11 : vector<1x144xf32> to vector<192x144xf32>
    %13 = arith.addf %10, %12 : vector<192x144xf32>
    %cst_6 = arith.constant 0.000000e+00 : f32
    %14 = vector.broadcast %cst_6 : f32 to vector<192x144xf32>
    %15 = arith.maximumf %13, %14 : vector<192x144xf32>
    %c0_7 = arith.constant 0 : index
    %c0_8 = arith.constant 0 : index
    %16 = vector.load %arg3[%c0_7, %c0_8] : memref<128x192xbf16, #tpu.memory_space<vmem>>, vector<128x192xbf16>
    %17 = arith.truncf %15 : vector<192x144xf32> to vector<192x144xbf16>
    %cst_9 = arith.constant dense<0.000000e+00> : vector<128x144xf32>
    %18 = tpu.matmul %16, %17, %cst_9 {dimension_numbers = #tpu.dot_dimension_numbers<[1], [0], [0], [1], [0, 0, 1, 1], [], []>} : vector<128x192xbf16>, vector<192x144xbf16>, vector<128x144xf32> -> vector<128x144xf32>
    %19 = vector.shape_cast %18 : vector<128x144xf32> to vector<8x16x144xf32>
    %20 = vector.extract_strided_slice %19 {offsets = [0, 0, 0], sizes = [8, 8, 144], strides = [1, 1, 1]} : vector<8x16x144xf32> to vector<8x8x144xf32>
    %21 = vector.extract_strided_slice %19 {offsets = [0, 1, 0], sizes = [8, 8, 144], strides = [1, 1, 1]} : vector<8x16x144xf32> to vector<8x8x144xf32>
    %22 = vector.extract_strided_slice %19 {offsets = [0, 2, 0], sizes = [8, 8, 144], strides = [1, 1, 1]} : vector<8x16x144xf32> to vector<8x8x144xf32>
    %23 = vector.extract_strided_slice %19 {offsets = [0, 3, 0], sizes = [8, 8, 144], strides = [1, 1, 1]} : vector<8x16x144xf32> to vector<8x8x144xf32>
    %24 = vector.extract_strided_slice %19 {offsets = [0, 4, 0], sizes = [8, 8, 144], strides = [1, 1, 1]} : vector<8x16x144xf32> to vector<8x8x144xf32>
    %25 = tpu.concatenate %20, %21, %22, %23, %24 in 2 : vector<8x8x144xf32>, vector<8x8x144xf32>, vector<8x8x144xf32>, vector<8x8x144xf32>, vector<8x8x144xf32> -> vector<8x8x720xf32>
    %26 = vector.shape_cast %25 : vector<8x8x720xf32> to vector<64x720xf32>
    %27 = arith.truncf %26 : vector<64x720xf32> to vector<64x720xbf16>
    %c0_10 = arith.constant 0 : index
    %c0_11 = arith.constant 0 : index
    %28 = vector.load %arg4[%c0_10, %c0_11] : memref<720x128xbf16, #tpu.memory_space<vmem>>, vector<720x128xbf16>
    %cst_12 = arith.constant dense<0.000000e+00> : vector<64x128xf32>
    %29 = tpu.matmul %27, %28, %cst_12 {dimension_numbers = #tpu.dot_dimension_numbers<[1], [0], [0], [1], [0, 0, 1, 1], [], []>} : vector<64x720xbf16>, vector<720x128xbf16>, vector<64x128xf32> -> vector<64x128xf32>
    %c1 = arith.constant 1 : index
    %c0_13 = arith.constant 0 : index
    %30 = vector.load %arg7[%c1, %c0_13] : memref<4x144xf32, #tpu.memory_space<vmem>>, vector<1x128xf32>
    %31 = vector.broadcast %30 : vector<1x128xf32> to vector<64x128xf32>
    %32 = arith.addf %29, %31 : vector<64x128xf32>
    %cst_14 = arith.constant 0.000000e+00 : f32
    %33 = vector.broadcast %cst_14 : f32 to vector<64x128xf32>
    %34 = arith.maximumf %32, %33 : vector<64x128xf32>
    %35 = vector.shape_cast %34 : vector<64x128xf32> to vector<8x8x128xf32>
    %36 = vector.extract_strided_slice %35 {offsets = [0, 0, 0], sizes = [8, 1, 128], strides = [1, 1, 1]} : vector<8x8x128xf32> to vector<8x1x128xf32>
    %37 = vector.shape_cast %36 : vector<8x1x128xf32> to vector<8x128xf32>
    %38 = vector.extract_strided_slice %35 {offsets = [0, 1, 0], sizes = [8, 1, 128], strides = [1, 1, 1]} : vector<8x8x128xf32> to vector<8x1x128xf32>
    %39 = vector.shape_cast %38 : vector<8x1x128xf32> to vector<8x128xf32>
    %40 = vector.extract_strided_slice %35 {offsets = [0, 2, 0], sizes = [8, 1, 128], strides = [1, 1, 1]} : vector<8x8x128xf32> to vector<8x1x128xf32>
    %41 = vector.shape_cast %40 : vector<8x1x128xf32> to vector<8x128xf32>
    %42 = vector.extract_strided_slice %35 {offsets = [0, 3, 0], sizes = [8, 1, 128], strides = [1, 1, 1]} : vector<8x8x128xf32> to vector<8x1x128xf32>
    %43 = vector.shape_cast %42 : vector<8x1x128xf32> to vector<8x128xf32>
    %44 = vector.extract_strided_slice %35 {offsets = [0, 4, 0], sizes = [8, 1, 128], strides = [1, 1, 1]} : vector<8x8x128xf32> to vector<8x1x128xf32>
    %45 = vector.shape_cast %44 : vector<8x1x128xf32> to vector<8x128xf32>
    %46 = vector.extract_strided_slice %35 {offsets = [0, 5, 0], sizes = [8, 1, 128], strides = [1, 1, 1]} : vector<8x8x128xf32> to vector<8x1x128xf32>
    %47 = vector.shape_cast %46 : vector<8x1x128xf32> to vector<8x128xf32>
    %48 = vector.extract_strided_slice %35 {offsets = [0, 6, 0], sizes = [8, 1, 128], strides = [1, 1, 1]} : vector<8x8x128xf32> to vector<8x1x128xf32>
    %49 = vector.shape_cast %48 : vector<8x1x128xf32> to vector<8x128xf32>
    %50 = vector.extract_strided_slice %35 {offsets = [0, 7, 0], sizes = [8, 1, 128], strides = [1, 1, 1]} : vector<8x8x128xf32> to vector<8x1x128xf32>
    %51 = vector.shape_cast %50 : vector<8x1x128xf32> to vector<8x128xf32>
    %52 = tpu.concatenate %37, %39, %41, %43, %45, %47, %49, %51 in 1 : vector<8x128xf32>, vector<8x128xf32>, vector<8x128xf32>, vector<8x128xf32>, vector<8x128xf32>, vector<8x128xf32>, vector<8x128xf32>, vector<8x128xf32> -> vector<8x1024xf32>
    %53 = arith.truncf %52 : vector<8x1024xf32> to vector<8x1024xbf16>
    %c0_15 = arith.constant 0 : index
    %c0_16 = arith.constant 0 : index
    %54 = vector.load %arg5[%c0_15, %c0_16] : memref<1024x128xbf16, #tpu.memory_space<vmem>>, vector<1024x128xbf16>
    %cst_17 = arith.constant dense<0.000000e+00> : vector<8x128xf32>
    %55 = tpu.matmul %53, %54, %cst_17 {dimension_numbers = #tpu.dot_dimension_numbers<[1], [0], [0], [1], [0, 0, 1, 1], [], []>} : vector<8x1024xbf16>, vector<1024x128xbf16>, vector<8x128xf32> -> vector<8x128xf32>
    %c2 = arith.constant 2 : index
    %c0_18 = arith.constant 0 : index
    %56 = vector.load %arg7[%c2, %c0_18] : memref<4x144xf32, #tpu.memory_space<vmem>>, vector<1x128xf32>
    %57 = vector.broadcast %56 : vector<1x128xf32> to vector<8x128xf32>
    %58 = arith.addf %55, %57 : vector<8x128xf32>
    %cst_19 = arith.constant 0.000000e+00 : f32
    %59 = vector.broadcast %cst_19 : f32 to vector<8x128xf32>
    %60 = arith.maximumf %58, %59 : vector<8x128xf32>
    %61 = arith.truncf %60 : vector<8x128xf32> to vector<8x128xbf16>
    %c0_20 = arith.constant 0 : index
    %c0_21 = arith.constant 0 : index
    %62 = vector.load %arg6[%c0_20, %c0_21] : memref<128x128xbf16, #tpu.memory_space<vmem>>, vector<128x128xbf16>
    %cst_22 = arith.constant dense<0.000000e+00> : vector<8x128xf32>
    %63 = tpu.matmul %61, %62, %cst_22 {dimension_numbers = #tpu.dot_dimension_numbers<[1], [0], [0], [1], [0, 0, 1, 1], [], []>} : vector<8x128xbf16>, vector<128x128xbf16>, vector<8x128xf32> -> vector<8x128xf32>
    %c3 = arith.constant 3 : index
    %c0_23 = arith.constant 0 : index
    %64 = vector.load %arg7[%c3, %c0_23] : memref<4x144xf32, #tpu.memory_space<vmem>>, vector<1x128xf32>
    %65 = vector.broadcast %64 : vector<1x128xf32> to vector<8x128xf32>
    %66 = arith.addf %63, %65 : vector<8x128xf32>
    %c0_24 = arith.constant 0 : index
    %c0_25 = arith.constant 0 : index
    %67 = vector.load %arg8[%c0_24, %c0_25] : memref<8x128xf32, #tpu.memory_space<vmem>>, vector<8x128xf32>
    tpu.vector_store %arg8[%c0_24, %c0_25], %66 {strides = array<i32>} : memref<8x128xf32, #tpu.memory_space<vmem>>, vector<8x128xf32>,
    return
  }
  func.func @transform_0(%arg0: i32) -> (i32, i32, i32) {
    %c0_i32 = arith.constant 0 : i32
    %c0_i32_0 = arith.constant 0 : i32
    %c0_i32_1 = arith.constant 0 : i32
    return %arg0, %c0_i32, %c0_i32_0 : i32, i32, i32
  }
  func.func @transform_1(%arg0: i32) -> (i32, i32) {
    %c0_i32 = arith.constant 0 : i32
    %c0_i32_0 = arith.constant 0 : i32
    %c0_i32_1 = arith.constant 0 : i32
    return %c0_i32, %c0_i32_0 : i32, i32
  }
  func.func @transform_2(%arg0: i32) -> (i32, i32) {
    %c0_i32 = arith.constant 0 : i32
    %c0_i32_0 = arith.constant 0 : i32
    %c0_i32_1 = arith.constant 0 : i32
    return %c0_i32, %c0_i32_0 : i32, i32
  }
  func.func @transform_3(%arg0: i32) -> (i32, i32) {
    %c0_i32 = arith.constant 0 : i32
    %c0_i32_0 = arith.constant 0 : i32
    %c0_i32_1 = arith.constant 0 : i32
    return %c0_i32, %c0_i32_0 : i32, i32
  }
  func.func @transform_4(%arg0: i32) -> (i32, i32) {
    %c0_i32 = arith.constant 0 : i32
    %c0_i32_0 = arith.constant 0 : i32
    %c0_i32_1 = arith.constant 0 : i32
    return %c0_i32, %c0_i32_0 : i32, i32
  }
  func.func @transform_5(%arg0: i32) -> (i32, i32) {
    %c0_i32 = arith.constant 0 : i32
    %c0_i32_0 = arith.constant 0 : i32
    %c0_i32_1 = arith.constant 0 : i32
    return %c0_i32, %c0_i32_0 : i32, i32
  }
  func.func @transform_6(%arg0: i32) -> (i32, i32) {
    %c0_i32 = arith.constant 0 : i32
    %c0_i32_0 = arith.constant 0 : i32
    %c0_i32_1 = arith.constant 0 : i32
    return %c0_i32, %c0_i32_0 : i32, i32
  }
  func.func @transform_7(%arg0: i32) -> (i32, i32) {
    %c0_i32 = arith.constant 0 : i32
    %c0_i32_0 = arith.constant 0 : i32
    return %arg0, %c0_i32 : i32, i32
  }
}

</mosaic_0001>

<llo_original>
// kernel: lenet_forward.1
$region0: #{lenet_forward.1}
  #allocation0 [shape = 'u32[]', space=smem, size = 0x4, offset = 0x4, fixed_abs, tag = 'smem constant byte address 0x4 - core index']
  #allocation1 [shape = 'u32[144,128]{1,0:T(1,128)}', space=vmem, size = 0x12000, scoped, tag = 'internal scratch']
  %s0 = inlined_call_operand.vmem [shape: f32[16,28,28], index: 0, kind: input, shape index: {}]
  %s1 = inlined_call_operand.hbm [shape: bf16[140,144], index: 1, kind: input, shape index: {}]
  %s2 = inlined_call_operand.hbm [shape: bf16[128,192], index: 2, kind: input, shape index: {}]
  %s3 = inlined_call_operand.vmem [shape: bf16[720,128], index: 3, kind: input, shape index: {}]
  %s4 = inlined_call_operand.vmem [shape: bf16[1024,128], index: 4, kind: input, shape index: {}]
  %s5 = inlined_call_operand.vmem [shape: bf16[128,128], index: 5, kind: input, shape index: {}]
  %s6 = inlined_call_operand.vmem [shape: f32[4,144], index: 6, kind: input, shape index: {}]
  %s7 = inlined_call_operand.hbm [shape: f32[16,128], index: 7, kind: output, shape index: {}]
  %s8 = sld [smem:[#allocation0]]
  $region69: #{lenet_forward.1} parent=0
    _
  %s10 = ssub.s32 1, %s8
  %s11 = scalar_select 0, %s10, %s8
  $region1: #{lenet_forward.1} parent=0
    #allocation2 [shape = 'u8[73728]{0}', space=vmem, size = 0x12000, scoped, tag = 'input window, operand 1, single buffered']
    #allocation3 [shape = 's32[2]{0}', space=sflag, size = 0x8, scoped, tag = 'scoped memory for lenet_forward.1']
    #allocation4 [shape = 's32[2]{0}', space=sflag, size = 0x8, scoped, tag = 'scoped memory for lenet_forward.1']
    #allocation5 [shape = 'u8[65536]{0}', space=vmem, size = 0x10000, scoped, tag = 'input window, operand 2, single buffered']
    #allocation6 [shape = 's32[1]{0}', space=sflag, size = 0x4, scoped, tag = 'scoped memory for lenet_forward.1']
    #allocation7 [shape = 'u8[8192]{0}', space=vmem, size = 0x2000, scoped, tag = 'output window, operand 0']
    %12 = vsyncpa [#allocation3], 0
    %13 = vsyncpa [#allocation6], 0
    %14 = vsyncpa [#allocation4], 0
    %s15 = scalar_lea.sflag [#allocation4], 1
    %16 = vsyncpa %s15, 0
    loop: start=0, step=1, limit=4
    $region2: #{lenet_forward.1} parent=1 // loop_pre_header
      _
    $region3: #{lenet_forward.1} parent=1 // loop_header
      %s18 = sphi 0, %s22
      %p19 = scmp.ge.s32.totalorder %s18, 4
      %s28 = sphi 0, %s30
      %s31 = sphi 0, %s28
      %s32 = sphi 0, %s31
      %s48 = sphi 0, %s32
      %s52 = sphi 0, %s52
      %s54 = sphi 0, %s52
      %s55 = sphi 0, %s54
      %s69 = sphi 0, %s55
      %s73 = sphi 0, %s73
      %s75 = sphi 0, %s73
      %s76 = sphi 0, %s75
      %s90 = sphi 0, %s76
      %s94 = sphi 0, %s94
      %s96 = sphi 0, %s94
      %s97 = sphi 0, %s96
      %s111 = sphi 0, %s97
      %s115 = sphi 0, %s115
      %s117 = sphi 0, %s115
      %s118 = sphi 0, %s117
      %s132 = sphi 0, %s118
      %s136 = sphi 0, %s136
      %s138 = sphi 0, %s136
      %s139 = sphi 0, %s138
      %s153 = sphi 0, %s139
      %s157 = sphi 0, %s157
      %s159 = sphi 0, %s157
      %s160 = sphi 0, %s159
      %s174 = sphi 0, %s160
      %s180 = sphi 0, %s182
      %s183 = sphi 0, %s180
      %s184 = sphi 0, %s183
      %s200 = sphi 0, %s184
    $region4: #{lenet_forward.1} parent=1 // loop_header_branch
      %21 = sbr.rel (%p19) target = $region8
    $region5: #{lenet_forward.1} parent=1 // loop_body
      %s23 = ssub.s32 %s18, 1
      %s24 = ssub.s32 %s18, 2
      %s25 = sadd.s32 %s18, 1
      %s26 = ssub.s32 %s18, %s25
      %p27 = scmp.eq.s32.totalorder %s26, 0
      %s29 = sadd.s32 %s28, 1
      %s30 = scalar_select %p27, %s28, %s29
      %p33 = pneg %p27
      %p34 = scmp.eq.s32.totalorder %s18, 1
      %p35 = por %p33, %p34
      %p36 = scmp.ne.s32.totalorder %s28, %s31
      %p37 = scmp.eq.s32.totalorder %s18, 0
      %p38 = por %p36, %p37
      %p39 = scmp.ne.s32.totalorder %s28, %s31
      %p40 = scmp.eq.s32.totalorder %s23, 1
      %p41 = por %p39, %p40
      %p42 = scmp.ne.s32.totalorder %s31, %s32
      %p43 = scmp.eq.s32.totalorder %s23, 0
      %p44 = por %p42, %p43
      %p45 = scmp.ne.s32.totalorder %s31, %s32
      %p46 = scmp.eq.s32.totalorder %s24, 1
      %p47 = por %p45, %p46
      %p49 = scmp.ne.s32.totalorder %s32, %s48
      %p50 = scmp.eq.s32.totalorder %s24, 0
      %p51 = por %p49, %p50
      %s53 = sadd.s32 %s52, 1
      %p56 = scmp.eq.s32.totalorder %s18, 1
      %p57 = scmp.ne.s32.totalorder %s52, %s54
      %p58 = scmp.eq.s32.totalorder %s18, 0
      %p59 = por %p57, %p58
      %p60 = scmp.ne.s32.totalorder %s52, %s54
      %p61 = scmp.eq.s32.totalorder %s23, 1
      %p62 = por %p60, %p61
      %p63 = scmp.ne.s32.totalorder %s54, %s55
      %p64 = scmp.eq.s32.totalorder %s23, 0
      %p65 = por %p63, %p64
      %p66 = scmp.ne.s32.totalorder %s54, %s55
      %p67 = scmp.eq.s32.totalorder %s24, 1
      %p68 = por %p66, %p67
      %p70 = scmp.ne.s32.totalorder %s55, %s69
      %p71 = scmp.eq.s32.totalorder %s24, 0
      %p72 = por %p70, %p71
      %s74 = sadd.s32 %s73, 1
      %p77 = scmp.eq.s32.totalorder %s18, 1
      %p78 = scmp.ne.s32.totalorder %s73, %s75
      %p79 = scmp.eq.s32.totalorder %s18, 0
      %p80 = por %p78, %p79
      %p81 = scmp.ne.s32.totalorder %s73, %s75
      %p82 = scmp.eq.s32.totalorder %s23, 1
      %p83 = por %p81, %p82
      %p84 = scmp.ne.s32.totalorder %s75, %s76
      %p85 = scmp.eq.s32.totalorder %s23, 0
      %p86 = por %p84, %p85
      %p87 = scmp.ne.s32.totalorder %s75, %s76
      %p88 = scmp.eq.s32.totalorder %s24, 1
      %p89 = por %p87, %p88
      %p91 = scmp.ne.s32.totalorder %s76, %s90
      %p92 = scmp.eq.s32.totalorder %s24, 0
      %p93 = por %p91, %p92
      %s95 = sadd.s32 %s94, 1
      %p98 = scmp.eq.s32.totalorder %s18, 1
      %p99 = scmp.ne.s32.totalorder %s94, %s96
      %p100 = scmp.eq.s32.totalorder %s18, 0
      %p101 = por %p99, %p100
      %p102 = scmp.ne.s32.totalorder %s94, %s96
      %p103 = scmp.eq.s32.totalorder %s23, 1
      %p104 = por %p102, %p103
      %p105 = scmp.ne.s32.totalorder %s96, %s97
      %p106 = scmp.eq.s32.totalorder %s23, 0
      %p107 = por %p105, %p106
      %p108 = scmp.ne.s32.totalorder %s96, %s97
      %p109 = scmp.eq.s32.totalorder %s24, 1
      %p110 = por %p108, %p109
      %p112 = scmp.ne.s32.totalorder %s97, %s111
      %p113 = scmp.eq.s32.totalorder %s24, 0
      %p114 = por %p112, %p113
      %s116 = sadd.s32 %s115, 1
      %p119 = scmp.eq.s32.totalorder %s18, 1
      %p120 = scmp.ne.s32.totalorder %s115, %s117
      %p121 = scmp.eq.s32.totalorder %s18, 0
      %p122 = por %p120, %p121
      %p123 = scmp.ne.s32.totalorder %s115, %s117
      %p124 = scmp.eq.s32.totalorder %s23, 1
      %p125 = por %p123, %p124
      %p126 = scmp.ne.s32.totalorder %s117, %s118
      %p127 = scmp.eq.s32.totalorder %s23, 0
      %p128 = por %p126, %p127
      %p129 = scmp.ne.s32.totalorder %s117, %s118
      %p130 = scmp.eq.s32.totalorder %s24, 1
      %p131 = por %p129, %p130
      %p133 = scmp.ne.s32.totalorder %s118, %s132
      %p134 = scmp.eq.s32.totalorder %s24, 0
      %p135 = por %p133, %p134
      %s137 = sadd.s32 %s136, 1
      %p140 = scmp.eq.s32.totalorder %s18, 1
      %p141 = scmp.ne.s32.totalorder %s136, %s138
      %p142 = scmp.eq.s32.totalorder %s18, 0
      %p143 = por %p141, %p142
      %p144 = scmp.ne.s32.totalorder %s136, %s138
      %p145 = scmp.eq.s32.totalorder %s23, 1
      %p146 = por %p144, %p145
      %p147 = scmp.ne.s32.totalorder %s138, %s139
      %p148 = scmp.eq.s32.totalorder %s23, 0
      %p149 = por %p147, %p148
      %p150 = scmp.ne.s32.totalorder %s138, %s139
      %p151 = scmp.eq.s32.totalorder %s24, 1
      %p152 = por %p150, %p151
      %p154 = scmp.ne.s32.totalorder %s139, %s153
      %p155 = scmp.eq.s32.totalorder %s24, 0
      %p156 = por %p154, %p155
      %s158 = sadd.s32 %s157, 1
      %p161 = scmp.eq.s32.totalorder %s18, 1
      %p162 = scmp.ne.s32.totalorder %s157, %s159
      %p163 = scmp.eq.s32.totalorder %s18, 0
      %p164 = por %p162, %p163
      %p165 = scmp.ne.s32.totalorder %s157, %s159
      %p166 = scmp.eq.s32.totalorder %s23, 1
      %p167 = por %p165, %p166
      %p168 = scmp.ne.s32.totalorder %s159, %s160
      %p169 = scmp.eq.s32.totalorder %s23, 0
      %p170 = por %p168, %p169
      %p171 = scmp.ne.s32.totalorder %s159, %s160
      %p172 = scmp.eq.s32.totalorder %s24, 1
      %p173 = por %p171, %p172
      %p175 = scmp.ne.s32.totalorder %s160, %s174
      %p176 = scmp.eq.s32.totalorder %s24, 0
      %p177 = por %p175, %p176
      %s178 = ssub.s32 %s18, %s25
      %p179 = scmp.eq.s32.totalorder %s178, 0
      %s181 = sadd.s32 %s180, 1
      %s182 = scalar_select %p179, %s180, %s181
      %p185 = pneg %p179
      %p186 = scmp.eq.s32.totalorder %s18, 1
      %p187 = por %p185, %p186
      %p188 = scmp.ne.s32.totalorder %s180, %s183
      %p189 = scmp.eq.s32.totalorder %s18, 0
      %p190 = por %p188, %p189
      %p191 = scmp.ne.s32.totalorder %s180, %s183
      %p192 = scmp.eq.s32.totalorder %s23, 1
      %p193 = por %p191, %p192
      %p194 = scmp.ne.s32.totalorder %s183, %s184
      %p195 = scmp.eq.s32.totalorder %s23, 0
      %p196 = por %p194, %p195
      %p197 = scmp.ne.s32.totalorder %s183, %s184
      %p198 = scmp.eq.s32.totalorder %s24, 1
      %p199 = por %p197, %p198
      %p201 = scmp.ne.s32.totalorder %s184, %s200
      %p202 = scmp.eq.s32.totalorder %s24, 0
      %p203 = por %p201, %p202
      %p204 = scmp.le.s32.totalorder 1, %s18
      %p205 = scmp.lt.s32.totalorder %s18, 3
      %p206 = pnand %p204, %p205
      %p207 = pneg %p206
      // Predicated region
      $region9: #{lenet_forward.1} parent=5 // pred_check
        _
      $region10: #{lenet_forward.1} parent=5 // pred_check_branch
        %209 = sbr.rel (%p206) target = $region12
      $region11: #{lenet_forward.1} parent=5 // pred_region
        %s210 = ssub.s32 %s18, 1
        // Predicated region
        $region13: #{lenet_forward.1} parent=11 // pred_check
          %p211 = pneg %p65
        $region14: #{lenet_forward.1} parent=11 // pred_check_branch
          %213 = sbr.rel (%p211) target = $region16
        $region15: #{lenet_forward.1} parent=11 // pred_region
          %s215 = ssub.s32 2304, 2304
          %216 = vsyncadd [#allocation3], %s215
          %s217 = sshll.u32 [#allocation2], 4
          %s218 = int_to_ptr.vmem [resolvable:$true] %s217
          %223 = dma.hbm_to_vmem [thread:$0]  %s1, 2304, %s218, [#allocation3], 128, 128, 8
        $region16: #{lenet_forward.1} parent=11 // pred_fallthru
          _
        // Predicated region
        $region17: #{lenet_forward.1} parent=11 // pred_check
          %p224 = pneg %p86
        $region18: #{lenet_forward.1} parent=11 // pred_check_branch
          %226 = sbr.rel (%p224) target = $region20
        $region19: #{lenet_forward.1} parent=11 // pred_region
          %s228 = ssub.s32 2048, 2048
          %229 = vsyncadd [#allocation6], %s228
          %s230 = sshll.u32 [#allocation5], 4
          %s231 = int_to_ptr.vmem [resolvable:$true] %s230
          %236 = dma.hbm_to_vmem [thread:$0]  %s2, 2048, %s231, [#allocation6], 128, 128, 8
        $region20: #{lenet_forward.1} parent=11 // pred_fallthru
          _
        // Predicated region
        $region21: #{lenet_forward.1} parent=11 // pred_check
          %p237 = pneg %p107
        $region22: #{lenet_forward.1} parent=11 // pred_check_branch
          %239 = sbr.rel (%p237) target = $region24
        $region23: #{lenet_forward.1} parent=11 // pred_region
          _
        $region24: #{lenet_forward.1} parent=11 // pred_fallthru
          _
        // Predicated region
        $region25: #{lenet_forward.1} parent=11 // pred_check
          %p240 = pneg %p128
        $region26: #{lenet_forward.1} parent=11 // pred_check_branch
          %242 = sbr.rel (%p240) target = $region28
        $region27: #{lenet_forward.1} parent=11 // pred_region
          _
        $region28: #{lenet_forward.1} parent=11 // pred_fallthru
          _
        // Predicated region
        $region29: #{lenet_forward.1} parent=11 // pred_check
          %p243 = pneg %p149
        $region30: #{lenet_forward.1} parent=11 // pred_check_branch
          %245 = sbr.rel (%p243) target = $region32
        $region31: #{lenet_forward.1} parent=11 // pred_region
          _
        $region32: #{lenet_forward.1} parent=11 // pred_fallthru
          _
        // Predicated region
        $region33: #{lenet_forward.1} parent=11 // pred_check
          %p246 = pneg %p170
        $region34: #{lenet_forward.1} parent=11 // pred_check_branch
          %248 = sbr.rel (%p246) target = $region36
        $region35: #{lenet_forward.1} parent=11 // pred_region
          _
        $region36: #{lenet_forward.1} parent=11 // pred_fallthru
          _
      $region12: #{lenet_forward.1} parent=5 // pred_fallthru
        _
      %p249 = scmp.lt.s32.totalorder %s18, 2
      // Predicated region
      $region37: #{lenet_forward.1} parent=5 // pred_check
        %p250 = pneg %p249
      $region38: #{lenet_forward.1} parent=5 // pred_check_branch
        %252 = sbr.rel (%p250) target = $region40
      $region39: #{lenet_forward.1} parent=5 // pred_region
        // Predicated region
        $region41: #{lenet_forward.1} parent=39 // pred_check
          %p253 = pneg %p38
        $region42: #{lenet_forward.1} parent=39 // pred_check_branch
          %255 = sbr.rel (%p253) target = $region44
        $region43: #{lenet_forward.1} parent=39 // pred_region
          %s256 = smul.u32 8, %s18
          %p257 = scmp.lt.s32.totalorder %s256, 15
          %s258 = scalar_select %p257, %s256, 15
          %s259 = smul.addr %s258, 4
          %s260 = smul.addr %s259, 8
          %s261 = scalar_lea.vmem %s0, %s260
          %s262 = smul.u32 8, %s18
        $region44: #{lenet_forward.1} parent=39 // pred_fallthru
          _
      $region40: #{lenet_forward.1} parent=5 // pred_fallthru
        _
      %p263 = scmp.le.s32.totalorder 1, %s18
      %p264 = scmp.lt.s32.totalorder %s18, 3
      %p265 = pnand %p263, %p264
      %p266 = pneg %p265
      // Predicated region
      $region45: #{lenet_forward.1} parent=5 // pred_check
        _
      $region46: #{lenet_forward.1} parent=5 // pred_check_branch
        %268 = sbr.rel (%p265) target = $region48
      $region47: #{lenet_forward.1} parent=5 // pred_region
        %s269 = ssub.s32 %s18, 1
        // Predicated region
        $region49: #{lenet_forward.1} parent=47 // pred_check
          %p270 = pneg %p65
        $region50: #{lenet_forward.1} parent=47 // pred_check_branch
          %272 = sbr.rel (%p270) target = $region52
        $region51: #{lenet_forward.1} parent=47 // pred_region
          %273 = dma.done [#allocation3], 2304
        $region52: #{lenet_forward.1} parent=47 // pred_fallthru
          _
        // Predicated region
        $region53: #{lenet_forward.1} parent=47 // pred_check
          %p274 = pneg %p86
        $region54: #{lenet_forward.1} parent=47 // pred_check_branch
          %276 = sbr.rel (%p274) target = $region56
        $region55: #{lenet_forward.1} parent=47 // pred_region
          %277 = dma.done [#allocation6], 2048
        $region56: #{lenet_forward.1} parent=47 // pred_fallthru
          _
        %s278 = smul.u32 8, %s23
        %p279 = scmp.lt.s32.totalorder %s278, 15
        %s280 = scalar_select %p279, %s278, 15
        %s281 = smul.addr %s280, 4
        %s282 = smul.addr %s281, 8
        %s283 = scalar_lea.vmem %s0, %s282
        %p284 = pneg %p44
        %p285 = pneg %p41
        %p286 = pneg %p65
        %p287 = pneg %p62
        %p288 = pneg %p86
        %p289 = pneg %p83
        %p290 = pneg %p107
        %p291 = pneg %p104
        %p292 = pneg %p128
        %p293 = pneg %p125
        %p294 = pneg %p149
        %p295 = pneg %p146
        %p296 = pneg %p170
        %p297 = pneg %p167
        %p298 = pneg %p196
        %p299 = pneg %p193
        %s300 = sand.u32 %s183, 1
        %s301 = scalar_lea.sflag [#allocation4], %s300
        %s302 = sand.u32 %s183, 1
        %s303 = smul.addr %s302, 8
        %s304 = scalar_lea.vmem [#allocation7], %s303
        %s305 = smul.u32 8, %s23
        %p306 = scmp.lt.s32.totalorder %s305, 15
        %s307 = scalar_select %p306, %s305, 15
        %s308 = smul.addr %s307, 4
        %s309 = smul.addr %s308, 8
        %s310 = scalar_lea.vmem %s0, %s309
        %s311 = smul.u32 8, %s23
        %v313 = vld [vmem:[%s310] sm:$0xff]
        %v314 = vld [vmem:[%s310 + $0x8] sm:$0xff]
        %v315 = vld [vmem:[%s310 + $0x10] sm:$0xff]
        %v316 = vld [vmem:[%s310 + $0x18] sm:$0xf]
        %v317 = vld [vmem:[%s310 + $0x20] sm:$0xff]
        %v318 = vld [vmem:[%s310 + $0x28] sm:$0xff]
        %v319 = vld [vmem:[%s310 + $0x30] sm:$0xff]
        %v320 = vld [vmem:[%s310 + $0x38] sm:$0xf]
        %v321 = vld [vmem:[%s310 + $0x40] sm:$0xff]
        %v322 = vld [vmem:[%s310 + $0x48] sm:$0xff]
        %v323 = vld [vmem:[%s310 + $0x50] sm:$0xff]
        %v324 = vld [vmem:[%s310 + $0x58] sm:$0xf]
        %v325 = vld [vmem:[%s310 + $0x60] sm:$0xff]
        %v326 = vld [vmem:[%s310 + $0x68] sm:$0xff]
        %v327 = vld [vmem:[%s310 + $0x70] sm:$0xff]
        %v328 = vld [vmem:[%s310 + $0x78] sm:$0xf]
        %v329 = vld [vmem:[%s310 + $0x80] sm:$0xff]
        %v330 = vld [vmem:[%s310 + $0x88] sm:$0xff]
        %v331 = vld [vmem:[%s310 + $0x90] sm:$0xff]
        %v332 = vld [vmem:[%s310 + $0x98] sm:$0xf]
        %v333 = vld [vmem:[%s310 + $0xa0] sm:$0xff]
        %v334 = vld [vmem:[%s310 + $0xa8] sm:$0xff]
        %v335 = vld [vmem:[%s310 + $0xb0] sm:$0xff]
        %v336 = vld [vmem:[%s310 + $0xb8] sm:$0xf]
        %v337 = vld [vmem:[%s310 + $0xc0] sm:$0xff]
        %v338 = vld [vmem:[%s310 + $0xc8] sm:$0xff]
        %v339 = vld [vmem:[%s310 + $0xd0] sm:$0xff]
        %v340 = vld [vmem:[%s310 + $0xd8] sm:$0xf]
        %v341 = vld [vmem:[%s310 + $0xe0] sm:$0xff]
        %v342 = vld [vmem:[%s310 + $0xe8] sm:$0xff]
        %v343 = vld [vmem:[%s310 + $0xf0] sm:$0xff]
        %v344 = vld [vmem:[%s310 + $0xf8] sm:$0xf]
        %vm377 = vcmask 1046528
        %v378 = vrot.slane %v313, 1
        %v379 = vrot.slane %v314, 1
        %v380 = vsel %vm377, %v378, %v379
        %v381 = vrot.slane %v315, 1
        %v382 = vsel %vm377, %v379, %v381
        %v383 = vrot.slane %v316, 1
        %v384 = vsel %vm377, %v381, %v383
        %v385 = vrot.slane %v317, 1
        %v386 = vrot.slane %v318, 1
        %v387 = vsel %vm377, %v385, %v386
        %v388 = vrot.slane %v319, 1
        %v389 = vsel %vm377, %v386, %v388
        %v390 = vrot.slane %v320, 1
        %v391 = vsel %vm377, %v388, %v390
        %v392 = vrot.slane %v321, 1
        %v393 = vrot.slane %v322, 1
        %v394 = vsel %vm377, %v392, %v393
        %v395 = vrot.slane %v323, 1
        %v396 = vsel %vm377, %v393, %v395
        %v397 = vrot.slane %v324, 1
        %v398 = vsel %vm377, %v395, %v397
        %v399 = vrot.slane %v325, 1
        %v400 = vrot.slane %v326, 1
        %v401 = vsel %vm377, %v399, %v400
        %v402 = vrot.slane %v327, 1
        %v403 = vsel %vm377, %v400, %v402
        %v404 = vrot.slane %v328, 1
        %v405 = vsel %vm377, %v402, %v404
        %v406 = vrot.slane %v329, 1
        %v407 = vrot.slane %v330, 1
        %v408 = vsel %vm377, %v406, %v407
        %v409 = vrot.slane %v331, 1
        %v410 = vsel %vm377, %v407, %v409
        %v411 = vrot.slane %v332, 1
        %v412 = vsel %vm377, %v409, %v411
        %v413 = vrot.slane %v333, 1
        %v414 = vrot.slane %v334, 1
        %v415 = vsel %vm377, %v413, %v414
        %v416 = vrot.slane %v335, 1
        %v417 = vsel %vm377, %v414, %v416
        %v418 = vrot.slane %v336, 1
        %v419 = vsel %vm377, %v416, %v418
        %v420 = vrot.slane %v337, 1
        %v421 = vrot.slane %v338, 1
        %v422 = vsel %vm377, %v420, %v421
        %v423 = vrot.slane %v339, 1
        %v424 = vsel %vm377, %v421, %v423
        %v425 = vrot.slane %v340, 1
        %v426 = vsel %vm377, %v423, %v425
        %v427 = vrot.slane %v341, 1
        %v428 = vrot.slane %v342, 1
        %v429 = vsel %vm377, %v427, %v428
        %v430 = vrot.slane %v343, 1
        %v431 = vsel %vm377, %v428, %v430
        %v432 = vrot.slane %v344, 1
        %v433 = vsel %vm377, %v430, %v432
        %434 = vrot.lane.b32.xlu0 %v380, 28
        %v435 = vpop.permute.xlu0 %434
        %436 = vrot.lane.b32.xlu0 %v382, 28
        %v437 = vpop.permute.xlu0 %436
        %438 = vrot.lane.b32.xlu0 %v384, 28
        %v439 = vpop.permute.xlu0 %438
        %440 = vrot.lane.b32.xlu0 %v387, 28
        %v441 = vpop.permute.xlu0 %440
        %442 = vrot.lane.b32.xlu0 %v389, 28
        %v443 = vpop.permute.xlu0 %442
        %444 = vrot.lane.b32.xlu0 %v391, 28
        %v445 = vpop.permute.xlu0 %444
        %446 = vrot.lane.b32.xlu0 %v394, 28
        %v447 = vpop.permute.xlu0 %446
        %448 = vrot.lane.b32.xlu0 %v396, 28
        %v449 = vpop.permute.xlu0 %448
        %450 = vrot.lane.b32.xlu0 %v398, 28
        %v451 = vpop.permute.xlu0 %450
        %452 = vrot.lane.b32.xlu0 %v401, 28
        %v453 = vpop.permute.xlu0 %452
        %454 = vrot.lane.b32.xlu0 %v403, 28
        %v455 = vpop.permute.xlu0 %454
        %456 = vrot.lane.b32.xlu0 %v405, 28
        %v457 = vpop.permute.xlu0 %456
        %458 = vrot.lane.b32.xlu0 %v408, 28
        %v459 = vpop.permute.xlu0 %458
        %460 = vrot.lane.b32.xlu0 %v410, 28
        %v461 = vpop.permute.xlu0 %460
        %462 = vrot.lane.b32.xlu0 %v412, 28
        %v463 = vpop.permute.xlu0 %462
        %464 = vrot.lane.b32.xlu0 %v415, 28
        %v465 = vpop.permute.xlu0 %464
        %466 = vrot.lane.b32.xlu0 %v417, 28
        %v467 = vpop.permute.xlu0 %466
        %468 = vrot.lane.b32.xlu0 %v419, 28
        %v469 = vpop.permute.xlu0 %468
        %470 = vrot.lane.b32.xlu0 %v422, 28
        %v471 = vpop.permute.xlu0 %470
        %472 = vrot.lane.b32.xlu0 %v424, 28
        %v473 = vpop.permute.xlu0 %472
        %474 = vrot.lane.b32.xlu0 %v426, 28
        %v475 = vpop.permute.xlu0 %474
        %476 = vrot.lane.b32.xlu0 %v429, 28
        %v477 = vpop.permute.xlu0 %476
        %478 = vrot.lane.b32.xlu0 %v431, 28
        %v479 = vpop.permute.xlu0 %478
        %480 = vrot.lane.b32.xlu0 %v433, 28
        %v481 = vpop.permute.xlu0 %480
        %vm506 = vcmask 1045504
        %v507 = vrot.slane %v313, 2
        %v508 = vrot.slane %v314, 2
        %v509 = vsel %vm506, %v507, %v508
        %v510 = vrot.slane %v315, 2
        %v511 = vsel %vm506, %v508, %v510
        %v512 = vrot.slane %v316, 2
        %v513 = vsel %vm506, %v510, %v512
        %v514 = vrot.slane %v317, 2
        %v515 = vrot.slane %v318, 2
        %v516 = vsel %vm506, %v514, %v515
        %v517 = vrot.slane %v319, 2
        %v518 = vsel %vm506, %v515, %v517
        %v519 = vrot.slane %v320, 2
        %v520 = vsel %vm506, %v517, %v519
        %v521 = vrot.slane %v321, 2
        %v522 = vrot.slane %v322, 2
        %v523 = vsel %vm506, %v521, %v522
        %v524 = vrot.slane %v323, 2
        %v525 = vsel %vm506, %v522, %v524
        %v526 = vrot.slane %v324, 2
        %v527 = vsel %vm506, %v524, %v526
        %v528 = vrot.slane %v325, 2
        %v529 = vrot.slane %v326, 2
        %v530 = vsel %vm506, %v528, %v529
        %v531 = vrot.slane %v327, 2
        %v532 = vsel %vm506, %v529, %v531
        %v533 = vrot.slane %v328, 2
        %v534 = vsel %vm506, %v531, %v533
        %v535 = vrot.slane %v329, 2
        %v536 = vrot.slane %v330, 2
        %v537 = vsel %vm506, %v535, %v536
        %v538 = vrot.slane %v331, 2
        %v539 = vsel %vm506, %v536, %v538
        %v540 = vrot.slane %v332, 2
        %v541 = vsel %vm506, %v538, %v540
        %v542 = vrot.slane %v333, 2
        %v543 = vrot.slane %v334, 2
        %v544 = vsel %vm506, %v542, %v543
        %v545 = vrot.slane %v335, 2
        %v546 = vsel %vm506, %v543, %v545
        %v547 = vrot.slane %v336, 2
        %v548 = vsel %vm506, %v545, %v547
        %v549 = vrot.slane %v337, 2
        %v550 = vrot.slane %v338, 2
        %v551 = vsel %vm506, %v549, %v550
        %v552 = vrot.slane %v339, 2
        %v553 = vsel %vm506, %v550, %v552
        %v554 = vrot.slane %v340, 2
        %v555 = vsel %vm506, %v552, %v554
        %v556 = vrot.slane %v341, 2
        %v557 = vrot.slane %v342, 2
        %v558 = vsel %vm506, %v556, %v557
        %v559 = vrot.slane %v343, 2
        %v560 = vsel %vm506, %v557, %v559
        %v561 = vrot.slane %v344, 2
        %v562 = vsel %vm506, %v559, %v561
        %563 = vrot.lane.b32.xlu0 %v509, 56
        %v564 = vpop.permute.xlu0 %563
        %565 = vrot.lane.b32.xlu0 %v511, 56
        %v566 = vpop.permute.xlu0 %565
        %567 = vrot.lane.b32.xlu0 %v513, 56
        %v568 = vpop.permute.xlu0 %567
        %569 = vrot.lane.b32.xlu0 %v516, 56
        %v570 = vpop.permute.xlu0 %569
        %571 = vrot.lane.b32.xlu0 %v518, 56
        %v572 = vpop.permute.xlu0 %571
        %573 = vrot.lane.b32.xlu0 %v520, 56
        %v574 = vpop.permute.xlu0 %573
        %575 = vrot.lane.b32.xlu0 %v523, 56
        %v576 = vpop.permute.xlu0 %575
        %577 = vrot.lane.b32.xlu0 %v525, 56
        %v578 = vpop.permute.xlu0 %577
        %579 = vrot.lane.b32.xlu0 %v527, 56
        %v580 = vpop.permute.xlu0 %579
        %581 = vrot.lane.b32.xlu0 %v530, 56
        %v582 = vpop.permute.xlu0 %581
        %583 = vrot.lane.b32.xlu0 %v532, 56
        %v584 = vpop.permute.xlu0 %583
        %585 = vrot.lane.b32.xlu0 %v534, 56
        %v586 = vpop.permute.xlu0 %585
        %587 = vrot.lane.b32.xlu0 %v537, 56
        %v588 = vpop.permute.xlu0 %587
        %589 = vrot.lane.b32.xlu0 %v539, 56
        %v590 = vpop.permute.xlu0 %589
        %591 = vrot.lane.b32.xlu0 %v541, 56
        %v592 = vpop.permute.xlu0 %591
        %593 = vrot.lane.b32.xlu0 %v544, 56
        %v594 = vpop.permute.xlu0 %593
        %595 = vrot.lane.b32.xlu0 %v546, 56
        %v596 = vpop.permute.xlu0 %595
        %597 = vrot.lane.b32.xlu0 %v548, 56
        %v598 = vpop.permute.xlu0 %597
        %599 = vrot.lane.b32.xlu0 %v551, 56
        %v600 = vpop.permute.xlu0 %599
        %601 = vrot.lane.b32.xlu0 %v553, 56
        %v602 = vpop.permute.xlu0 %601
        %603 = vrot.lane.b32.xlu0 %v555, 56
        %v604 = vpop.permute.xlu0 %603
        %605 = vrot.lane.b32.xlu0 %v558, 56
        %v606 = vpop.permute.xlu0 %605
        %607 = vrot.lane.b32.xlu0 %v560, 56
        %v608 = vpop.permute.xlu0 %607
        %609 = vrot.lane.b32.xlu0 %v562, 56
        %v610 = vpop.permute.xlu0 %609
        %vm635 = vcmask 1044480
        %v636 = vrot.slane %v313, 3
        %v637 = vrot.slane %v314, 3
        %v638 = vsel %vm635, %v636, %v637
        %v639 = vrot.slane %v315, 3
        %v640 = vsel %vm635, %v637, %v639
        %v641 = vrot.slane %v316, 3
        %v642 = vsel %vm635, %v639, %v641
        %v643 = vrot.slane %v317, 3
        %v644 = vrot.slane %v318, 3
        %v645 = vsel %vm635, %v643, %v644
        %v646 = vrot.slane %v319, 3
        %v647 = vsel %vm635, %v644, %v646
        %v648 = vrot.slane %v320, 3
        %v649 = vsel %vm635, %v646, %v648
        %v650 = vrot.slane %v321, 3
        %v651 = vrot.slane %v322, 3
        %v652 = vsel %vm635, %v650, %v651
        %v653 = vrot.slane %v323, 3
        %v654 = vsel %vm635, %v651, %v653
        %v655 = vrot.slane %v324, 3
        %v656 = vsel %vm635, %v653, %v655
        %v657 = vrot.slane %v325, 3
        %v658 = vrot.slane %v326, 3
        %v659 = vsel %vm635, %v657, %v658
        %v660 = vrot.slane %v327, 3
        %v661 = vsel %vm635, %v658, %v660
        %v662 = vrot.slane %v328, 3
        %v663 = vsel %vm635, %v660, %v662
        %v664 = vrot.slane %v329, 3
        %v665 = vrot.slane %v330, 3
        %v666 = vsel %vm635, %v664, %v665
        %v667 = vrot.slane %v331, 3
        %v668 = vsel %vm635, %v665, %v667
        %v669 = vrot.slane %v332, 3
        %v670 = vsel %vm635, %v667, %v669
        %v671 = vrot.slane %v333, 3
        %v672 = vrot.slane %v334, 3
        %v673 = vsel %vm635, %v671, %v672
        %v674 = vrot.slane %v335, 3
        %v675 = vsel %vm635, %v672, %v674
        %v676 = vrot.slane %v336, 3
        %v677 = vsel %vm635, %v674, %v676
        %v678 = vrot.slane %v337, 3
        %v679 = vrot.slane %v338, 3
        %v680 = vsel %vm635, %v678, %v679
        %v681 = vrot.slane %v339, 3
        %v682 = vsel %vm635, %v679, %v681
        %v683 = vrot.slane %v340, 3
        %v684 = vsel %vm635, %v681, %v683
        %v685 = vrot.slane %v341, 3
        %v686 = vrot.slane %v342, 3
        %v687 = vsel %vm635, %v685, %v686
        %v688 = vrot.slane %v343, 3
        %v689 = vsel %vm635, %v686, %v688
        %v690 = vrot.slane %v344, 3
        %v691 = vsel %vm635, %v688, %v690
        %692 = vrot.lane.b32.xlu0 %v638, 84
        %v693 = vpop.permute.xlu0 %692
        %694 = vrot.lane.b32.xlu0 %v640, 84
        %v695 = vpop.permute.xlu0 %694
        %696 = vrot.lane.b32.xlu0 %v642, 84
        %v697 = vpop.permute.xlu0 %696
        %698 = vrot.lane.b32.xlu0 %v645, 84
        %v699 = vpop.permute.xlu0 %698
        %700 = vrot.lane.b32.xlu0 %v647, 84
        %v701 = vpop.permute.xlu0 %700
        %702 = vrot.lane.b32.xlu0 %v649, 84
        %v703 = vpop.permute.xlu0 %702
        %704 = vrot.lane.b32.xlu0 %v652, 84
        %v705 = vpop.permute.xlu0 %704
        %706 = vrot.lane.b32.xlu0 %v654, 84
        %v707 = vpop.permute.xlu0 %706
        %708 = vrot.lane.b32.xlu0 %v656, 84
        %v709 = vpop.permute.xlu0 %708
        %710 = vrot.lane.b32.xlu0 %v659, 84
        %v711 = vpop.permute.xlu0 %710
        %712 = vrot.lane.b32.xlu0 %v661, 84
        %v713 = vpop.permute.xlu0 %712
        %714 = vrot.lane.b32.xlu0 %v663, 84
        %v715 = vpop.permute.xlu0 %714
        %716 = vrot.lane.b32.xlu0 %v666, 84
        %v717 = vpop.permute.xlu0 %716
        %718 = vrot.lane.b32.xlu0 %v668, 84
        %v719 = vpop.permute.xlu0 %718
        %720 = vrot.lane.b32.xlu0 %v670, 84
        %v721 = vpop.permute.xlu0 %720
        %722 = vrot.lane.b32.xlu0 %v673, 84
        %v723 = vpop.permute.xlu0 %722
        %724 = vrot.lane.b32.xlu0 %v675, 84
        %v725 = vpop.permute.xlu0 %724
        %726 = vrot.lane.b32.xlu0 %v677, 84
        %v727 = vpop.permute.xlu0 %726
        %728 = vrot.lane.b32.xlu0 %v680, 84
        %v729 = vpop.permute.xlu0 %728
        %730 = vrot.lane.b32.xlu0 %v682, 84
        %v731 = vpop.permute.xlu0 %730
        %732 = vrot.lane.b32.xlu0 %v684, 84
        %v733 = vpop.permute.xlu0 %732
        %734 = vrot.lane.b32.xlu0 %v687, 84
        %v735 = vpop.permute.xlu0 %734
        %736 = vrot.lane.b32.xlu0 %v689, 84
        %v737 = vpop.permute.xlu0 %736
        %738 = vrot.lane.b32.xlu0 %v691, 84
        %v739 = vpop.permute.xlu0 %738
        %vm764 = vcmask 1043456
        %v765 = vrot.slane %v313, 4
        %v766 = vrot.slane %v314, 4
        %v767 = vsel %vm764, %v765, %v766
        %v768 = vrot.slane %v315, 4
        %v769 = vsel %vm764, %v766, %v768
        %v770 = vrot.slane %v316, 4
        %v771 = vsel %vm764, %v768, %v770
        %v772 = vrot.slane %v317, 4
        %v773 = vrot.slane %v318, 4
        %v774 = vsel %vm764, %v772, %v773
        %v775 = vrot.slane %v319, 4
        %v776 = vsel %vm764, %v773, %v775
        %v777 = vrot.slane %v320, 4
        %v778 = vsel %vm764, %v775, %v777
        %v779 = vrot.slane %v321, 4
        %v780 = vrot.slane %v322, 4
        %v781 = vsel %vm764, %v779, %v780
        %v782 = vrot.slane %v323, 4
        %v783 = vsel %vm764, %v780, %v782
        %v784 = vrot.slane %v324, 4
        %v785 = vsel %vm764, %v782, %v784
        %v786 = vrot.slane %v325, 4
        %v787 = vrot.slane %v326, 4
        %v788 = vsel %vm764, %v786, %v787
        %v789 = vrot.slane %v327, 4
        %v790 = vsel %vm764, %v787, %v789
        %v791 = vrot.slane %v328, 4
        %v792 = vsel %vm764, %v789, %v791
        %v793 = vrot.slane %v329, 4
        %v794 = vrot.slane %v330, 4
        %v795 = vsel %vm764, %v793, %v794
        %v796 = vrot.slane %v331, 4
        %v797 = vsel %vm764, %v794, %v796
        %v798 = vrot.slane %v332, 4
        %v799 = vsel %vm764, %v796, %v798
        %v800 = vrot.slane %v333, 4
        %v801 = vrot.slane %v334, 4
        %v802 = vsel %vm764, %v800, %v801
        %v803 = vrot.slane %v335, 4
        %v804 = vsel %vm764, %v801, %v803
        %v805 = vrot.slane %v336, 4
        %v806 = vsel %vm764, %v803, %v805
        %v807 = vrot.slane %v337, 4
        %v808 = vrot.slane %v338, 4
        %v809 = vsel %vm764, %v807, %v808
        %v810 = vrot.slane %v339, 4
        %v811 = vsel %vm764, %v808, %v810
        %v812 = vrot.slane %v340, 4
        %v813 = vsel %vm764, %v810, %v812
        %v814 = vrot.slane %v341, 4
        %v815 = vrot.slane %v342, 4
        %v816 = vsel %vm764, %v814, %v815
        %v817 = vrot.slane %v343, 4
        %v818 = vsel %vm764, %v815, %v817
        %v819 = vrot.slane %v344, 4
        %v820 = vsel %vm764, %v817, %v819
        %821 = vrot.lane.b32.xlu0 %v767, 112
        %v822 = vpop.permute.xlu0 %821
        %823 = vrot.lane.b32.xlu0 %v769, 112
        %v824 = vpop.permute.xlu0 %823
        %825 = vrot.lane.b32.xlu0 %v771, 112
        %v826 = vpop.permute.xlu0 %825
        %827 = vrot.lane.b32.xlu0 %v774, 112
        %v828 = vpop.permute.xlu0 %827
        %829 = vrot.lane.b32.xlu0 %v776, 112
        %v830 = vpop.permute.xlu0 %829
        %831 = vrot.lane.b32.xlu0 %v778, 112
        %v832 = vpop.permute.xlu0 %831
        %833 = vrot.lane.b32.xlu0 %v781, 112
        %v834 = vpop.permute.xlu0 %833
        %835 = vrot.lane.b32.xlu0 %v783, 112
        %v836 = vpop.permute.xlu0 %835
        %837 = vrot.lane.b32.xlu0 %v785, 112
        %v838 = vpop.permute.xlu0 %837
        %839 = vrot.lane.b32.xlu0 %v788, 112
        %v840 = vpop.permute.xlu0 %839
        %841 = vrot.lane.b32.xlu0 %v790, 112
        %v842 = vpop.permute.xlu0 %841
        %843 = vrot.lane.b32.xlu0 %v792, 112
        %v844 = vpop.permute.xlu0 %843
        %845 = vrot.lane.b32.xlu0 %v795, 112
        %v846 = vpop.permute.xlu0 %845
        %847 = vrot.lane.b32.xlu0 %v797, 112
        %v848 = vpop.permute.xlu0 %847
        %849 = vrot.lane.b32.xlu0 %v799, 112
        %v850 = vpop.permute.xlu0 %849
        %851 = vrot.lane.b32.xlu0 %v802, 112
        %v852 = vpop.permute.xlu0 %851
        %853 = vrot.lane.b32.xlu0 %v804, 112
        %v854 = vpop.permute.xlu0 %853
        %855 = vrot.lane.b32.xlu0 %v806, 112
        %v856 = vpop.permute.xlu0 %855
        %857 = vrot.lane.b32.xlu0 %v809, 112
        %v858 = vpop.permute.xlu0 %857
        %859 = vrot.lane.b32.xlu0 %v811, 112
        %v860 = vpop.permute.xlu0 %859
        %861 = vrot.lane.b32.xlu0 %v813, 112
        %v862 = vpop.permute.xlu0 %861
        %863 = vrot.lane.b32.xlu0 %v816, 112
        %v864 = vpop.permute.xlu0 %863
        %865 = vrot.lane.b32.xlu0 %v818, 112
        %v866 = vpop.permute.xlu0 %865
        %867 = vrot.lane.b32.xlu0 %v820, 112
        %v868 = vpop.permute.xlu0 %867
        %vm893 = vcmask 228352
        %v894 = vsel %vm893, %v313, %v435
        %v895 = vsel %vm893, %v314, %v437
        %v896 = vsel %vm893, %v315, %v439
        %v897 = vsel %vm893, %v317, %v441
        %v898 = vsel %vm893, %v318, %v443
        %v899 = vsel %vm893, %v319, %v445
        %v900 = vsel %vm893, %v321, %v447
        %v901 = vsel %vm893, %v322, %v449
        %v902 = vsel %vm893, %v323, %v451
        %v903 = vsel %vm893, %v325, %v453
        %v904 = vsel %vm893, %v326, %v455
        %v905 = vsel %vm893, %v327, %v457
        %v906 = vsel %vm893, %v329, %v459
        %v907 = vsel %vm893, %v330, %v461
        %v908 = vsel %vm893, %v331, %v463
        %v909 = vsel %vm893, %v333, %v465
        %v910 = vsel %vm893, %v334, %v467
        %v911 = vsel %vm893, %v335, %v469
        %v912 = vsel %vm893, %v337, %v471
        %v913 = vsel %vm893, %v338, %v473
        %v914 = vsel %vm893, %v339, %v475
        %v915 = vsel %vm893, %v341, %v477
        %v916 = vsel %vm893, %v342, %v479
        %v917 = vsel %vm893, %v343, %v481
        %vm918 = vcmask 457728
        %v919 = vsel %vm918, %v894, %v564
        %v920 = vsel %vm918, %v895, %v566
        %v921 = vsel %vm918, %v896, %v568
        %v922 = vsel %vm918, %v897, %v570
        %v923 = vsel %vm918, %v898, %v572
        %v924 = vsel %vm918, %v899, %v574
        %v925 = vsel %vm918, %v900, %v576
        %v926 = vsel %vm918, %v901, %v578
        %v927 = vsel %vm918, %v902, %v580
        %v928 = vsel %vm918, %v903, %v582
        %v929 = vsel %vm918, %v904, %v584
        %v930 = vsel %vm918, %v905, %v586
        %v931 = vsel %vm918, %v906, %v588
        %v932 = vsel %vm918, %v907, %v590
        %v933 = vsel %vm918, %v908, %v592
        %v934 = vsel %vm918, %v909, %v594
        %v935 = vsel %vm918, %v910, %v596
        %v936 = vsel %vm918, %v911, %v598
        %v937 = vsel %vm918, %v912, %v600
        %v938 = vsel %vm918, %v913, %v602
        %v939 = vsel %vm918, %v914, %v604
        %v940 = vsel %vm918, %v915, %v606
        %v941 = vsel %vm918, %v916, %v608
        %v942 = vsel %vm918, %v917, %v610
        %vm943 = vcmask 687104
        %v944 = vsel %vm943, %v919, %v693
        %v945 = vsel %vm943, %v920, %v695
        %v946 = vsel %vm943, %v921, %v697
        %v947 = vsel %vm943, %v922, %v699
        %v948 = vsel %vm943, %v923, %v701
        %v949 = vsel %vm943, %v924, %v703
        %v950 = vsel %vm943, %v925, %v705
        %v951 = vsel %vm943, %v926, %v707
        %v952 = vsel %vm943, %v927, %v709
        %v953 = vsel %vm943, %v928, %v711
        %v954 = vsel %vm943, %v929, %v713
        %v955 = vsel %vm943, %v930, %v715
        %v956 = vsel %vm943, %v931, %v717
        %v957 = vsel %vm943, %v932, %v719
        %v958 = vsel %vm943, %v933, %v721
        %v959 = vsel %vm943, %v934, %v723
        %v960 = vsel %vm943, %v935, %v725
        %v961 = vsel %vm943, %v936, %v727
        %v962 = vsel %vm943, %v937, %v729
        %v963 = vsel %vm943, %v938, %v731
        %v964 = vsel %vm943, %v939, %v733
        %v965 = vsel %vm943, %v940, %v735
        %v966 = vsel %vm943, %v941, %v737
        %v967 = vsel %vm943, %v942, %v739
        %vm968 = vcmask 916480
        %v969 = vsel %vm968, %v944, %v822
        %v970 = vsel %vm968, %v945, %v824
        %v971 = vsel %vm968, %v946, %v826
        %v972 = vsel %vm968, %v947, %v828
        %v973 = vsel %vm968, %v948, %v830
        %v974 = vsel %vm968, %v949, %v832
        %v975 = vsel %vm968, %v950, %v834
        %v976 = vsel %vm968, %v951, %v836
        %v977 = vsel %vm968, %v952, %v838
        %v978 = vsel %vm968, %v953, %v840
        %v979 = vsel %vm968, %v954, %v842
        %v980 = vsel %vm968, %v955, %v844
        %v981 = vsel %vm968, %v956, %v846
        %v982 = vsel %vm968, %v957, %v848
        %v983 = vsel %vm968, %v958, %v850
        %v984 = vsel %vm968, %v959, %v852
        %v985 = vsel %vm968, %v960, %v854
        %v986 = vsel %vm968, %v961, %v856
        %v987 = vsel %vm968, %v962, %v858
        %v988 = vsel %vm968, %v963, %v860
        %v989 = vsel %vm968, %v964, %v862
        %v990 = vsel %vm968, %v965, %v864
        %v991 = vsel %vm968, %v966, %v866
        %v992 = vsel %vm968, %v967, %v868
        %v993 = vpack.c.bf16 %v970, %v969
        %v994 = vpack.c.bf16 %v824, %v822
        %v995 = vpack.c.bf16 %v972, %v971
        %v996 = vpack.c.bf16 %v828, %v826
        %v997 = vpack.c.bf16 %v974, %v973
        %v998 = vpack.c.bf16 %v832, %v830
        %v999 = vpack.c.bf16 %v976, %v975
        %v1000 = vpack.c.bf16 %v836, %v834
        %v1001 = vpack.c.bf16 %v978, %v977
        %v1002 = vpack.c.bf16 %v840, %v838
        %v1003 = vpack.c.bf16 %v980, %v979
        %v1004 = vpack.c.bf16 %v844, %v842
        %v1005 = vpack.c.bf16 %v982, %v981
        %v1006 = vpack.c.bf16 %v848, %v846
        %v1007 = vpack.c.bf16 %v984, %v983
        %v1008 = vpack.c.bf16 %v852, %v850
        %v1009 = vpack.c.bf16 %v986, %v985
        %v1010 = vpack.c.bf16 %v856, %v854
        %v1011 = vpack.c.bf16 %v988, %v987
        %v1012 = vpack.c.bf16 %v860, %v858
        %v1013 = vpack.c.bf16 %v990, %v989
        %v1014 = vpack.c.bf16 %v864, %v862
        %v1015 = vpack.c.bf16 %v992, %v991
        %v1016 = vpack.c.bf16 %v868, %v866
        %v1017 = vld [vmem:[#allocation2] sm:$0xff]
        %v1018 = vld [vmem:[#allocation2 + $0x8] sm:$0xff]
        %v1019 = vld [vmem:[#allocation2 + $0x10] sm:$0xff]
        %v1020 = vld [vmem:[#allocation2 + $0x18] sm:$0xff]
        %v1021 = vld [vmem:[#allocation2 + $0x20] sm:$0xff]
        %v1022 = vld [vmem:[#allocation2 + $0x28] sm:$0xff]
        %v1023 = vld [vmem:[#allocation2 + $0x30] sm:$0xff]
        %v1024 = vld [vmem:[#allocation2 + $0x38] sm:$0xff]
        %v1025 = vld [vmem:[#allocation2 + $0x40] sm:$0xff]
        %v1026 = vld [vmem:[#allocation2 + $0x48] sm:$0xff]
        %v1027 = vld [vmem:[#allocation2 + $0x50] sm:$0xff]
        %v1028 = vld [vmem:[#allocation2 + $0x58] sm:$0xff]
        %v1029 = vld [vmem:[#allocation2 + $0x60] sm:$0xff]
        %v1030 = vld [vmem:[#allocation2 + $0x68] sm:$0xff]
        %v1031 = vld [vmem:[#allocation2 + $0x70] sm:$0xff]
        %v1032 = vld [vmem:[#allocation2 + $0x78] sm:$0xff]
        %v1033 = vld [vmem:[#allocation2 + $0x80] sm:$0xff]
        %v1034 = vld [vmem:[#allocation2 + $0x88] sm:$0x33]
        %v1035 = vld [vmem:[%s6] ss:$4 sm:$0x3]
        %v1037 = vlaneseq
        %v1038 = vshrl.u32 %v1037, 7
        %v1039 = vsub.s32 0, %v1038
        %v1040 = vrot.slane %v1035, %v1039
        %v1041 = vlaneseq
        %v1042 = vshrl.u32 %v1041, 7
        %v1043 = vsub.s32 1, %v1042
        %v1044 = vrot.slane %v1035, %v1043
        %v1065 = vunpack.c.l.b16 %v1017
        %v1066 = vunpack.c.h.b16 %v1017
        %v1067 = vunpack.c.l.b16 %v1018
        %v1068 = vunpack.c.h.b16 %v1018
        %v1069 = vunpack.c.l.b16 %v1019
        %v1070 = vunpack.c.h.b16 %v1019
        %v1071 = vunpack.c.l.b16 %v1020
        %v1072 = vunpack.c.h.b16 %v1020
        %v1073 = vunpack.c.l.b16 %v1021
        %v1074 = vunpack.c.h.b16 %v1021
        %v1075 = vunpack.c.l.b16 %v1022
        %v1076 = vunpack.c.h.b16 %v1022
        %v1077 = vunpack.c.l.b16 %v1023
        %v1078 = vunpack.c.h.b16 %v1023
        %v1079 = vunpack.c.l.b16 %v1024
        %v1080 = vunpack.c.h.b16 %v1024
        %v1081 = vunpack.c.l.b16 %v1025
        %v1082 = vunpack.c.h.b16 %v1025
        %v1083 = vunpack.c.l.b16 %v1026
        %v1084 = vunpack.c.h.b16 %v1026
        %v1085 = vunpack.c.l.b16 %v1027
        %v1086 = vunpack.c.h.b16 %v1027
        %v1087 = vunpack.c.l.b16 %v1028
        %v1088 = vunpack.c.h.b16 %v1028
        %v1089 = vunpack.c.l.b16 %v1029
        %v1090 = vunpack.c.h.b16 %v1029
        %v1091 = vunpack.c.l.b16 %v1030
        %v1092 = vunpack.c.h.b16 %v1030
        %v1093 = vunpack.c.l.b16 %v1031
        %v1094 = vunpack.c.h.b16 %v1031
        %v1095 = vunpack.c.l.b16 %v1032
        %v1096 = vunpack.c.h.b16 %v1032
        %v1097 = vunpack.c.l.b16 %v1033
        %v1098 = vunpack.c.h.b16 %v1033
        %v1099 = vunpack.c.l.b16 %v1034
        %v1100 = vunpack.c.h.b16 %v1034
        %v1101 = vpack.c.b16 %v1067, %v1065
        %v1102 = vpack.c.b16 %v1068, %v1066
        %v1103 = vpack.c.b16 %v1071, %v1069
        %v1104 = vpack.c.b16 %v1072, %v1070
        %v1105 = vpack.c.b16 %v1075, %v1073
        %v1106 = vpack.c.b16 %v1076, %v1074
        %v1107 = vpack.c.b16 %v1079, %v1077
        %v1108 = vpack.c.b16 %v1080, %v1078
        %v1109 = vpack.c.b16 %v1083, %v1081
        %v1110 = vpack.c.b16 %v1084, %v1082
        %v1111 = vpack.c.b16 %v1087, %v1085
        %v1112 = vpack.c.b16 %v1088, %v1086
        %v1113 = vpack.c.b16 %v1091, %v1089
        %v1114 = vpack.c.b16 %v1092, %v1090
        %v1115 = vpack.c.b16 %v1095, %v1093
        %v1116 = vpack.c.b16 %v1096, %v1094
        %v1117 = vpack.c.b16 %v1099, %v1097
        %v1118 = vpack.c.b16 %v1100, %v1098
        %vm1135 = vcmask 97280
        %v1137 = vsel %vm1135, %v994, 0
        %v1140 = vsel %vm1135, %v996, 0
        %v1143 = vsel %vm1135, %v998, 0
        %v1146 = vsel %vm1135, %v1000, 0
        %v1149 = vsel %vm1135, %v1002, 0
        %v1152 = vsel %vm1135, %v1004, 0
        %v1155 = vsel %vm1135, %v1006, 0
        %v1158 = vsel %vm1135, %v1008, 0
        %v1161 = vsel %vm1135, %v1010, 0
        %v1164 = vsel %vm1135, %v1012, 0
        %v1167 = vsel %vm1135, %v1014, 0
        %v1170 = vsel %vm1135, %v1016, 0
        %v1173 = vsel %vm506, %v1117, 0
        %v1176 = vsel %vm506, %v1118, 0
        %1178 = vmatprep.subr.bf16.mxu0 %v1116
        %1179 = vmatpush1.bf16.msra.mxu0 %v1115
        %1180 = vmatprep.subr.bf16.mxu0 %v1114
        %1181 = vmatpush1.bf16.msra.mxu0 %v1113
        %1182 = vmatprep.subr.bf16.mxu0 %v1112
        %1183 = vmatpush1.bf16.msra.mxu0 %v1111
        %1184 = vmatprep.subr.bf16.mxu0 %v1110
        %1185 = vmatpush1.bf16.msra.mxu0 %v1109
        %1186 = vmatprep.subr.bf16.mxu0 %v1108
        %1187 = vmatpush1.bf16.msra.mxu0 %v1107
        %1188 = vmatprep.subr.bf16.mxu0 %v1106
        %1189 = vmatpush1.bf16.msra.mxu0 %v1105
        %1190 = vmatprep.subr.bf16.mxu0 %v1104
        %1191 = vmatpush1.bf16.msra.mxu0 %v1103
        %1192 = vmatprep.subr.bf16.mxu0 %v1102
        %1193 = vmatpush1.bf16.msra.mxu0 %v1101
        %1194 = vmatprep.subr.bf16.mxu0 0
        %1195 = vmatpush2.bf16.msra.mxu0 0
        %1196 = vmatprep.subr.bf16.mxu0 0
        %1197 = vmatpush2.bf16.msra.mxu0 0
        %1198 = vmatprep.subr.bf16.mxu0 0
        %1199 = vmatpush2.bf16.msra.mxu0 0
        %1200 = vmatprep.subr.bf16.mxu0 0
        %1201 = vmatpush2.bf16.msra.mxu0 0
        %1202 = vmatprep.subr.bf16.mxu0 0
        %1203 = vmatpush2.bf16.msra.mxu0 0
        %1204 = vmatprep.subr.bf16.mxu0 0
        %1205 = vmatpush2.bf16.msra.mxu0 0
        %1206 = vmatprep.subr.bf16.mxu0 0
        %1207 = vmatpush2.bf16.msra.mxu0 0
        %1208 = vmatprep.subr.bf16.mxu0 %v1176
        %1209 = vmatpush2.bf16.msra.mxu0 %v1173
        %1210 = vmatprep.mubr.bf16.mxu0 %v1137
        %1211 = vmatmul.mubr.bf16.gmra.mxu0 %v993
        %v1212 = vpop.f32.mrf.mxu0
        %v1213 = vadd.f32 %v1040, %v1212
        %v1214 = vpop.f32.mrf.mxu0
        %v1215 = vadd.f32 %v1044, %v1214
        %v1216 = vpop.f32.mrf.mxu0
        %v1217 = vadd.f32 %v1040, %v1216
        %v1218 = vpop.f32.mrf.mxu0
        %v1219 = vadd.f32 %v1044, %v1218
        %1220 = vmatprep.mubr.bf16.mxu0 %v1140
        %1221 = vmatmul.mubr.bf16.gmra.mxu0 %v995
        %v1222 = vpop.f32.mrf.mxu0
        %v1223 = vadd.f32 %v1040, %v1222
        %v1224 = vpop.f32.mrf.mxu0
        %v1225 = vadd.f32 %v1044, %v1224
        %v1226 = vpop.f32.mrf.mxu0
        %v1227 = vadd.f32 %v1040, %v1226
        %v1228 = vpop.f32.mrf.mxu0
        %v1229 = vadd.f32 %v1044, %v1228
        %1230 = vmatprep.mubr.bf16.mxu0 %v1143
        %1231 = vmatmul.mubr.bf16.gmra.mxu0 %v997
        %v1232 = vpop.f32.mrf.mxu0
        %v1233 = vadd.f32 %v1040, %v1232
        %v1234 = vpop.f32.mrf.mxu0
        %v1235 = vadd.f32 %v1044, %v1234
        %v1236 = vpop.f32.mrf.mxu0
        %v1237 = vadd.f32 %v1040, %v1236
        %v1238 = vpop.f32.mrf.mxu0
        %v1239 = vadd.f32 %v1044, %v1238
        %1240 = vmatprep.mubr.bf16.mxu0 %v1146
        %1241 = vmatmul.mubr.bf16.gmra.mxu0 %v999
        %v1242 = vpop.f32.mrf.mxu0
        %v1243 = vadd.f32 %v1040, %v1242
        %v1244 = vpop.f32.mrf.mxu0
        %v1245 = vadd.f32 %v1044, %v1244
        %v1246 = vpop.f32.mrf.mxu0
        %v1247 = vadd.f32 %v1040, %v1246
        %v1248 = vpop.f32.mrf.mxu0
        %v1249 = vadd.f32 %v1044, %v1248
        %1250 = vmatprep.mubr.bf16.mxu0 %v1149
        %1251 = vmatmul.mubr.bf16.gmra.mxu0 %v1001
        %v1252 = vpop.f32.mrf.mxu0
        %v1253 = vadd.f32 %v1040, %v1252
        %v1254 = vpop.f32.mrf.mxu0
        %v1255 = vadd.f32 %v1044, %v1254
        %v1256 = vpop.f32.mrf.mxu0
        %v1257 = vadd.f32 %v1040, %v1256
        %v1258 = vpop.f32.mrf.mxu0
        %v1259 = vadd.f32 %v1044, %v1258
        %1260 = vmatprep.mubr.bf16.mxu0 %v1152
        %1261 = vmatmul.mubr.bf16.gmra.mxu0 %v1003
        %v1262 = vpop.f32.mrf.mxu0
        %v1263 = vadd.f32 %v1040, %v1262
        %v1264 = vpop.f32.mrf.mxu0
        %v1265 = vadd.f32 %v1044, %v1264
        %v1266 = vpop.f32.mrf.mxu0
        %v1267 = vadd.f32 %v1040, %v1266
        %v1268 = vpop.f32.mrf.mxu0
        %v1269 = vadd.f32 %v1044, %v1268
        %1270 = vmatprep.mubr.bf16.mxu0 %v1155
        %1271 = vmatmul.mubr.bf16.gmra.mxu0 %v1005
        %v1272 = vpop.f32.mrf.mxu0
        %v1273 = vadd.f32 %v1040, %v1272
        %v1274 = vpop.f32.mrf.mxu0
        %v1275 = vadd.f32 %v1044, %v1274
        %v1276 = vpop.f32.mrf.mxu0
        %v1277 = vadd.f32 %v1040, %v1276
        %v1278 = vpop.f32.mrf.mxu0
        %v1279 = vadd.f32 %v1044, %v1278
        %1280 = vmatprep.mubr.bf16.mxu0 %v1158
        %1281 = vmatmul.mubr.bf16.gmra.mxu0 %v1007
        %v1282 = vpop.f32.mrf.mxu0
        %v1283 = vadd.f32 %v1040, %v1282
        %v1284 = vpop.f32.mrf.mxu0
        %v1285 = vadd.f32 %v1044, %v1284
        %v1286 = vpop.f32.mrf.mxu0
        %v1287 = vadd.f32 %v1040, %v1286
        %v1288 = vpop.f32.mrf.mxu0
        %v1289 = vadd.f32 %v1044, %v1288
        %1290 = vmatprep.mubr.bf16.mxu0 %v1161
        %1291 = vmatmul.mubr.bf16.gmra.mxu0 %v1009
        %v1292 = vpop.f32.mrf.mxu0
        %v1293 = vadd.f32 %v1040, %v1292
        %v1294 = vpop.f32.mrf.mxu0
        %v1295 = vadd.f32 %v1044, %v1294
        %v1296 = vpop.f32.mrf.mxu0
        %v1297 = vadd.f32 %v1040, %v1296
        %v1298 = vpop.f32.mrf.mxu0
        %v1299 = vadd.f32 %v1044, %v1298
        %1300 = vmatprep.mubr.bf16.mxu0 %v1164
        %1301 = vmatmul.mubr.bf16.gmra.mxu0 %v1011
        %v1302 = vpop.f32.mrf.mxu0
        %v1303 = vadd.f32 %v1040, %v1302
        %v1304 = vpop.f32.mrf.mxu0
        %v1305 = vadd.f32 %v1044, %v1304
        %v1306 = vpop.f32.mrf.mxu0
        %v1307 = vadd.f32 %v1040, %v1306
        %v1308 = vpop.f32.mrf.mxu0
        %v1309 = vadd.f32 %v1044, %v1308
        %1310 = vmatprep.mubr.bf16.mxu0 %v1167
        %1311 = vmatmul.mubr.bf16.gmra.mxu0 %v1013
        %v1312 = vpop.f32.mrf.mxu0
        %v1313 = vadd.f32 %v1040, %v1312
        %v1314 = vpop.f32.mrf.mxu0
        %v1315 = vadd.f32 %v1044, %v1314
        %v1316 = vpop.f32.mrf.mxu0
        %v1317 = vadd.f32 %v1040, %v1316
        %v1318 = vpop.f32.mrf.mxu0
        %v1319 = vadd.f32 %v1044, %v1318
        %1320 = vmatprep.mubr.bf16.mxu0 %v1170
        %1321 = vmatmul.mubr.bf16.gmra.mxu0 %v1015
        %v1322 = vpop.f32.mrf.mxu0
        %v1323 = vadd.f32 %v1040, %v1322
        %v1324 = vpop.f32.mrf.mxu0
        %v1325 = vadd.f32 %v1044, %v1324
        %v1326 = vpop.f32.mrf.mxu0
        %v1327 = vadd.f32 %v1040, %v1326
        %v1328 = vpop.f32.mrf.mxu0
        %v1329 = vadd.f32 %v1044, %v1328
        %1330 = vdwg.mxu0
        %v1331 = vmax.f32 %v1213, 0.0
        %v1332 = vmax.f32 %v1215, 0.0
        %v1333 = vmax.f32 %v1217, 0.0
        %v1334 = vmax.f32 %v1219, 0.0
        %v1335 = vmax.f32 %v1223, 0.0
        %v1336 = vmax.f32 %v1225, 0.0
        %v1337 = vmax.f32 %v1227, 0.0
        %v1338 = vmax.f32 %v1229, 0.0
        %v1339 = vmax.f32 %v1233, 0.0
        %v1340 = vmax.f32 %v1235, 0.0
        %v1341 = vmax.f32 %v1237, 0.0
        %v1342 = vmax.f32 %v1239, 0.0
        %v1343 = vmax.f32 %v1243, 0.0
        %v1344 = vmax.f32 %v1245, 0.0
        %v1345 = vmax.f32 %v1247, 0.0
        %v1346 = vmax.f32 %v1249, 0.0
        %v1347 = vmax.f32 %v1253, 0.0
        %v1348 = vmax.f32 %v1255, 0.0
        %v1349 = vmax.f32 %v1257, 0.0
        %v1350 = vmax.f32 %v1259, 0.0
        %v1351 = vmax.f32 %v1263, 0.0
        %v1352 = vmax.f32 %v1265, 0.0
        %v1353 = vmax.f32 %v1267, 0.0
        %v1354 = vmax.f32 %v1269, 0.0
        %v1355 = vmax.f32 %v1273, 0.0
        %v1356 = vmax.f32 %v1275, 0.0
        %v1357 = vmax.f32 %v1277, 0.0
        %v1358 = vmax.f32 %v1279, 0.0
        %v1359 = vmax.f32 %v1283, 0.0
        %v1360 = vmax.f32 %v1285, 0.0
        %v1361 = vmax.f32 %v1287, 0.0
        %v1362 = vmax.f32 %v1289, 0.0
        %v1363 = vmax.f32 %v1293, 0.0
        %v1364 = vmax.f32 %v1295, 0.0
        %v1365 = vmax.f32 %v1297, 0.0
        %v1366 = vmax.f32 %v1299, 0.0
        %v1367 = vmax.f32 %v1303, 0.0
        %v1368 = vmax.f32 %v1305, 0.0
        %v1369 = vmax.f32 %v1307, 0.0
        %v1370 = vmax.f32 %v1309, 0.0
        %v1371 = vmax.f32 %v1313, 0.0
        %v1372 = vmax.f32 %v1315, 0.0
        %v1373 = vmax.f32 %v1317, 0.0
        %v1374 = vmax.f32 %v1319, 0.0
        %v1375 = vmax.f32 %v1323, 0.0
        %v1376 = vmax.f32 %v1325, 0.0
        %v1377 = vmax.f32 %v1327, 0.0
        %v1378 = vmax.f32 %v1329, 0.0
        %v1379 = vld [vmem:[#allocation5] sm:$0xff]
        %v1380 = vld [vmem:[#allocation5 + $0x8] sm:$0xff]
        %v1381 = vld [vmem:[#allocation5 + $0x10] sm:$0xff]
        %v1382 = vld [vmem:[#allocation5 + $0x18] sm:$0xff]
        %v1383 = vld [vmem:[#allocation5 + $0x20] sm:$0xff]
        %v1384 = vld [vmem:[#allocation5 + $0x28] sm:$0xff]
        %v1385 = vld [vmem:[#allocation5 + $0x30] sm:$0xff]
        %v1386 = vld [vmem:[#allocation5 + $0x38] sm:$0xff]
        %v1387 = vld [vmem:[#allocation5 + $0x40] sm:$0xff]
        %v1388 = vld [vmem:[#allocation5 + $0x48] sm:$0xff]
        %v1389 = vld [vmem:[#allocation5 + $0x50] sm:$0xff]
        %v1390 = vld [vmem:[#allocation5 + $0x58] sm:$0xff]
        %v1391 = vld [vmem:[#allocation5 + $0x60] sm:$0xff]
        %v1392 = vld [vmem:[#allocation5 + $0x68] sm:$0xff]
        %v1393 = vld [vmem:[#allocation5 + $0x70] sm:$0xff]
        %v1394 = vld [vmem:[#allocation5 + $0x78] sm:$0xff]
        %v1395 = vpack.c.bf16 %v1333, %v1331
        %v1396 = vpack.c.bf16 %v1334, %v1332
        %v1397 = vpack.c.bf16 %v1337, %v1335
        %v1398 = vpack.c.bf16 %v1338, %v1336
        %v1399 = vpack.c.bf16 %v1341, %v1339
        %v1400 = vpack.c.bf16 %v1342, %v1340
        %v1401 = vpack.c.bf16 %v1345, %v1343
        %v1402 = vpack.c.bf16 %v1346, %v1344
        %v1403 = vpack.c.bf16 %v1349, %v1347
        %v1404 = vpack.c.bf16 %v1350, %v1348
        %v1405 = vpack.c.bf16 %v1353, %v1351
        %v1406 = vpack.c.bf16 %v1354, %v1352
        %v1407 = vpack.c.bf16 %v1357, %v1355
        %v1408 = vpack.c.bf16 %v1358, %v1356
        %v1409 = vpack.c.bf16 %v1361, %v1359
        %v1410 = vpack.c.bf16 %v1362, %v1360
        %v1411 = vpack.c.bf16 %v1365, %v1363
        %v1412 = vpack.c.bf16 %v1366, %v1364
        %v1413 = vpack.c.bf16 %v1369, %v1367
        %v1414 = vpack.c.bf16 %v1370, %v1368
        %v1415 = vpack.c.bf16 %v1373, %v1371
        %v1416 = vpack.c.bf16 %v1374, %v1372
        %v1417 = vpack.c.bf16 %v1377, %v1375
        %v1418 = vpack.c.bf16 %v1378, %v1376
        %v1435 = vunpack.c.l.b16 %v1379
        %v1436 = vunpack.c.h.b16 %v1379
        %v1437 = vunpack.c.l.b16 %v1380
        %v1438 = vunpack.c.h.b16 %v1380
        %v1439 = vunpack.c.l.b16 %v1381
        %v1440 = vunpack.c.h.b16 %v1381
        %v1441 = vunpack.c.l.b16 %v1382
        %v1442 = vunpack.c.h.b16 %v1382
        %v1443 = vunpack.c.l.b16 %v1383
        %v1444 = vunpack.c.h.b16 %v1383
        %v1445 = vunpack.c.l.b16 %v1384
        %v1446 = vunpack.c.h.b16 %v1384
        %v1447 = vunpack.c.l.b16 %v1385
        %v1448 = vunpack.c.h.b16 %v1385
        %v1449 = vunpack.c.l.b16 %v1386
        %v1450 = vunpack.c.h.b16 %v1386
        %v1451 = vunpack.c.l.b16 %v1387
        %v1452 = vunpack.c.h.b16 %v1387
        %v1453 = vunpack.c.l.b16 %v1388
        %v1454 = vunpack.c.h.b16 %v1388
        %v1455 = vunpack.c.l.b16 %v1389
        %v1456 = vunpack.c.h.b16 %v1389
        %v1457 = vunpack.c.l.b16 %v1390
        %v1458 = vunpack.c.h.b16 %v1390
        %v1459 = vunpack.c.l.b16 %v1391
        %v1460 = vunpack.c.h.b16 %v1391
        %v1461 = vunpack.c.l.b16 %v1392
        %v1462 = vunpack.c.h.b16 %v1392
        %v1463 = vunpack.c.l.b16 %v1393
        %v1464 = vunpack.c.h.b16 %v1393
        %v1465 = vunpack.c.l.b16 %v1394
        %v1466 = vunpack.c.h.b16 %v1394
        %v1467 = vpack.c.b16 %v1437, %v1435
        %v1468 = vpack.c.b16 %v1438, %v1436
        %v1469 = vpack.c.b16 %v1441, %v1439
        %v1470 = vpack.c.b16 %v1442, %v1440
        %v1471 = vpack.c.b16 %v1445, %v1443
        %v1472 = vpack.c.b16 %v1446, %v1444
        %v1473 = vpack.c.b16 %v1449, %v1447
        %v1474 = vpack.c.b16 %v1450, %v1448
        %v1475 = vpack.c.b16 %v1453, %v1451
        %v1476 = vpack.c.b16 %v1454, %v1452
        %v1477 = vpack.c.b16 %v1457, %v1455
        %v1478 = vpack.c.b16 %v1458, %v1456
        %v1479 = vpack.c.b16 %v1461, %v1459
        %v1480 = vpack.c.b16 %v1462, %v1460
        %v1481 = vpack.c.b16 %v1465, %v1463
        %v1482 = vpack.c.b16 %v1466, %v1464
        %vm1491 = vcmask 523264
        %v1493 = vsel %vm1491, %v1468, 0
        %v1496 = vsel %vm1491, %v1470, 0
        %v1499 = vsel %vm1491, %v1472, 0
        %v1502 = vsel %vm1491, %v1474, 0
        %v1505 = vsel %vm1491, %v1476, 0
        %v1508 = vsel %vm1491, %v1478, 0
        %v1511 = vsel %vm1491, %v1480, 0
        %v1514 = vsel %vm1491, %v1482, 0
        %1516 = vmatprep.subr.bf16.mxu0 %v1410
        %1517 = vmatpush1.bf16.msra.mxu0 %v1409
        %1518 = vmatprep.subr.bf16.mxu0 %v1408
        %1519 = vmatpush1.bf16.msra.mxu0 %v1407
        %1520 = vmatprep.subr.bf16.mxu0 %v1406
        %1521 = vmatpush1.bf16.msra.mxu0 %v1405
        %1522 = vmatprep.subr.bf16.mxu0 %v1404
        %1523 = vmatpush1.bf16.msra.mxu0 %v1403
        %1524 = vmatprep.subr.bf16.mxu0 %v1402
        %1525 = vmatpush1.bf16.msra.mxu0 %v1401
        %1526 = vmatprep.subr.bf16.mxu0 %v1400
        %1527 = vmatpush1.bf16.msra.mxu0 %v1399
        %1528 = vmatprep.subr.bf16.mxu0 %v1398
        %1529 = vmatpush1.bf16.msra.mxu0 %v1397
        %1530 = vmatprep.subr.bf16.mxu0 %v1396
        %1531 = vmatpush1.bf16.msra.mxu0 %v1395
        %1532 = vmatprep.subr.bf16.mxu0 0
        %1533 = vmatpush2.bf16.msra.mxu0 0
        %1534 = vmatprep.subr.bf16.mxu0 0
        %1535 = vmatpush2.bf16.msra.mxu0 0
        %1536 = vmatprep.subr.bf16.mxu0 0
        %1537 = vmatpush2.bf16.msra.mxu0 0
        %1538 = vmatprep.subr.bf16.mxu0 0
        %1539 = vmatpush2.bf16.msra.mxu0 0
        %1540 = vmatprep.subr.bf16.mxu0 %v1418
        %1541 = vmatpush2.bf16.msra.mxu0 %v1417
        %1542 = vmatprep.subr.bf16.mxu0 %v1416
        %1543 = vmatpush2.bf16.msra.mxu0 %v1415
        %1544 = vmatprep.subr.bf16.mxu0 %v1414
        %1545 = vmatpush2.bf16.msra.mxu0 %v1413
        %1546 = vmatprep.subr.bf16.mxu0 %v1412
        %1547 = vmatpush2.bf16.msra.mxu0 %v1411
        %1548 = vmatprep.mubr.bf16.mxu0 %v1493
        %1549 = vmatmul.mubr.bf16.gmra.mxu0 %v1467
        %v1550 = vpop.f32.mrf.mxu0
        %v1551 = vadd.f32 0.0, %v1550
        %v1552 = vpop.f32.mrf.mxu0
        %v1553 = vadd.f32 0.0, %v1552
        %v1554 = vpop.f32.mrf.mxu0
        %v1555 = vadd.f32 0.0, %v1554
        %v1556 = vpop.f32.mrf.mxu0
        %v1557 = vadd.f32 0.0, %v1556
        %1558 = vmatprep.mubr.bf16.mxu0 %v1496
        %1559 = vmatmul.mubr.bf16.gmra.mxu0 %v1469
        %v1560 = vpop.f32.mrf.mxu0
        %v1561 = vadd.f32 0.0, %v1560
        %v1562 = vpop.f32.mrf.mxu0
        %v1563 = vadd.f32 0.0, %v1562
        %v1564 = vpop.f32.mrf.mxu0
        %v1565 = vadd.f32 0.0, %v1564
        %v1566 = vpop.f32.mrf.mxu0
        %v1567 = vadd.f32 0.0, %v1566
        %1568 = vmatprep.mubr.bf16.mxu0 %v1499
        %1569 = vmatmul.mubr.bf16.gmra.mxu0 %v1471
        %v1570 = vpop.f32.mrf.mxu0
        %v1571 = vadd.f32 0.0, %v1570
        %v1572 = vpop.f32.mrf.mxu0
        %v1573 = vadd.f32 0.0, %v1572
        %v1574 = vpop.f32.mrf.mxu0
        %v1575 = vadd.f32 0.0, %v1574
        %v1576 = vpop.f32.mrf.mxu0
        %v1577 = vadd.f32 0.0, %v1576
        %1578 = vmatprep.mubr.bf16.mxu0 %v1502
        %1579 = vmatmul.mubr.bf16.gmra.mxu0 %v1473
        %v1580 = vpop.f32.mrf.mxu0
        %v1581 = vadd.f32 0.0, %v1580
        %v1582 = vpop.f32.mrf.mxu0
        %v1583 = vadd.f32 0.0, %v1582
        %v1584 = vpop.f32.mrf.mxu0
        %v1585 = vadd.f32 0.0, %v1584
        %v1586 = vpop.f32.mrf.mxu0
        %v1587 = vadd.f32 0.0, %v1586
        %1588 = vmatprep.mubr.bf16.mxu0 %v1505
        %1589 = vmatmul.mubr.bf16.gmra.mxu0 %v1475
        %v1590 = vpop.f32.mrf.mxu0
        %v1591 = vadd.f32 0.0, %v1590
        %v1592 = vpop.f32.mrf.mxu0
        %v1593 = vadd.f32 0.0, %v1592
        %v1594 = vpop.f32.mrf.mxu0
        %v1595 = vadd.f32 0.0, %v1594
        %v1596 = vpop.f32.mrf.mxu0
        %v1597 = vadd.f32 0.0, %v1596
        %1598 = vmatprep.mubr.bf16.mxu0 %v1508
        %1599 = vmatmul.mubr.bf16.gmra.mxu0 %v1477
        %v1600 = vpop.f32.mrf.mxu0
        %v1601 = vadd.f32 0.0, %v1600
        %v1602 = vpop.f32.mrf.mxu0
        %v1603 = vadd.f32 0.0, %v1602
        %v1604 = vpop.f32.mrf.mxu0
        %v1605 = vadd.f32 0.0, %v1604
        %v1606 = vpop.f32.mrf.mxu0
        %v1607 = vadd.f32 0.0, %v1606
        %1608 = vmatprep.mubr.bf16.mxu0 %v1511
        %1609 = vmatmul.mubr.bf16.gmra.mxu0 %v1479
        %v1610 = vpop.f32.mrf.mxu0
        %v1611 = vadd.f32 0.0, %v1610
        %v1612 = vpop.f32.mrf.mxu0
        %v1613 = vadd.f32 0.0, %v1612
        %v1614 = vpop.f32.mrf.mxu0
        %v1615 = vadd.f32 0.0, %v1614
        %v1616 = vpop.f32.mrf.mxu0
        %v1617 = vadd.f32 0.0, %v1616
        %1618 = vmatprep.mubr.bf16.mxu0 %v1514
        %1619 = vmatmul.mubr.bf16.gmra.mxu0 %v1481
        %v1620 = vpop.f32.mrf.mxu0
        %v1621 = vadd.f32 0.0, %v1620
        %v1622 = vpop.f32.mrf.mxu0
        %v1623 = vadd.f32 0.0, %v1622
        %v1624 = vpop.f32.mrf.mxu0
        %v1625 = vadd.f32 0.0, %v1624
        %v1626 = vpop.f32.mrf.mxu0
        %v1627 = vadd.f32 0.0, %v1626
        %1628 = vdwg.mxu0
        %v1661 = vrot.slane %v1551, 1
        %v1662 = vrot.slane %v1555, 1
        %v1663 = vsel %vm377, %v1661, %v1662
        %v1664 = vrot.slane %v1553, 1
        %v1665 = vrot.slane %v1557, 1
        %v1666 = vsel %vm377, %v1664, %v1665
        %v1667 = vrot.slane %v1561, 1
        %v1668 = vrot.slane %v1565, 1
        %v1669 = vsel %vm377, %v1667, %v1668
        %v1670 = vrot.slane %v1563, 1
        %v1671 = vrot.slane %v1567, 1
        %v1672 = vsel %vm377, %v1670, %v1671
        %v1673 = vrot.slane %v1571, 1
        %v1674 = vrot.slane %v1575, 1
        %v1675 = vsel %vm377, %v1673, %v1674
        %v1676 = vrot.slane %v1573, 1
        %v1677 = vrot.slane %v1577, 1
        %v1678 = vsel %vm377, %v1676, %v1677
        %v1679 = vrot.slane %v1581, 1
        %v1680 = vrot.slane %v1585, 1
        %v1681 = vsel %vm377, %v1679, %v1680
        %v1682 = vrot.slane %v1583, 1
        %v1683 = vrot.slane %v1587, 1
        %v1684 = vsel %vm377, %v1682, %v1683
        %v1685 = vrot.slane %v1591, 1
        %v1686 = vrot.slane %v1595, 1
        %v1687 = vsel %vm377, %v1685, %v1686
        %v1688 = vrot.slane %v1593, 1
        %v1689 = vrot.slane %v1597, 1
        %v1690 = vsel %vm377, %v1688, %v1689
        %v1691 = vrot.slane %v1601, 1
        %v1692 = vrot.slane %v1605, 1
        %v1693 = vsel %vm377, %v1691, %v1692
        %v1694 = vrot.slane %v1603, 1
        %v1695 = vrot.slane %v1607, 1
        %v1696 = vsel %vm377, %v1694, %v1695
        %v1697 = vrot.slane %v1611, 1
        %v1698 = vrot.slane %v1615, 1
        %v1699 = vsel %vm377, %v1697, %v1698
        %v1700 = vrot.slane %v1613, 1
        %v1701 = vrot.slane %v1617, 1
        %v1702 = vsel %vm377, %v1700, %v1701
        %v1703 = vrot.slane %v1621, 1
        %v1704 = vrot.slane %v1625, 1
        %v1705 = vsel %vm377, %v1703, %v1704
        %v1706 = vrot.slane %v1623, 1
        %v1707 = vrot.slane %v1627, 1
        %v1708 = vsel %vm377, %v1706, %v1707
        %1709 = vrot.lane.b32.xlu0 %v1663, 16
        %v1710 = vpop.permute.xlu0 %1709
        %1711 = vrot.lane.b32.xlu0 %v1666, 16
        %v1712 = vpop.permute.xlu0 %1711
        %1713 = vrot.lane.b32.xlu0 %v1669, 16
        %v1714 = vpop.permute.xlu0 %1713
        %1715 = vrot.lane.b32.xlu0 %v1672, 16
        %v1716 = vpop.permute.xlu0 %1715
        %1717 = vrot.lane.b32.xlu0 %v1675, 16
        %v1718 = vpop.permute.xlu0 %1717
        %1719 = vrot.lane.b32.xlu0 %v1678, 16
        %v1720 = vpop.permute.xlu0 %1719
        %1721 = vrot.lane.b32.xlu0 %v1681, 16
        %v1722 = vpop.permute.xlu0 %1721
        %1723 = vrot.lane.b32.xlu0 %v1684, 16
        %v1724 = vpop.permute.xlu0 %1723
        %1725 = vrot.lane.b32.xlu0 %v1687, 16
        %v1726 = vpop.permute.xlu0 %1725
        %1727 = vrot.lane.b32.xlu0 %v1690, 16
        %v1728 = vpop.permute.xlu0 %1727
        %1729 = vrot.lane.b32.xlu0 %v1693, 16
        %v1730 = vpop.permute.xlu0 %1729
        %1731 = vrot.lane.b32.xlu0 %v1696, 16
        %v1732 = vpop.permute.xlu0 %1731
        %1733 = vrot.lane.b32.xlu0 %v1699, 16
        %v1734 = vpop.permute.xlu0 %1733
        %1735 = vrot.lane.b32.xlu0 %v1702, 16
        %v1736 = vpop.permute.xlu0 %1735
        %1737 = vrot.lane.b32.xlu0 %v1705, 16
        %v1738 = vpop.permute.xlu0 %1737
        %1739 = vrot.lane.b32.xlu0 %v1708, 16
        %v1740 = vpop.permute.xlu0 %1739
        %vm1741 = vcmask 130048
        %v1742 = vsel %vm1741, %v1710, %v1712
        %v1743 = vsel %vm1741, %v1714, %v1716
        %v1744 = vsel %vm1741, %v1718, %v1720
        %v1745 = vsel %vm1741, %v1722, %v1724
        %v1746 = vsel %vm1741, %v1726, %v1728
        %v1747 = vsel %vm1741, %v1730, %v1732
        %v1748 = vsel %vm1741, %v1734, %v1736
        %v1749 = vsel %vm1741, %v1738, %v1740
        %v1766 = vrot.slane %v1551, 2
        %v1767 = vrot.slane %v1555, 2
        %v1768 = vsel %vm506, %v1766, %v1767
        %v1769 = vrot.slane %v1553, 2
        %v1770 = vrot.slane %v1557, 2
        %v1771 = vsel %vm506, %v1769, %v1770
        %v1772 = vrot.slane %v1561, 2
        %v1773 = vrot.slane %v1565, 2
        %v1774 = vsel %vm506, %v1772, %v1773
        %v1775 = vrot.slane %v1563, 2
        %v1776 = vrot.slane %v1567, 2
        %v1777 = vsel %vm506, %v1775, %v1776
        %v1778 = vrot.slane %v1571, 2
        %v1779 = vrot.slane %v1575, 2
        %v1780 = vsel %vm506, %v1778, %v1779
        %v1781 = vrot.slane %v1573, 2
        %v1782 = vrot.slane %v1577, 2
        %v1783 = vsel %vm506, %v1781, %v1782
        %v1784 = vrot.slane %v1581, 2
        %v1785 = vrot.slane %v1585, 2
        %v1786 = vsel %vm506, %v1784, %v1785
        %v1787 = vrot.slane %v1583, 2
        %v1788 = vrot.slane %v1587, 2
        %v1789 = vsel %vm506, %v1787, %v1788
        %v1790 = vrot.slane %v1591, 2
        %v1791 = vrot.slane %v1595, 2
        %v1792 = vsel %vm506, %v1790, %v1791
        %v1793 = vrot.slane %v1593, 2
        %v1794 = vrot.slane %v1597, 2
        %v1795 = vsel %vm506, %v1793, %v1794
        %v1796 = vrot.slane %v1601, 2
        %v1797 = vrot.slane %v1605, 2
        %v1798 = vsel %vm506, %v1796, %v1797
        %v1799 = vrot.slane %v1603, 2
        %v1800 = vrot.slane %v1607, 2
        %v1801 = vsel %vm506, %v1799, %v1800
        %v1802 = vrot.slane %v1611, 2
        %v1803 = vrot.slane %v1615, 2
        %v1804 = vsel %vm506, %v1802, %v1803
        %v1805 = vrot.slane %v1613, 2
        %v1806 = vrot.slane %v1617, 2
        %v1807 = vsel %vm506, %v1805, %v1806
        %v1808 = vrot.slane %v1621, 2
        %v1809 = vrot.slane %v1625, 2
        %v1810 = vsel %vm506, %v1808, %v1809
        %v1811 = vrot.slane %v1623, 2
        %v1812 = vrot.slane %v1627, 2
        %v1813 = vsel %vm506, %v1811, %v1812
        %1814 = vrot.lane.b32.xlu0 %v1768, 32
        %v1815 = vpop.permute.xlu0 %1814
        %1816 = vrot.lane.b32.xlu0 %v1771, 32
        %v1817 = vpop.permute.xlu0 %1816
        %1818 = vrot.lane.b32.xlu0 %v1774, 32
        %v1819 = vpop.permute.xlu0 %1818
        %1820 = vrot.lane.b32.xlu0 %v1777, 32
        %v1821 = vpop.permute.xlu0 %1820
        %1822 = vrot.lane.b32.xlu0 %v1780, 32
        %v1823 = vpop.permute.xlu0 %1822
        %1824 = vrot.lane.b32.xlu0 %v1783, 32
        %v1825 = vpop.permute.xlu0 %1824
        %1826 = vrot.lane.b32.xlu0 %v1786, 32
        %v1827 = vpop.permute.xlu0 %1826
        %1828 = vrot.lane.b32.xlu0 %v1789, 32
        %v1829 = vpop.permute.xlu0 %1828
        %1830 = vrot.lane.b32.xlu0 %v1792, 32
        %v1831 = vpop.permute.xlu0 %1830
        %1832 = vrot.lane.b32.xlu0 %v1795, 32
        %v1833 = vpop.permute.xlu0 %1832
        %1834 = vrot.lane.b32.xlu0 %v1798, 32
        %v1835 = vpop.permute.xlu0 %1834
        %1836 = vrot.lane.b32.xlu0 %v1801, 32
        %v1837 = vpop.permute.xlu0 %1836
        %1838 = vrot.lane.b32.xlu0 %v1804, 32
        %v1839 = vpop.permute.xlu0 %1838
        %1840 = vrot.lane.b32.xlu0 %v1807, 32
        %v1841 = vpop.permute.xlu0 %1840
        %1842 = vrot.lane.b32.xlu0 %v1810, 32
        %v1843 = vpop.permute.xlu0 %1842
        %1844 = vrot.lane.b32.xlu0 %v1813, 32
        %v1845 = vpop.permute.xlu0 %1844
        %vm1846 = vcmask 261120
        %v1847 = vsel %vm1846, %v1815, %v1817
        %v1848 = vsel %vm1846, %v1819, %v1821
        %v1849 = vsel %vm1846, %v1823, %v1825
        %v1850 = vsel %vm1846, %v1827, %v1829
        %v1851 = vsel %vm1846, %v1831, %v1833
        %v1852 = vsel %vm1846, %v1835, %v1837
        %v1853 = vsel %vm1846, %v1839, %v1841
        %v1854 = vsel %vm1846, %v1843, %v1845
        %v1871 = vrot.slane %v1551, 3
        %v1872 = vrot.slane %v1555, 3
        %v1873 = vsel %vm635, %v1871, %v1872
        %v1874 = vrot.slane %v1553, 3
        %v1875 = vrot.slane %v1557, 3
        %v1876 = vsel %vm635, %v1874, %v1875
        %v1877 = vrot.slane %v1561, 3
        %v1878 = vrot.slane %v1565, 3
        %v1879 = vsel %vm635, %v1877, %v1878
        %v1880 = vrot.slane %v1563, 3
        %v1881 = vrot.slane %v1567, 3
        %v1882 = vsel %vm635, %v1880, %v1881
        %v1883 = vrot.slane %v1571, 3
        %v1884 = vrot.slane %v1575, 3
        %v1885 = vsel %vm635, %v1883, %v1884
        %v1886 = vrot.slane %v1573, 3
        %v1887 = vrot.slane %v1577, 3
        %v1888 = vsel %vm635, %v1886, %v1887
        %v1889 = vrot.slane %v1581, 3
        %v1890 = vrot.slane %v1585, 3
        %v1891 = vsel %vm635, %v1889, %v1890
        %v1892 = vrot.slane %v1583, 3
        %v1893 = vrot.slane %v1587, 3
        %v1894 = vsel %vm635, %v1892, %v1893
        %v1895 = vrot.slane %v1591, 3
        %v1896 = vrot.slane %v1595, 3
        %v1897 = vsel %vm635, %v1895, %v1896
        %v1898 = vrot.slane %v1593, 3
        %v1899 = vrot.slane %v1597, 3
        %v1900 = vsel %vm635, %v1898, %v1899
        %v1901 = vrot.slane %v1601, 3
        %v1902 = vrot.slane %v1605, 3
        %v1903 = vsel %vm635, %v1901, %v1902
        %v1904 = vrot.slane %v1603, 3
        %v1905 = vrot.slane %v1607, 3
        %v1906 = vsel %vm635, %v1904, %v1905
        %v1907 = vrot.slane %v1611, 3
        %v1908 = vrot.slane %v1615, 3
        %v1909 = vsel %vm635, %v1907, %v1908
        %v1910 = vrot.slane %v1613, 3
        %v1911 = vrot.slane %v1617, 3
        %v1912 = vsel %vm635, %v1910, %v1911
        %v1913 = vrot.slane %v1621, 3
        %v1914 = vrot.slane %v1625, 3
        %v1915 = vsel %vm635, %v1913, %v1914
        %v1916 = vrot.slane %v1623, 3
        %v1917 = vrot.slane %v1627, 3
        %v1918 = vsel %vm635, %v1916, %v1917
        %1919 = vrot.lane.b32.xlu0 %v1873, 48
        %v1920 = vpop.permute.xlu0 %1919
        %1921 = vrot.lane.b32.xlu0 %v1876, 48
        %v1922 = vpop.permute.xlu0 %1921
        %1923 = vrot.lane.b32.xlu0 %v1879, 48
        %v1924 = vpop.permute.xlu0 %1923
        %1925 = vrot.lane.b32.xlu0 %v1882, 48
        %v1926 = vpop.permute.xlu0 %1925
        %1927 = vrot.lane.b32.xlu0 %v1885, 48
        %v1928 = vpop.permute.xlu0 %1927
        %1929 = vrot.lane.b32.xlu0 %v1888, 48
        %v1930 = vpop.permute.xlu0 %1929
        %1931 = vrot.lane.b32.xlu0 %v1891, 48
        %v1932 = vpop.permute.xlu0 %1931
        %1933 = vrot.lane.b32.xlu0 %v1894, 48
        %v1934 = vpop.permute.xlu0 %1933
        %1935 = vrot.lane.b32.xlu0 %v1897, 48
        %v1936 = vpop.permute.xlu0 %1935
        %1937 = vrot.lane.b32.xlu0 %v1900, 48
        %v1938 = vpop.permute.xlu0 %1937
        %1939 = vrot.lane.b32.xlu0 %v1903, 48
        %v1940 = vpop.permute.xlu0 %1939
        %1941 = vrot.lane.b32.xlu0 %v1906, 48
        %v1942 = vpop.permute.xlu0 %1941
        %1943 = vrot.lane.b32.xlu0 %v1909, 48
        %v1944 = vpop.permute.xlu0 %1943
        %1945 = vrot.lane.b32.xlu0 %v1912, 48
        %v1946 = vpop.permute.xlu0 %1945
        %1947 = vrot.lane.b32.xlu0 %v1915, 48
        %v1948 = vpop.permute.xlu0 %1947
        %1949 = vrot.lane.b32.xlu0 %v1918, 48
        %v1950 = vpop.permute.xlu0 %1949
        %vm1951 = vcmask 392192
        %v1952 = vsel %vm1951, %v1920, %v1922
        %v1953 = vsel %vm1951, %v1924, %v1926
        %v1954 = vsel %vm1951, %v1928, %v1930
        %v1955 = vsel %vm1951, %v1932, %v1934
        %v1956 = vsel %vm1951, %v1936, %v1938
        %v1957 = vsel %vm1951, %v1940, %v1942
        %v1958 = vsel %vm1951, %v1944, %v1946
        %v1959 = vsel %vm1951, %v1948, %v1950
        %v1976 = vrot.slane %v1551, 4
        %v1977 = vrot.slane %v1555, 4
        %v1978 = vsel %vm764, %v1976, %v1977
        %v1979 = vrot.slane %v1553, 4
        %v1980 = vrot.slane %v1557, 4
        %v1981 = vsel %vm764, %v1979, %v1980
        %v1982 = vrot.slane %v1561, 4
        %v1983 = vrot.slane %v1565, 4
        %v1984 = vsel %vm764, %v1982, %v1983
        %v1985 = vrot.slane %v1563, 4
        %v1986 = vrot.slane %v1567, 4
        %v1987 = vsel %vm764, %v1985, %v1986
        %v1988 = vrot.slane %v1571, 4
        %v1989 = vrot.slane %v1575, 4
        %v1990 = vsel %vm764, %v1988, %v1989
        %v1991 = vrot.slane %v1573, 4
        %v1992 = vrot.slane %v1577, 4
        %v1993 = vsel %vm764, %v1991, %v1992
        %v1994 = vrot.slane %v1581, 4
        %v1995 = vrot.slane %v1585, 4
        %v1996 = vsel %vm764, %v1994, %v1995
        %v1997 = vrot.slane %v1583, 4
        %v1998 = vrot.slane %v1587, 4
        %v1999 = vsel %vm764, %v1997, %v1998
        %v2000 = vrot.slane %v1591, 4
        %v2001 = vrot.slane %v1595, 4
        %v2002 = vsel %vm764, %v2000, %v2001
        %v2003 = vrot.slane %v1593, 4
        %v2004 = vrot.slane %v1597, 4
        %v2005 = vsel %vm764, %v2003, %v2004
        %v2006 = vrot.slane %v1601, 4
        %v2007 = vrot.slane %v1605, 4
        %v2008 = vsel %vm764, %v2006, %v2007
        %v2009 = vrot.slane %v1603, 4
        %v2010 = vrot.slane %v1607, 4
        %v2011 = vsel %vm764, %v2009, %v2010
        %v2012 = vrot.slane %v1611, 4
        %v2013 = vrot.slane %v1615, 4
        %v2014 = vsel %vm764, %v2012, %v2013
        %v2015 = vrot.slane %v1613, 4
        %v2016 = vrot.slane %v1617, 4
        %v2017 = vsel %vm764, %v2015, %v2016
        %v2018 = vrot.slane %v1621, 4
        %v2019 = vrot.slane %v1625, 4
        %v2020 = vsel %vm764, %v2018, %v2019
        %v2021 = vrot.slane %v1623, 4
        %v2022 = vrot.slane %v1627, 4
        %v2023 = vsel %vm764, %v2021, %v2022
        %2024 = vrot.lane.b32.xlu0 %v1978, 64
        %v2025 = vpop.permute.xlu0 %2024
        %2026 = vrot.lane.b32.xlu0 %v1981, 64
        %v2027 = vpop.permute.xlu0 %2026
        %2028 = vrot.lane.b32.xlu0 %v1984, 64
        %v2029 = vpop.permute.xlu0 %2028
        %2030 = vrot.lane.b32.xlu0 %v1987, 64
        %v2031 = vpop.permute.xlu0 %2030
        %2032 = vrot.lane.b32.xlu0 %v1990, 64
        %v2033 = vpop.permute.xlu0 %2032
        %2034 = vrot.lane.b32.xlu0 %v1993, 64
        %v2035 = vpop.permute.xlu0 %2034
        %2036 = vrot.lane.b32.xlu0 %v1996, 64
        %v2037 = vpop.permute.xlu0 %2036
        %2038 = vrot.lane.b32.xlu0 %v1999, 64
        %v2039 = vpop.permute.xlu0 %2038
        %2040 = vrot.lane.b32.xlu0 %v2002, 64
        %v2041 = vpop.permute.xlu0 %2040
        %2042 = vrot.lane.b32.xlu0 %v2005, 64
        %v2043 = vpop.permute.xlu0 %2042
        %2044 = vrot.lane.b32.xlu0 %v2008, 64
        %v2045 = vpop.permute.xlu0 %2044
        %2046 = vrot.lane.b32.xlu0 %v2011, 64
        %v2047 = vpop.permute.xlu0 %2046
        %2048 = vrot.lane.b32.xlu0 %v2014, 64
        %v2049 = vpop.permute.xlu0 %2048
        %2050 = vrot.lane.b32.xlu0 %v2017, 64
        %v2051 = vpop.permute.xlu0 %2050
        %2052 = vrot.lane.b32.xlu0 %v2020, 64
        %v2053 = vpop.permute.xlu0 %2052
        %2054 = vrot.lane.b32.xlu0 %v2023, 64
        %v2055 = vpop.permute.xlu0 %2054
        %v2056 = vsel %vm1491, %v2025, %v2027
        %v2057 = vsel %vm1491, %v2029, %v2031
        %v2058 = vsel %vm1491, %v2033, %v2035
        %v2059 = vsel %vm1491, %v2037, %v2039
        %v2060 = vsel %vm1491, %v2041, %v2043
        %v2061 = vsel %vm1491, %v2045, %v2047
        %v2062 = vsel %vm1491, %v2049, %v2051
        %v2063 = vsel %vm1491, %v2053, %v2055
        %v2080 = vsel %vm1741, %v1553, %v1710
        %v2081 = vsel %vm1741, %v1563, %v1714
        %v2082 = vsel %vm1741, %v1573, %v1718
        %v2083 = vsel %vm1741, %v1583, %v1722
        %v2084 = vsel %vm1741, %v1593, %v1726
        %v2085 = vsel %vm1741, %v1603, %v1730
        %v2086 = vsel %vm1741, %v1613, %v1734
        %v2087 = vsel %vm1741, %v1623, %v1738
        %v2088 = vsel %vm1846, %v1742, %v1815
        %v2089 = vsel %vm1846, %v1743, %v1819
        %v2090 = vsel %vm1846, %v1744, %v1823
        %v2091 = vsel %vm1846, %v1745, %v1827
        %v2092 = vsel %vm1846, %v1746, %v1831
        %v2093 = vsel %vm1846, %v1747, %v1835
        %v2094 = vsel %vm1846, %v1748, %v1839
        %v2095 = vsel %vm1846, %v1749, %v1843
        %v2096 = vsel %vm1951, %v1847, %v1920
        %v2097 = vsel %vm1951, %v1848, %v1924
        %v2098 = vsel %vm1951, %v1849, %v1928
        %v2099 = vsel %vm1951, %v1850, %v1932
        %v2100 = vsel %vm1951, %v1851, %v1936
        %v2101 = vsel %vm1951, %v1852, %v1940
        %v2102 = vsel %vm1951, %v1853, %v1944
        %v2103 = vsel %vm1951, %v1854, %v1948
        %v2104 = vsel %vm1491, %v1952, %v2025
        %v2105 = vsel %vm1491, %v1953, %v2029
        %v2106 = vsel %vm1491, %v1954, %v2033
        %v2107 = vsel %vm1491, %v1955, %v2037
        %v2108 = vsel %vm1491, %v1956, %v2041
        %v2109 = vsel %vm1491, %v1957, %v2045
        %v2110 = vsel %vm1491, %v1958, %v2049
        %v2111 = vsel %vm1491, %v1959, %v2053
        %v2112 = vpack.c.bf16 %v1561, %v1551
        %v2113 = vpack.c.bf16 %v2081, %v2080
        %v2114 = vpack.c.bf16 %v2089, %v2088
        %v2115 = vpack.c.bf16 %v2097, %v2096
        %v2116 = vpack.c.bf16 %v2105, %v2104
        %v2117 = vpack.c.bf16 %v2057, %v2056
        %v2118 = vpack.c.bf16 %v1581, %v1571
        %v2119 = vpack.c.bf16 %v2083, %v2082
        %v2120 = vpack.c.bf16 %v2091, %v2090
        %v2121 = vpack.c.bf16 %v2099, %v2098
        %v2122 = vpack.c.bf16 %v2107, %v2106
        %v2123 = vpack.c.bf16 %v2059, %v2058
        %v2124 = vpack.c.bf16 %v1601, %v1591
        %v2125 = vpack.c.bf16 %v2085, %v2084
        %v2126 = vpack.c.bf16 %v2093, %v2092
        %v2127 = vpack.c.bf16 %v2101, %v2100
        %v2128 = vpack.c.bf16 %v2109, %v2108
        %v2129 = vpack.c.bf16 %v2061, %v2060
        %v2130 = vpack.c.bf16 %v1621, %v1611
        %v2131 = vpack.c.bf16 %v2087, %v2086
        %v2132 = vpack.c.bf16 %v2095, %v2094
        %v2133 = vpack.c.bf16 %v2103, %v2102
        %v2134 = vpack.c.bf16 %v2111, %v2110
        %v2135 = vpack.c.bf16 %v2063, %v2062
        %v2136 = vld [vmem:[%s3] sm:$0xf]
        %v2137 = vld [vmem:[%s3 + $0x4] sm:$0xf]
        %v2138 = vld [vmem:[%s3 + $0x8] sm:$0xf]
        %v2139 = vld [vmem:[%s3 + $0xc] sm:$0xf]
        %v2140 = vld [vmem:[%s3 + $0x10] sm:$0xf]
        %v2141 = vld [vmem:[%s3 + $0x14] sm:$0xf]
        %v2142 = vld [vmem:[%s3 + $0x18] sm:$0xf]
        %v2143 = vld [vmem:[%s3 + $0x1c] sm:$0xf]
        %v2144 = vld [vmem:[%s3 + $0x20] sm:$0xf]
        %v2145 = vld [vmem:[%s3 + $0x24] sm:$0xf]
        %v2146 = vld [vmem:[%s3 + $0x28] sm:$0xf]
        %v2147 = vld [vmem:[%s3 + $0x2c] sm:$0xf]
        %v2148 = vld [vmem:[%s3 + $0x30] sm:$0xf]
        %v2149 = vld [vmem:[%s3 + $0x34] sm:$0xf]
        %v2150 = vld [vmem:[%s3 + $0x38] sm:$0xf]
        %v2151 = vld [vmem:[%s3 + $0x3c] sm:$0xf]
        %v2152 = vld [vmem:[%s3 + $0x40] sm:$0xf]
        %v2153 = vld [vmem:[%s3 + $0x44] sm:$0xf]
        %v2154 = vld [vmem:[%s3 + $0x48] sm:$0xf]
        %v2155 = vld [vmem:[%s3 + $0x4c] sm:$0xf]
        %v2156 = vld [vmem:[%s3 + $0x50] sm:$0xf]
        %v2157 = vld [vmem:[%s3 + $0x54] sm:$0xf]
        %v2158 = vld [vmem:[%s3 + $0x58] sm:$0xf]
        %v2159 = vld [vmem:[%s3 + $0x5c] sm:$0xf]
        %v2160 = vld [vmem:[%s3 + $0x60] sm:$0xf]
        %v2161 = vld [vmem:[%s3 + $0x64] sm:$0xf]
        %v2162 = vld [vmem:[%s3 + $0x68] sm:$0xf]
        %v2163 = vld [vmem:[%s3 + $0x6c] sm:$0xf]
        %v2164 = vld [vmem:[%s3 + $0x70] sm:$0xf]
        %v2165 = vld [vmem:[%s3 + $0x74] sm:$0xf]
        %v2166 = vld [vmem:[%s3 + $0x78] sm:$0xf]
        %v2167 = vld [vmem:[%s3 + $0x7c] sm:$0xf]
        %v2168 = vld [vmem:[%s3 + $0x80] sm:$0xf]
        %v2169 = vld [vmem:[%s3 + $0x84] sm:$0xf]
        %v2170 = vld [vmem:[%s3 + $0x88] sm:$0xf]
        %v2171 = vld [vmem:[%s3 + $0x8c] sm:$0xf]
        %v2172 = vld [vmem:[%s3 + $0x90] sm:$0xf]
        %v2173 = vld [vmem:[%s3 + $0x94] sm:$0xf]
        %v2174 = vld [vmem:[%s3 + $0x98] sm:$0xf]
        %v2175 = vld [vmem:[%s3 + $0x9c] sm:$0xf]
        %v2176 = vld [vmem:[%s3 + $0xa0] sm:$0xf]
        %v2177 = vld [vmem:[%s3 + $0xa4] sm:$0xf]
        %v2178 = vld [vmem:[%s3 + $0xa8] sm:$0xf]
        %v2179 = vld [vmem:[%s3 + $0xac] sm:$0xf]
        %v2180 = vld [vmem:[%s3 + $0xb0] sm:$0xf]
        %v2181 = vld [vmem:[%s3 + $0xb4] sm:$0xf]
        %v2182 = vld [vmem:[%s3 + $0xb8] sm:$0xf]
        %v2183 = vld [vmem:[%s3 + $0xbc] sm:$0xf]
        %v2184 = vld [vmem:[%s3 + $0xc0] sm:$0xf]
        %v2185 = vld [vmem:[%s3 + $0xc4] sm:$0xf]
        %v2186 = vld [vmem:[%s3 + $0xc8] sm:$0xf]
        %v2187 = vld [vmem:[%s3 + $0xcc] sm:$0xf]
        %v2188 = vld [vmem:[%s3 + $0xd0] sm:$0xf]
        %v2189 = vld [vmem:[%s3 + $0xd4] sm:$0xf]
        %v2190 = vld [vmem:[%s3 + $0xd8] sm:$0xf]
        %v2191 = vld [vmem:[%s3 + $0xdc] sm:$0xf]
        %v2192 = vld [vmem:[%s3 + $0xe0] sm:$0xf]
        %v2193 = vld [vmem:[%s3 + $0xe4] sm:$0xf]
        %v2194 = vld [vmem:[%s3 + $0xe8] sm:$0xf]
        %v2195 = vld [vmem:[%s3 + $0xec] sm:$0xf]
        %v2196 = vld [vmem:[%s3 + $0xf0] sm:$0xf]
        %v2197 = vld [vmem:[%s3 + $0xf4] sm:$0xf]
        %v2198 = vld [vmem:[%s3 + $0xf8] sm:$0xf]
        %v2199 = vld [vmem:[%s3 + $0xfc] sm:$0xf]
        %v2200 = vld [vmem:[%s3 + $0x100] sm:$0xf]
        %v2201 = vld [vmem:[%s3 + $0x104] sm:$0xf]
        %v2202 = vld [vmem:[%s3 + $0x108] sm:$0xf]
        %v2203 = vld [vmem:[%s3 + $0x10c] sm:$0xf]
        %v2204 = vld [vmem:[%s3 + $0x110] sm:$0xf]
        %v2205 = vld [vmem:[%s3 + $0x114] sm:$0xf]
        %v2206 = vld [vmem:[%s3 + $0x118] sm:$0xf]
        %v2207 = vld [vmem:[%s3 + $0x11c] sm:$0xf]
        %v2208 = vld [vmem:[%s3 + $0x120] sm:$0xf]
        %v2209 = vld [vmem:[%s3 + $0x124] sm:$0xf]
        %v2210 = vld [vmem:[%s3 + $0x128] sm:$0xf]
        %v2211 = vld [vmem:[%s3 + $0x12c] sm:$0xf]
        %v2212 = vld [vmem:[%s3 + $0x130] sm:$0xf]
        %v2213 = vld [vmem:[%s3 + $0x134] sm:$0xf]
        %v2214 = vld [vmem:[%s3 + $0x138] sm:$0xf]
        %v2215 = vld [vmem:[%s3 + $0x13c] sm:$0xf]
        %v2216 = vld [vmem:[%s3 + $0x140] sm:$0xf]
        %v2217 = vld [vmem:[%s3 + $0x144] sm:$0xf]
        %v2218 = vld [vmem:[%s3 + $0x148] sm:$0xf]
        %v2219 = vld [vmem:[%s3 + $0x14c] sm:$0xf]
        %v2220 = vld [vmem:[%s3 + $0x150] sm:$0xf]
        %v2221 = vld [vmem:[%s3 + $0x154] sm:$0xf]
        %v2222 = vld [vmem:[%s3 + $0x158] sm:$0xf]
        %v2223 = vld [vmem:[%s3 + $0x15c] sm:$0xf]
        %v2224 = vld [vmem:[%s3 + $0x160] sm:$0xf]
        %v2225 = vld [vmem:[%s3 + $0x164] sm:$0xf]
        %v2226 = vld [vmem:[%s6 + $0x1] sm:$0x1]
        %v2227 = vlaneseq
        %v2228 = vshrl.u32 %v2227, 7
        %v2229 = vsub.s32 0, %v2228
        %v2230 = vrot.slane %v2226, %v2229
        %v2321 = vunpack.c.l.b16 %v2136
        %v2322 = vunpack.c.l.b16 %v2137
        %v2323 = vunpack.c.l.b16 %v2138
        %v2324 = vunpack.c.l.b16 %v2139
        %v2325 = vunpack.c.l.b16 %v2140
        %v2326 = vunpack.c.l.b16 %v2141
        %v2327 = vunpack.c.l.b16 %v2142
        %v2328 = vunpack.c.l.b16 %v2143
        %v2329 = vunpack.c.l.b16 %v2144
        %v2330 = vunpack.c.l.b16 %v2145
        %v2331 = vunpack.c.l.b16 %v2146
        %v2332 = vunpack.c.l.b16 %v2147
        %v2333 = vunpack.c.l.b16 %v2148
        %v2334 = vunpack.c.l.b16 %v2149
        %v2335 = vunpack.c.l.b16 %v2150
        %v2336 = vunpack.c.l.b16 %v2151
        %v2337 = vunpack.c.l.b16 %v2152
        %v2338 = vunpack.c.l.b16 %v2153
        %v2339 = vunpack.c.l.b16 %v2154
        %v2340 = vunpack.c.l.b16 %v2155
        %v2341 = vunpack.c.l.b16 %v2156
        %v2342 = vunpack.c.l.b16 %v2157
        %v2343 = vunpack.c.l.b16 %v2158
        %v2344 = vunpack.c.l.b16 %v2159
        %v2345 = vunpack.c.l.b16 %v2160
        %v2346 = vunpack.c.l.b16 %v2161
        %v2347 = vunpack.c.l.b16 %v2162
        %v2348 = vunpack.c.l.b16 %v2163
        %v2349 = vunpack.c.l.b16 %v2164
        %v2350 = vunpack.c.l.b16 %v2165
        %v2351 = vunpack.c.l.b16 %v2166
        %v2352 = vunpack.c.l.b16 %v2167
        %v2353 = vunpack.c.l.b16 %v2168
        %v2354 = vunpack.c.l.b16 %v2169
        %v2355 = vunpack.c.l.b16 %v2170
        %v2356 = vunpack.c.l.b16 %v2171
        %v2357 = vunpack.c.l.b16 %v2172
        %v2358 = vunpack.c.l.b16 %v2173
        %v2359 = vunpack.c.l.b16 %v2174
        %v2360 = vunpack.c.l.b16 %v2175
        %v2361 = vunpack.c.l.b16 %v2176
        %v2362 = vunpack.c.l.b16 %v2177
        %v2363 = vunpack.c.l.b16 %v2178
        %v2364 = vunpack.c.l.b16 %v2179
        %v2365 = vunpack.c.l.b16 %v2180
        %v2366 = vunpack.c.l.b16 %v2181
        %v2367 = vunpack.c.l.b16 %v2182
        %v2368 = vunpack.c.l.b16 %v2183
        %v2369 = vunpack.c.l.b16 %v2184
        %v2370 = vunpack.c.l.b16 %v2185
        %v2371 = vunpack.c.l.b16 %v2186
        %v2372 = vunpack.c.l.b16 %v2187
        %v2373 = vunpack.c.l.b16 %v2188
        %v2374 = vunpack.c.l.b16 %v2189
        %v2375 = vunpack.c.l.b16 %v2190
        %v2376 = vunpack.c.l.b16 %v2191
        %v2377 = vunpack.c.l.b16 %v2192
        %v2378 = vunpack.c.l.b16 %v2193
        %v2379 = vunpack.c.l.b16 %v2194
        %v2380 = vunpack.c.l.b16 %v2195
        %v2381 = vunpack.c.l.b16 %v2196
        %v2382 = vunpack.c.l.b16 %v2197
        %v2383 = vunpack.c.l.b16 %v2198
        %v2384 = vunpack.c.l.b16 %v2199
        %v2385 = vunpack.c.l.b16 %v2200
        %v2386 = vunpack.c.l.b16 %v2201
        %v2387 = vunpack.c.l.b16 %v2202
        %v2388 = vunpack.c.l.b16 %v2203
        %v2389 = vunpack.c.l.b16 %v2204
        %v2390 = vunpack.c.l.b16 %v2205
        %v2391 = vunpack.c.l.b16 %v2206
        %v2392 = vunpack.c.l.b16 %v2207
        %v2393 = vunpack.c.l.b16 %v2208
        %v2394 = vunpack.c.l.b16 %v2209
        %v2395 = vunpack.c.l.b16 %v2210
        %v2396 = vunpack.c.l.b16 %v2211
        %v2397 = vunpack.c.l.b16 %v2212
        %v2398 = vunpack.c.l.b16 %v2213
        %v2399 = vunpack.c.l.b16 %v2214
        %v2400 = vunpack.c.l.b16 %v2215
        %v2401 = vunpack.c.l.b16 %v2216
        %v2402 = vunpack.c.l.b16 %v2217
        %v2403 = vunpack.c.l.b16 %v2218
        %v2404 = vunpack.c.l.b16 %v2219
        %v2405 = vunpack.c.l.b16 %v2220
        %v2406 = vunpack.c.l.b16 %v2221
        %v2407 = vunpack.c.l.b16 %v2222
        %v2408 = vunpack.c.l.b16 %v2223
        %v2409 = vunpack.c.l.b16 %v2224
        %v2410 = vunpack.c.l.b16 %v2225
        %v2411 = vpack.c.b16 %v2322, %v2321
        %v2412 = vpack.c.b16 %v2324, %v2323
        %v2413 = vpack.c.b16 %v2326, %v2325
        %v2414 = vpack.c.b16 %v2328, %v2327
        %v2415 = vpack.c.b16 %v2330, %v2329
        %v2416 = vpack.c.b16 %v2332, %v2331
        %v2417 = vpack.c.b16 %v2334, %v2333
        %v2418 = vpack.c.b16 %v2336, %v2335
        %v2419 = vpack.c.b16 %v2338, %v2337
        %v2420 = vpack.c.b16 %v2340, %v2339
        %v2421 = vpack.c.b16 %v2342, %v2341
        %v2422 = vpack.c.b16 %v2344, %v2343
        %v2423 = vpack.c.b16 %v2346, %v2345
        %v2424 = vpack.c.b16 %v2348, %v2347
        %v2425 = vpack.c.b16 %v2350, %v2349
        %v2426 = vpack.c.b16 %v2352, %v2351
        %v2427 = vpack.c.b16 %v2354, %v2353
        %v2428 = vpack.c.b16 %v2356, %v2355
        %v2429 = vpack.c.b16 %v2358, %v2357
        %v2430 = vpack.c.b16 %v2360, %v2359
        %v2431 = vpack.c.b16 %v2362, %v2361
        %v2432 = vpack.c.b16 %v2364, %v2363
        %v2433 = vpack.c.b16 %v2366, %v2365
        %v2434 = vpack.c.b16 %v2368, %v2367
        %v2435 = vpack.c.b16 %v2370, %v2369
        %v2436 = vpack.c.b16 %v2372, %v2371
        %v2437 = vpack.c.b16 %v2374, %v2373
        %v2438 = vpack.c.b16 %v2376, %v2375
        %v2439 = vpack.c.b16 %v2378, %v2377
        %v2440 = vpack.c.b16 %v2380, %v2379
        %v2441 = vpack.c.b16 %v2382, %v2381
        %v2442 = vpack.c.b16 %v2384, %v2383
        %v2443 = vpack.c.b16 %v2386, %v2385
        %v2444 = vpack.c.b16 %v2388, %v2387
        %v2445 = vpack.c.b16 %v2390, %v2389
        %v2446 = vpack.c.b16 %v2392, %v2391
        %v2447 = vpack.c.b16 %v2394, %v2393
        %v2448 = vpack.c.b16 %v2396, %v2395
        %v2449 = vpack.c.b16 %v2398, %v2397
        %v2450 = vpack.c.b16 %v2400, %v2399
        %v2451 = vpack.c.b16 %v2402, %v2401
        %v2452 = vpack.c.b16 %v2404, %v2403
        %v2453 = vpack.c.b16 %v2406, %v2405
        %v2454 = vpack.c.b16 %v2408, %v2407
        %v2455 = vpack.c.b16 %v2410, %v2409
        %vm2501 = vcmask 654336
        %v2503 = vsel %vm2501, %v2117, 0
        %v2506 = vsel %vm2501, %v2123, 0
        %v2509 = vsel %vm2501, %v2129, 0
        %v2512 = vsel %vm2501, %v2135, 0
        %2514 = vmatprep.subr.bf16.mxu0 0
        %2515 = vmatpush1.bf16.msra.mxu0 %v2418
        %2516 = vmatprep.subr.bf16.mxu0 0
        %2517 = vmatpush1.bf16.msra.mxu0 %v2417
        %2518 = vmatprep.subr.bf16.mxu0 0
        %2519 = vmatpush1.bf16.msra.mxu0 %v2416
        %2520 = vmatprep.subr.bf16.mxu0 0
        %2521 = vmatpush1.bf16.msra.mxu0 %v2415
        %2522 = vmatprep.subr.bf16.mxu0 0
        %2523 = vmatpush1.bf16.msra.mxu0 %v2414
        %2524 = vmatprep.subr.bf16.mxu0 0
        %2525 = vmatpush1.bf16.msra.mxu0 %v2413
        %2526 = vmatprep.subr.bf16.mxu0 0
        %2527 = vmatpush1.bf16.msra.mxu0 %v2412
        %2528 = vmatprep.subr.bf16.mxu0 0
        %2529 = vmatpush1.bf16.msra.mxu0 %v2411
        %2530 = vmatprep.subr.bf16.mxu0 0
        %2531 = vmatpush2.bf16.msra.mxu0 %v2426
        %2532 = vmatprep.subr.bf16.mxu0 0
        %2533 = vmatpush2.bf16.msra.mxu0 %v2425
        %2534 = vmatprep.subr.bf16.mxu0 0
        %2535 = vmatpush2.bf16.msra.mxu0 %v2424
        %2536 = vmatprep.subr.bf16.mxu0 0
        %2537 = vmatpush2.bf16.msra.mxu0 %v2423
        %2538 = vmatprep.subr.bf16.mxu0 0
        %2539 = vmatpush2.bf16.msra.mxu0 %v2422
        %2540 = vmatprep.subr.bf16.mxu0 0
        %2541 = vmatpush2.bf16.msra.mxu0 %v2421
        %2542 = vmatprep.subr.bf16.mxu0 0
        %2543 = vmatpush2.bf16.msra.mxu0 %v2420
        %2544 = vmatprep.subr.bf16.mxu0 0
        %2545 = vmatpush2.bf16.msra.mxu0 %v2419
        %2546 = vmatprep.mubr.bf16.mxu0 %v2113
        %2547 = vmatmul.mubr.bf16.gmra.mxu0 %v2112
        %v2548 = vpop.f32.mrf.mxu0
        %v2549 = vadd.f32 %v2230, %v2548
        %v2550 = vpop.f32.mrf.mxu0
        %v2551 = vpop.f32.mrf.mxu0
        %v2552 = vadd.f32 %v2230, %v2551
        %v2553 = vpop.f32.mrf.mxu0
        %2554 = vmatprep.mubr.bf16.mxu0 %v2119
        %2555 = vmatmul.mubr.bf16.gmra.mxu0 %v2118
        %v2556 = vpop.f32.mrf.mxu0
        %v2557 = vadd.f32 %v2230, %v2556
        %v2558 = vpop.f32.mrf.mxu0
        %v2559 = vpop.f32.mrf.mxu0
        %v2560 = vadd.f32 %v2230, %v2559
        %v2561 = vpop.f32.mrf.mxu0
        %2562 = vmatprep.mubr.bf16.mxu0 %v2125
        %2563 = vmatmul.mubr.bf16.gmra.mxu0 %v2124
        %v2564 = vpop.f32.mrf.mxu0
        %v2565 = vadd.f32 %v2230, %v2564
        %v2566 = vpop.f32.mrf.mxu0
        %v2567 = vpop.f32.mrf.mxu0
        %v2568 = vadd.f32 %v2230, %v2567
        %v2569 = vpop.f32.mrf.mxu0
        %2570 = vmatprep.mubr.bf16.mxu0 %v2131
        %2571 = vmatmul.mubr.bf16.gmra.mxu0 %v2130
        %v2572 = vpop.f32.mrf.mxu0
        %v2573 = vadd.f32 %v2230, %v2572
        %v2574 = vpop.f32.mrf.mxu0
        %v2575 = vpop.f32.mrf.mxu0
        %v2576 = vadd.f32 %v2230, %v2575
        %v2577 = vpop.f32.mrf.mxu0
        %2578 = vdwg.mxu0
        %2579 = vmatprep.subr.bf16.mxu0 0
        %2580 = vmatpush1.bf16.msra.mxu0 %v2434
        %2581 = vmatprep.subr.bf16.mxu0 0
        %2582 = vmatpush1.bf16.msra.mxu0 %v2433
        %2583 = vmatprep.subr.bf16.mxu0 0
        %2584 = vmatpush1.bf16.msra.mxu0 %v2432
        %2585 = vmatprep.subr.bf16.mxu0 0
        %2586 = vmatpush1.bf16.msra.mxu0 %v2431
        %2587 = vmatprep.subr.bf16.mxu0 0
        %2588 = vmatpush1.bf16.msra.mxu0 %v2430
        %2589 = vmatprep.subr.bf16.mxu0 0
        %2590 = vmatpush1.bf16.msra.mxu0 %v2429
        %2591 = vmatprep.subr.bf16.mxu0 0
        %2592 = vmatpush1.bf16.msra.mxu0 %v2428
        %2593 = vmatprep.subr.bf16.mxu0 0
        %2594 = vmatpush1.bf16.msra.mxu0 %v2427
        %2595 = vmatprep.subr.bf16.mxu0 0
        %2596 = vmatpush2.bf16.msra.mxu0 %v2442
        %2597 = vmatprep.subr.bf16.mxu0 0
        %2598 = vmatpush2.bf16.msra.mxu0 %v2441
        %2599 = vmatprep.subr.bf16.mxu0 0
        %2600 = vmatpush2.bf16.msra.mxu0 %v2440
        %2601 = vmatprep.subr.bf16.mxu0 0
        %2602 = vmatpush2.bf16.msra.mxu0 %v2439
        %2603 = vmatprep.subr.bf16.mxu0 0
        %2604 = vmatpush2.bf16.msra.mxu0 %v2438
        %2605 = vmatprep.subr.bf16.mxu0 0
        %2606 = vmatpush2.bf16.msra.mxu0 %v2437
        %2607 = vmatprep.subr.bf16.mxu0 0
        %2608 = vmatpush2.bf16.msra.mxu0 %v2436
        %2609 = vmatprep.subr.bf16.mxu0 0
        %2610 = vmatpush2.bf16.msra.mxu0 %v2435
        %2611 = vmatprep.mubr.bf16.mxu0 %v2115
        %2612 = vmatmul.mubr.bf16.gmra.mxu0 %v2114
        %v2613 = vpop.f32.mrf.mxu0
        %v2614 = vadd.f32 %v2549, %v2613
        %v2615 = vpop.f32.mrf.mxu0
        %v2616 = vpop.f32.mrf.mxu0
        %v2617 = vadd.f32 %v2552, %v2616
        %v2618 = vpop.f32.mrf.mxu0
        %2619 = vmatprep.mubr.bf16.mxu0 %v2121
        %2620 = vmatmul.mubr.bf16.gmra.mxu0 %v2120
        %v2621 = vpop.f32.mrf.mxu0
        %v2622 = vadd.f32 %v2557, %v2621
        %v2623 = vpop.f32.mrf.mxu0
        %v2624 = vpop.f32.mrf.mxu0
        %v2625 = vadd.f32 %v2560, %v2624
        %v2626 = vpop.f32.mrf.mxu0
        %2627 = vmatprep.mubr.bf16.mxu0 %v2127
        %2628 = vmatmul.mubr.bf16.gmra.mxu0 %v2126
        %v2629 = vpop.f32.mrf.mxu0
        %v2630 = vadd.f32 %v2565, %v2629
        %v2631 = vpop.f32.mrf.mxu0
        %v2632 = vpop.f32.mrf.mxu0
        %v2633 = vadd.f32 %v2568, %v2632
        %v2634 = vpop.f32.mrf.mxu0
        %2635 = vmatprep.mubr.bf16.mxu0 %v2133
        %2636 = vmatmul.mubr.bf16.gmra.mxu0 %v2132
        %v2637 = vpop.f32.mrf.mxu0
        %v2638 = vadd.f32 %v2573, %v2637
        %v2639 = vpop.f32.mrf.mxu0
        %v2640 = vpop.f32.mrf.mxu0
        %v2641 = vadd.f32 %v2576, %v2640
        %v2642 = vpop.f32.mrf.mxu0
        %2643 = vdwg.mxu0
        %2644 = vmatprep.subr.bf16.mxu0 0
        %2645 = vmatpush1.bf16.msra.mxu0 %v2450
        %2646 = vmatprep.subr.bf16.mxu0 0
        %2647 = vmatpush1.bf16.msra.mxu0 %v2449
        %2648 = vmatprep.subr.bf16.mxu0 0
        %2649 = vmatpush1.bf16.msra.mxu0 %v2448
        %2650 = vmatprep.subr.bf16.mxu0 0
        %2651 = vmatpush1.bf16.msra.mxu0 %v2447
        %2652 = vmatprep.subr.bf16.mxu0 0
        %2653 = vmatpush1.bf16.msra.mxu0 %v2446
        %2654 = vmatprep.subr.bf16.mxu0 0
        %2655 = vmatpush1.bf16.msra.mxu0 %v2445
        %2656 = vmatprep.subr.bf16.mxu0 0
        %2657 = vmatpush1.bf16.msra.mxu0 %v2444
        %2658 = vmatprep.subr.bf16.mxu0 0
        %2659 = vmatpush1.bf16.msra.mxu0 %v2443
        %2660 = vmatprep.subr.bf16.mxu0 0
        %2661 = vmatpush2.bf16.msra.mxu0 0
        %2662 = vmatprep.subr.bf16.mxu0 0
        %2663 = vmatpush2.bf16.msra.mxu0 0
        %2664 = vmatprep.subr.bf16.mxu0 0
        %2665 = vmatpush2.bf16.msra.mxu0 0
        %2666 = vmatprep.subr.bf16.mxu0 0
        %2667 = vmatpush2.bf16.msra.mxu0 %v2455
        %2668 = vmatprep.subr.bf16.mxu0 0
        %2669 = vmatpush2.bf16.msra.mxu0 %v2454
        %2670 = vmatprep.subr.bf16.mxu0 0
        %2671 = vmatpush2.bf16.msra.mxu0 %v2453
        %2672 = vmatprep.subr.bf16.mxu0 0
        %2673 = vmatpush2.bf16.msra.mxu0 %v2452
        %2674 = vmatprep.subr.bf16.mxu0 0
        %2675 = vmatpush2.bf16.msra.mxu0 %v2451
        %2676 = vmatprep.mubr.bf16.mxu0 %v2503
        %2677 = vmatmul.mubr.bf16.gmra.mxu0 %v2116
        %v2678 = vpop.f32.mrf.mxu0
        %v2679 = vadd.f32 %v2614, %v2678
        %v2680 = vpop.f32.mrf.mxu0
        %v2681 = vpop.f32.mrf.mxu0
        %v2682 = vadd.f32 %v2617, %v2681
        %v2683 = vpop.f32.mrf.mxu0
        %2684 = vmatprep.mubr.bf16.mxu0 %v2506
        %2685 = vmatmul.mubr.bf16.gmra.mxu0 %v2122
        %v2686 = vpop.f32.mrf.mxu0
        %v2687 = vadd.f32 %v2622, %v2686
        %v2688 = vpop.f32.mrf.mxu0
        %v2689 = vpop.f32.mrf.mxu0
        %v2690 = vadd.f32 %v2625, %v2689
        %v2691 = vpop.f32.mrf.mxu0
        %2692 = vmatprep.mubr.bf16.mxu0 %v2509
        %2693 = vmatmul.mubr.bf16.gmra.mxu0 %v2128
        %v2694 = vpop.f32.mrf.mxu0
        %v2695 = vadd.f32 %v2630, %v2694
        %v2696 = vpop.f32.mrf.mxu0
        %v2697 = vpop.f32.mrf.mxu0
        %v2698 = vadd.f32 %v2633, %v2697
        %v2699 = vpop.f32.mrf.mxu0
        %2700 = vmatprep.mubr.bf16.mxu0 %v2512
        %2701 = vmatmul.mubr.bf16.gmra.mxu0 %v2134
        %v2702 = vpop.f32.mrf.mxu0
        %v2703 = vadd.f32 %v2638, %v2702
        %v2704 = vpop.f32.mrf.mxu0
        %v2705 = vpop.f32.mrf.mxu0
        %v2706 = vadd.f32 %v2641, %v2705
        %v2707 = vpop.f32.mrf.mxu0
        %2708 = vdwg.mxu0
        %v2709 = vmax.f32 %v2679, 0.0
        %v2710 = vmax.f32 %v2682, 0.0
        %v2711 = vmax.f32 %v2687, 0.0
        %v2712 = vmax.f32 %v2690, 0.0
        %v2713 = vmax.f32 %v2695, 0.0
        %v2714 = vmax.f32 %v2698, 0.0
        %v2715 = vmax.f32 %v2703, 0.0
        %v2716 = vmax.f32 %v2706, 0.0
        %v2725 = vrot.slane %v2710, 7
        %vm2726 = vcmask 1041409
        %v2727 = vsel %vm2726, %v2725, %v2709
        %v2728 = vrot.slane %v2711, 6
        %vm2729 = vcmask 1042434
        %v2730 = vsel %vm2729, %v2728, %v2727
        %v2731 = vrot.slane %v2712, 5
        %vm2732 = vcmask 1043459
        %v2733 = vsel %vm2732, %v2731, %v2730
        %v2734 = vrot.slane %v2713, 4
        %vm2735 = vcmask 1044484
        %v2736 = vsel %vm2735, %v2734, %v2733
        %v2737 = vrot.slane %v2714, 3
        %vm2738 = vcmask 1045509
        %v2739 = vsel %vm2738, %v2737, %v2736
        %v2740 = vrot.slane %v2715, 2
        %vm2741 = vcmask 1046534
        %v2742 = vsel %vm2741, %v2740, %v2739
        %v2743 = vrot.slane %v2716, 1
        %vm2744 = vcmask 1047559
        %v2745 = vsel %vm2744, %v2743, %v2742
        %v2747 = vrot.slane %v2709, 1
        %v2748 = vsel %vm2726, %v2710, %v2747
        %v2749 = vrot.slane %v2711, 7
        %v2750 = vsel %vm2729, %v2749, %v2748
        %v2751 = vrot.slane %v2712, 6
        %v2752 = vsel %vm2732, %v2751, %v2750
        %v2753 = vrot.slane %v2713, 5
        %v2754 = vsel %vm2735, %v2753, %v2752
        %v2755 = vrot.slane %v2714, 4
        %v2756 = vsel %vm2738, %v2755, %v2754
        %v2757 = vrot.slane %v2715, 3
        %v2758 = vsel %vm2741, %v2757, %v2756
        %v2759 = vrot.slane %v2716, 2
        %v2760 = vsel %vm2744, %v2759, %v2758
        %v2762 = vrot.slane %v2709, 2
        %v2763 = vrot.slane %v2710, 1
        %v2764 = vsel %vm2726, %v2763, %v2762
        %v2765 = vsel %vm2729, %v2711, %v2764
        %v2766 = vrot.slane %v2712, 7
        %v2767 = vsel %vm2732, %v2766, %v2765
        %v2768 = vrot.slane %v2713, 6
        %v2769 = vsel %vm2735, %v2768, %v2767
        %v2770 = vrot.slane %v2714, 5
        %v2771 = vsel %vm2738, %v2770, %v2769
        %v2772 = vrot.slane %v2715, 4
        %v2773 = vsel %vm2741, %v2772, %v2771
        %v2774 = vrot.slane %v2716, 3
        %v2775 = vsel %vm2744, %v2774, %v2773
        %v2777 = vrot.slane %v2709, 3
        %v2778 = vrot.slane %v2710, 2
        %v2779 = vsel %vm2726, %v2778, %v2777
        %v2780 = vrot.slane %v2711, 1
        %v2781 = vsel %vm2729, %v2780, %v2779
        %v2782 = vsel %vm2732, %v2712, %v2781
        %v2783 = vrot.slane %v2713, 7
        %v2784 = vsel %vm2735, %v2783, %v2782
        %v2785 = vrot.slane %v2714, 6
        %v2786 = vsel %vm2738, %v2785, %v2784
        %v2787 = vrot.slane %v2715, 5
        %v2788 = vsel %vm2741, %v2787, %v2786
        %v2789 = vrot.slane %v2716, 4
        %v2790 = vsel %vm2744, %v2789, %v2788
        %v2792 = vrot.slane %v2709, 4
        %v2793 = vrot.slane %v2710, 3
        %v2794 = vsel %vm2726, %v2793, %v2792
        %v2795 = vrot.slane %v2711, 2
        %v2796 = vsel %vm2729, %v2795, %v2794
        %v2797 = vrot.slane %v2712, 1
        %v2798 = vsel %vm2732, %v2797, %v2796
        %v2799 = vsel %vm2735, %v2713, %v2798
        %v2800 = vrot.slane %v2714, 7
        %v2801 = vsel %vm2738, %v2800, %v2799
        %v2802 = vrot.slane %v2715, 6
        %v2803 = vsel %vm2741, %v2802, %v2801
        %v2804 = vrot.slane %v2716, 5
        %v2805 = vsel %vm2744, %v2804, %v2803
        %v2807 = vrot.slane %v2709, 5
        %v2808 = vrot.slane %v2710, 4
        %v2809 = vsel %vm2726, %v2808, %v2807
        %v2810 = vrot.slane %v2711, 3
        %v2811 = vsel %vm2729, %v2810, %v2809
        %v2812 = vrot.slane %v2712, 2
        %v2813 = vsel %vm2732, %v2812, %v2811
        %v2814 = vrot.slane %v2713, 1
        %v2815 = vsel %vm2735, %v2814, %v2813
        %v2816 = vsel %vm2738, %v2714, %v2815
        %v2817 = vrot.slane %v2715, 7
        %v2818 = vsel %vm2741, %v2817, %v2816
        %v2819 = vrot.slane %v2716, 6
        %v2820 = vsel %vm2744, %v2819, %v2818
        %v2822 = vrot.slane %v2709, 6
        %v2823 = vrot.slane %v2710, 5
        %v2824 = vsel %vm2726, %v2823, %v2822
        %v2825 = vrot.slane %v2711, 4
        %v2826 = vsel %vm2729, %v2825, %v2824
        %v2827 = vrot.slane %v2712, 3
        %v2828 = vsel %vm2732, %v2827, %v2826
        %v2829 = vrot.slane %v2713, 2
        %v2830 = vsel %vm2735, %v2829, %v2828
        %v2831 = vrot.slane %v2714, 1
        %v2832 = vsel %vm2738, %v2831, %v2830
        %v2833 = vsel %vm2741, %v2715, %v2832
        %v2834 = vrot.slane %v2716, 7
        %v2835 = vsel %vm2744, %v2834, %v2833
        %v2837 = vrot.slane %v2709, 7
        %v2838 = vrot.slane %v2710, 6
        %v2839 = vsel %vm2726, %v2838, %v2837
        %v2840 = vrot.slane %v2711, 5
        %v2841 = vsel %vm2729, %v2840, %v2839
        %v2842 = vrot.slane %v2712, 4
        %v2843 = vsel %vm2732, %v2842, %v2841
        %v2844 = vrot.slane %v2713, 3
        %v2845 = vsel %vm2735, %v2844, %v2843
        %v2846 = vrot.slane %v2714, 2
        %v2847 = vsel %vm2738, %v2846, %v2845
        %v2848 = vrot.slane %v2715, 1
        %v2849 = vsel %vm2741, %v2848, %v2847
        %v2850 = vsel %vm2744, %v2716, %v2849
        %v2852 = vpack.c.bf16 %v2745, %v2745
        %v2853 = vpack.c.bf16 %v2760, %v2760
        %v2854 = vpack.c.bf16 %v2775, %v2775
        %v2855 = vpack.c.bf16 %v2790, %v2790
        %v2856 = vpack.c.bf16 %v2805, %v2805
        %v2857 = vpack.c.bf16 %v2820, %v2820
        %v2858 = vpack.c.bf16 %v2835, %v2835
        %v2859 = vpack.c.bf16 %v2850, %v2850
        %v2860 = vld [vmem:[%s4] sm:$0xf]
        %v2861 = vld [vmem:[%s4 + $0x4] sm:$0xf]
        %v2862 = vld [vmem:[%s4 + $0x8] sm:$0xf]
        %v2863 = vld [vmem:[%s4 + $0xc] sm:$0xf]
        %v2864 = vld [vmem:[%s4 + $0x10] sm:$0xf]
        %v2865 = vld [vmem:[%s4 + $0x14] sm:$0xf]
        %v2866 = vld [vmem:[%s4 + $0x18] sm:$0xf]
        %v2867 = vld [vmem:[%s4 + $0x1c] sm:$0xf]
        %v2868 = vld [vmem:[%s4 + $0x20] sm:$0xf]
        %v2869 = vld [vmem:[%s4 + $0x24] sm:$0xf]
        %v2870 = vld [vmem:[%s4 + $0x28] sm:$0xf]
        %v2871 = vld [vmem:[%s4 + $0x2c] sm:$0xf]
        %v2872 = vld [vmem:[%s4 + $0x30] sm:$0xf]
        %v2873 = vld [vmem:[%s4 + $0x34] sm:$0xf]
        %v2874 = vld [vmem:[%s4 + $0x38] sm:$0xf]
        %v2875 = vld [vmem:[%s4 + $0x3c] sm:$0xf]
        %v2876 = vld [vmem:[%s4 + $0x40] sm:$0xf]
        %v2877 = vld [vmem:[%s4 + $0x44] sm:$0xf]
        %v2878 = vld [vmem:[%s4 + $0x48] sm:$0xf]
        %v2879 = vld [vmem:[%s4 + $0x4c] sm:$0xf]
        %v2880 = vld [vmem:[%s4 + $0x50] sm:$0xf]
        %v2881 = vld [vmem:[%s4 + $0x54] sm:$0xf]
        %v2882 = vld [vmem:[%s4 + $0x58] sm:$0xf]
        %v2883 = vld [vmem:[%s4 + $0x5c] sm:$0xf]
        %v2884 = vld [vmem:[%s4 + $0x60] sm:$0xf]
        %v2885 = vld [vmem:[%s4 + $0x64] sm:$0xf]
        %v2886 = vld [vmem:[%s4 + $0x68] sm:$0xf]
        %v2887 = vld [vmem:[%s4 + $0x6c] sm:$0xf]
        %v2888 = vld [vmem:[%s4 + $0x70] sm:$0xf]
        %v2889 = vld [vmem:[%s4 + $0x74] sm:$0xf]
        %v2890 = vld [vmem:[%s4 + $0x78] sm:$0xf]
        %v2891 = vld [vmem:[%s4 + $0x7c] sm:$0xf]
        %v2892 = vld [vmem:[%s4 + $0x80] sm:$0xf]
        %v2893 = vld [vmem:[%s4 + $0x84] sm:$0xf]
        %v2894 = vld [vmem:[%s4 + $0x88] sm:$0xf]
        %v2895 = vld [vmem:[%s4 + $0x8c] sm:$0xf]
        %v2896 = vld [vmem:[%s4 + $0x90] sm:$0xf]
        %v2897 = vld [vmem:[%s4 + $0x94] sm:$0xf]
        %v2898 = vld [vmem:[%s4 + $0x98] sm:$0xf]
        %v2899 = vld [vmem:[%s4 + $0x9c] sm:$0xf]
        %v2900 = vld [vmem:[%s4 + $0xa0] sm:$0xf]
        %v2901 = vld [vmem:[%s4 + $0xa4] sm:$0xf]
        %v2902 = vld [vmem:[%s4 + $0xa8] sm:$0xf]
        %v2903 = vld [vmem:[%s4 + $0xac] sm:$0xf]
        %v2904 = vld [vmem:[%s4 + $0xb0] sm:$0xf]
        %v2905 = vld [vmem:[%s4 + $0xb4] sm:$0xf]
        %v2906 = vld [vmem:[%s4 + $0xb8] sm:$0xf]
        %v2907 = vld [vmem:[%s4 + $0xbc] sm:$0xf]
        %v2908 = vld [vmem:[%s4 + $0xc0] sm:$0xf]
        %v2909 = vld [vmem:[%s4 + $0xc4] sm:$0xf]
        %v2910 = vld [vmem:[%s4 + $0xc8] sm:$0xf]
        %v2911 = vld [vmem:[%s4 + $0xcc] sm:$0xf]
        %v2912 = vld [vmem:[%s4 + $0xd0] sm:$0xf]
        %v2913 = vld [vmem:[%s4 + $0xd4] sm:$0xf]
        %v2914 = vld [vmem:[%s4 + $0xd8] sm:$0xf]
        %v2915 = vld [vmem:[%s4 + $0xdc] sm:$0xf]
        %v2916 = vld [vmem:[%s4 + $0xe0] sm:$0xf]
        %v2917 = vld [vmem:[%s4 + $0xe4] sm:$0xf]
        %v2918 = vld [vmem:[%s4 + $0xe8] sm:$0xf]
        %v2919 = vld [vmem:[%s4 + $0xec] sm:$0xf]
        %v2920 = vld [vmem:[%s4 + $0xf0] sm:$0xf]
        %v2921 = vld [vmem:[%s4 + $0xf4] sm:$0xf]
        %v2922 = vld [vmem:[%s4 + $0xf8] sm:$0xf]
        %v2923 = vld [vmem:[%s4 + $0xfc] sm:$0xf]
        %v2924 = vld [vmem:[%s4 + $0x100] sm:$0xf]
        %v2925 = vld [vmem:[%s4 + $0x104] sm:$0xf]
        %v2926 = vld [vmem:[%s4 + $0x108] sm:$0xf]
        %v2927 = vld [vmem:[%s4 + $0x10c] sm:$0xf]
        %v2928 = vld [vmem:[%s4 + $0x110] sm:$0xf]
        %v2929 = vld [vmem:[%s4 + $0x114] sm:$0xf]
        %v2930 = vld [vmem:[%s4 + $0x118] sm:$0xf]
        %v2931 = vld [vmem:[%s4 + $0x11c] sm:$0xf]
        %v2932 = vld [vmem:[%s4 + $0x120] sm:$0xf]
        %v2933 = vld [vmem:[%s4 + $0x124] sm:$0xf]
        %v2934 = vld [vmem:[%s4 + $0x128] sm:$0xf]
        %v2935 = vld [vmem:[%s4 + $0x12c] sm:$0xf]
        %v2936 = vld [vmem:[%s4 + $0x130] sm:$0xf]
        %v2937 = vld [vmem:[%s4 + $0x134] sm:$0xf]
        %v2938 = vld [vmem:[%s4 + $0x138] sm:$0xf]
        %v2939 = vld [vmem:[%s4 + $0x13c] sm:$0xf]
        %v2940 = vld [vmem:[%s4 + $0x140] sm:$0xf]
        %v2941 = vld [vmem:[%s4 + $0x144] sm:$0xf]
        %v2942 = vld [vmem:[%s4 + $0x148] sm:$0xf]
        %v2943 = vld [vmem:[%s4 + $0x14c] sm:$0xf]
        %v2944 = vld [vmem:[%s4 + $0x150] sm:$0xf]
        %v2945 = vld [vmem:[%s4 + $0x154] sm:$0xf]
        %v2946 = vld [vmem:[%s4 + $0x158] sm:$0xf]
        %v2947 = vld [vmem:[%s4 + $0x15c] sm:$0xf]
        %v2948 = vld [vmem:[%s4 + $0x160] sm:$0xf]
        %v2949 = vld [vmem:[%s4 + $0x164] sm:$0xf]
        %v2950 = vld [vmem:[%s4 + $0x168] sm:$0xf]
        %v2951 = vld [vmem:[%s4 + $0x16c] sm:$0xf]
        %v2952 = vld [vmem:[%s4 + $0x170] sm:$0xf]
        %v2953 = vld [vmem:[%s4 + $0x174] sm:$0xf]
        %v2954 = vld [vmem:[%s4 + $0x178] sm:$0xf]
        %v2955 = vld [vmem:[%s4 + $0x17c] sm:$0xf]
        %v2956 = vld [vmem:[%s4 + $0x180] sm:$0xf]
        %v2957 = vld [vmem:[%s4 + $0x184] sm:$0xf]
        %v2958 = vld [vmem:[%s4 + $0x188] sm:$0xf]
        %v2959 = vld [vmem:[%s4 + $0x18c] sm:$0xf]
        %v2960 = vld [vmem:[%s4 + $0x190] sm:$0xf]
        %v2961 = vld [vmem:[%s4 + $0x194] sm:$0xf]
        %v2962 = vld [vmem:[%s4 + $0x198] sm:$0xf]
        %v2963 = vld [vmem:[%s4 + $0x19c] sm:$0xf]
        %v2964 = vld [vmem:[%s4 + $0x1a0] sm:$0xf]
        %v2965 = vld [vmem:[%s4 + $0x1a4] sm:$0xf]
        %v2966 = vld [vmem:[%s4 + $0x1a8] sm:$0xf]
        %v2967 = vld [vmem:[%s4 + $0x1ac] sm:$0xf]
        %v2968 = vld [vmem:[%s4 + $0x1b0] sm:$0xf]
        %v2969 = vld [vmem:[%s4 + $0x1b4] sm:$0xf]
        %v2970 = vld [vmem:[%s4 + $0x1b8] sm:$0xf]
        %v2971 = vld [vmem:[%s4 + $0x1bc] sm:$0xf]
        %v2972 = vld [vmem:[%s4 + $0x1c0] sm:$0xf]
        %v2973 = vld [vmem:[%s4 + $0x1c4] sm:$0xf]
        %v2974 = vld [vmem:[%s4 + $0x1c8] sm:$0xf]
        %v2975 = vld [vmem:[%s4 + $0x1cc] sm:$0xf]
        %v2976 = vld [vmem:[%s4 + $0x1d0] sm:$0xf]
        %v2977 = vld [vmem:[%s4 + $0x1d4] sm:$0xf]
        %v2978 = vld [vmem:[%s4 + $0x1d8] sm:$0xf]
        %v2979 = vld [vmem:[%s4 + $0x1dc] sm:$0xf]
        %v2980 = vld [vmem:[%s4 + $0x1e0] sm:$0xf]
        %v2981 = vld [vmem:[%s4 + $0x1e4] sm:$0xf]
        %v2982 = vld [vmem:[%s4 + $0x1e8] sm:$0xf]
        %v2983 = vld [vmem:[%s4 + $0x1ec] sm:$0xf]
        %v2984 = vld [vmem:[%s4 + $0x1f0] sm:$0xf]
        %v2985 = vld [vmem:[%s4 + $0x1f4] sm:$0xf]
        %v2986 = vld [vmem:[%s4 + $0x1f8] sm:$0xf]
        %v2987 = vld [vmem:[%s4 + $0x1fc] sm:$0xf]
        %v2988 = vld [vmem:[%s6 + $0x2] sm:$0x1]
        %v2989 = vlaneseq
        %v2990 = vshrl.u32 %v2989, 7
        %v2991 = vsub.s32 0, %v2990
        %v2992 = vrot.slane %v2988, %v2991
        %v3121 = vunpack.c.l.b16 %v2860
        %v3122 = vunpack.c.l.b16 %v2861
        %v3123 = vunpack.c.l.b16 %v2862
        %v3124 = vunpack.c.l.b16 %v2863
        %v3125 = vunpack.c.l.b16 %v2864
        %v3126 = vunpack.c.l.b16 %v2865
        %v3127 = vunpack.c.l.b16 %v2866
        %v3128 = vunpack.c.l.b16 %v2867
        %v3129 = vunpack.c.l.b16 %v2868
        %v3130 = vunpack.c.l.b16 %v2869
        %v3131 = vunpack.c.l.b16 %v2870
        %v3132 = vunpack.c.l.b16 %v2871
        %v3133 = vunpack.c.l.b16 %v2872
        %v3134 = vunpack.c.l.b16 %v2873
        %v3135 = vunpack.c.l.b16 %v2874
        %v3136 = vunpack.c.l.b16 %v2875
        %v3137 = vunpack.c.l.b16 %v2876
        %v3138 = vunpack.c.l.b16 %v2877
        %v3139 = vunpack.c.l.b16 %v2878
        %v3140 = vunpack.c.l.b16 %v2879
        %v3141 = vunpack.c.l.b16 %v2880
        %v3142 = vunpack.c.l.b16 %v2881
        %v3143 = vunpack.c.l.b16 %v2882
        %v3144 = vunpack.c.l.b16 %v2883
        %v3145 = vunpack.c.l.b16 %v2884
        %v3146 = vunpack.c.l.b16 %v2885
        %v3147 = vunpack.c.l.b16 %v2886
        %v3148 = vunpack.c.l.b16 %v2887
        %v3149 = vunpack.c.l.b16 %v2888
        %v3150 = vunpack.c.l.b16 %v2889
        %v3151 = vunpack.c.l.b16 %v2890
        %v3152 = vunpack.c.l.b16 %v2891
        %v3153 = vunpack.c.l.b16 %v2892
        %v3154 = vunpack.c.l.b16 %v2893
        %v3155 = vunpack.c.l.b16 %v2894
        %v3156 = vunpack.c.l.b16 %v2895
        %v3157 = vunpack.c.l.b16 %v2896
        %v3158 = vunpack.c.l.b16 %v2897
        %v3159 = vunpack.c.l.b16 %v2898
        %v3160 = vunpack.c.l.b16 %v2899
        %v3161 = vunpack.c.l.b16 %v2900
        %v3162 = vunpack.c.l.b16 %v2901
        %v3163 = vunpack.c.l.b16 %v2902
        %v3164 = vunpack.c.l.b16 %v2903
        %v3165 = vunpack.c.l.b16 %v2904
        %v3166 = vunpack.c.l.b16 %v2905
        %v3167 = vunpack.c.l.b16 %v2906
        %v3168 = vunpack.c.l.b16 %v2907
        %v3169 = vunpack.c.l.b16 %v2908
        %v3170 = vunpack.c.l.b16 %v2909
        %v3171 = vunpack.c.l.b16 %v2910
        %v3172 = vunpack.c.l.b16 %v2911
        %v3173 = vunpack.c.l.b16 %v2912
        %v3174 = vunpack.c.l.b16 %v2913
        %v3175 = vunpack.c.l.b16 %v2914
        %v3176 = vunpack.c.l.b16 %v2915
        %v3177 = vunpack.c.l.b16 %v2916
        %v3178 = vunpack.c.l.b16 %v2917
        %v3179 = vunpack.c.l.b16 %v2918
        %v3180 = vunpack.c.l.b16 %v2919
        %v3181 = vunpack.c.l.b16 %v2920
        %v3182 = vunpack.c.l.b16 %v2921
        %v3183 = vunpack.c.l.b16 %v2922
        %v3184 = vunpack.c.l.b16 %v2923
        %v3185 = vunpack.c.l.b16 %v2924
        %v3186 = vunpack.c.l.b16 %v2925
        %v3187 = vunpack.c.l.b16 %v2926
        %v3188 = vunpack.c.l.b16 %v2927
        %v3189 = vunpack.c.l.b16 %v2928
        %v3190 = vunpack.c.l.b16 %v2929
        %v3191 = vunpack.c.l.b16 %v2930
        %v3192 = vunpack.c.l.b16 %v2931
        %v3193 = vunpack.c.l.b16 %v2932
        %v3194 = vunpack.c.l.b16 %v2933
        %v3195 = vunpack.c.l.b16 %v2934
        %v3196 = vunpack.c.l.b16 %v2935
        %v3197 = vunpack.c.l.b16 %v2936
        %v3198 = vunpack.c.l.b16 %v2937
        %v3199 = vunpack.c.l.b16 %v2938
        %v3200 = vunpack.c.l.b16 %v2939
        %v3201 = vunpack.c.l.b16 %v2940
        %v3202 = vunpack.c.l.b16 %v2941
        %v3203 = vunpack.c.l.b16 %v2942
        %v3204 = vunpack.c.l.b16 %v2943
        %v3205 = vunpack.c.l.b16 %v2944
        %v3206 = vunpack.c.l.b16 %v2945
        %v3207 = vunpack.c.l.b16 %v2946
        %v3208 = vunpack.c.l.b16 %v2947
        %v3209 = vunpack.c.l.b16 %v2948
        %v3210 = vunpack.c.l.b16 %v2949
        %v3211 = vunpack.c.l.b16 %v2950
        %v3212 = vunpack.c.l.b16 %v2951
        %v3213 = vunpack.c.l.b16 %v2952
        %v3214 = vunpack.c.l.b16 %v2953
        %v3215 = vunpack.c.l.b16 %v2954
        %v3216 = vunpack.c.l.b16 %v2955
        %v3217 = vunpack.c.l.b16 %v2956
        %v3218 = vunpack.c.l.b16 %v2957
        %v3219 = vunpack.c.l.b16 %v2958
        %v3220 = vunpack.c.l.b16 %v2959
        %v3221 = vunpack.c.l.b16 %v2960
        %v3222 = vunpack.c.l.b16 %v2961
        %v3223 = vunpack.c.l.b16 %v2962
        %v3224 = vunpack.c.l.b16 %v2963
        %v3225 = vunpack.c.l.b16 %v2964
        %v3226 = vunpack.c.l.b16 %v2965
        %v3227 = vunpack.c.l.b16 %v2966
        %v3228 = vunpack.c.l.b16 %v2967
        %v3229 = vunpack.c.l.b16 %v2968
        %v3230 = vunpack.c.l.b16 %v2969
        %v3231 = vunpack.c.l.b16 %v2970
        %v3232 = vunpack.c.l.b16 %v2971
        %v3233 = vunpack.c.l.b16 %v2972
        %v3234 = vunpack.c.l.b16 %v2973
        %v3235 = vunpack.c.l.b16 %v2974
        %v3236 = vunpack.c.l.b16 %v2975
        %v3237 = vunpack.c.l.b16 %v2976
        %v3238 = vunpack.c.l.b16 %v2977
        %v3239 = vunpack.c.l.b16 %v2978
        %v3240 = vunpack.c.l.b16 %v2979
        %v3241 = vunpack.c.l.b16 %v2980
        %v3242 = vunpack.c.l.b16 %v2981
        %v3243 = vunpack.c.l.b16 %v2982
        %v3244 = vunpack.c.l.b16 %v2983
        %v3245 = vunpack.c.l.b16 %v2984
        %v3246 = vunpack.c.l.b16 %v2985
        %v3247 = vunpack.c.l.b16 %v2986
        %v3248 = vunpack.c.l.b16 %v2987
        %v3249 = vpack.c.b16 %v3122, %v3121
        %v3250 = vpack.c.b16 %v3124, %v3123
        %v3251 = vpack.c.b16 %v3126, %v3125
        %v3252 = vpack.c.b16 %v3128, %v3127
        %v3253 = vpack.c.b16 %v3130, %v3129
        %v3254 = vpack.c.b16 %v3132, %v3131
        %v3255 = vpack.c.b16 %v3134, %v3133
        %v3256 = vpack.c.b16 %v3136, %v3135
        %v3257 = vpack.c.b16 %v3138, %v3137
        %v3258 = vpack.c.b16 %v3140, %v3139
        %v3259 = vpack.c.b16 %v3142, %v3141
        %v3260 = vpack.c.b16 %v3144, %v3143
        %v3261 = vpack.c.b16 %v3146, %v3145
        %v3262 = vpack.c.b16 %v3148, %v3147
        %v3263 = vpack.c.b16 %v3150, %v3149
        %v3264 = vpack.c.b16 %v3152, %v3151
        %v3265 = vpack.c.b16 %v3154, %v3153
        %v3266 = vpack.c.b16 %v3156, %v3155
        %v3267 = vpack.c.b16 %v3158, %v3157
        %v3268 = vpack.c.b16 %v3160, %v3159
        %v3269 = vpack.c.b16 %v3162, %v3161
        %v3270 = vpack.c.b16 %v3164, %v3163
        %v3271 = vpack.c.b16 %v3166, %v3165
        %v3272 = vpack.c.b16 %v3168, %v3167
        %v3273 = vpack.c.b16 %v3170, %v3169
        %v3274 = vpack.c.b16 %v3172, %v3171
        %v3275 = vpack.c.b16 %v3174, %v3173
        %v3276 = vpack.c.b16 %v3176, %v3175
        %v3277 = vpack.c.b16 %v3178, %v3177
        %v3278 = vpack.c.b16 %v3180, %v3179
        %v3279 = vpack.c.b16 %v3182, %v3181
        %v3280 = vpack.c.b16 %v3184, %v3183
        %v3281 = vpack.c.b16 %v3186, %v3185
        %v3282 = vpack.c.b16 %v3188, %v3187
        %v3283 = vpack.c.b16 %v3190, %v3189
        %v3284 = vpack.c.b16 %v3192, %v3191
        %v3285 = vpack.c.b16 %v3194, %v3193
        %v3286 = vpack.c.b16 %v3196, %v3195
        %v3287 = vpack.c.b16 %v3198, %v3197
        %v3288 = vpack.c.b16 %v3200, %v3199
        %v3289 = vpack.c.b16 %v3202, %v3201
        %v3290 = vpack.c.b16 %v3204, %v3203
        %v3291 = vpack.c.b16 %v3206, %v3205
        %v3292 = vpack.c.b16 %v3208, %v3207
        %v3293 = vpack.c.b16 %v3210, %v3209
        %v3294 = vpack.c.b16 %v3212, %v3211
        %v3295 = vpack.c.b16 %v3214, %v3213
        %v3296 = vpack.c.b16 %v3216, %v3215
        %v3297 = vpack.c.b16 %v3218, %v3217
        %v3298 = vpack.c.b16 %v3220, %v3219
        %v3299 = vpack.c.b16 %v3222, %v3221
        %v3300 = vpack.c.b16 %v3224, %v3223
        %v3301 = vpack.c.b16 %v3226, %v3225
        %v3302 = vpack.c.b16 %v3228, %v3227
        %v3303 = vpack.c.b16 %v3230, %v3229
        %v3304 = vpack.c.b16 %v3232, %v3231
        %v3305 = vpack.c.b16 %v3234, %v3233
        %v3306 = vpack.c.b16 %v3236, %v3235
        %v3307 = vpack.c.b16 %v3238, %v3237
        %v3308 = vpack.c.b16 %v3240, %v3239
        %v3309 = vpack.c.b16 %v3242, %v3241
        %v3310 = vpack.c.b16 %v3244, %v3243
        %v3311 = vpack.c.b16 %v3246, %v3245
        %v3312 = vpack.c.b16 %v3248, %v3247
        %3377 = vmatprep.subr.bf16.mxu0 0
        %3378 = vmatpush1.bf16.msra.mxu0 %v3256
        %3379 = vmatprep.subr.bf16.mxu0 0
        %3380 = vmatpush1.bf16.msra.mxu0 %v3255
        %3381 = vmatprep.subr.bf16.mxu0 0
        %3382 = vmatpush1.bf16.msra.mxu0 %v3254
        %3383 = vmatprep.subr.bf16.mxu0 0
        %3384 = vmatpush1.bf16.msra.mxu0 %v3253
        %3385 = vmatprep.subr.bf16.mxu0 0
        %3386 = vmatpush1.bf16.msra.mxu0 %v3252
        %3387 = vmatprep.subr.bf16.mxu0 0
        %3388 = vmatpush1.bf16.msra.mxu0 %v3251
        %3389 = vmatprep.subr.bf16.mxu0 0
        %3390 = vmatpush1.bf16.msra.mxu0 %v3250
        %3391 = vmatprep.subr.bf16.mxu0 0
        %3392 = vmatpush1.bf16.msra.mxu0 %v3249
        %3393 = vmatprep.subr.bf16.mxu0 0
        %3394 = vmatpush2.bf16.msra.mxu0 %v3264
        %3395 = vmatprep.subr.bf16.mxu0 0
        %3396 = vmatpush2.bf16.msra.mxu0 %v3263
        %3397 = vmatprep.subr.bf16.mxu0 0
        %3398 = vmatpush2.bf16.msra.mxu0 %v3262
        %3399 = vmatprep.subr.bf16.mxu0 0
        %3400 = vmatpush2.bf16.msra.mxu0 %v3261
        %3401 = vmatprep.subr.bf16.mxu0 0
        %3402 = vmatpush2.bf16.msra.mxu0 %v3260
        %3403 = vmatprep.subr.bf16.mxu0 0
        %3404 = vmatpush2.bf16.msra.mxu0 %v3259
        %3405 = vmatprep.subr.bf16.mxu0 0
        %3406 = vmatpush2.bf16.msra.mxu0 %v3258
        %3407 = vmatprep.subr.bf16.mxu0 0
        %3408 = vmatpush2.bf16.msra.mxu0 %v3257
        %3409 = vmatprep.mubr.bf16.mxu0 %v2853
        %3410 = vmatmul.mubr.bf16.gmra.mxu0 %v2852
        %v3411 = vpop.f32.mrf.mxu0
        %v3412 = vadd.f32 %v2992, %v3411
        %v3413 = vpop.f32.mrf.mxu0
        %v3414 = vpop.f32.mrf.mxu0
        %v3415 = vpop.f32.mrf.mxu0
        %3416 = vdwg.mxu0
        %3417 = vmatprep.subr.bf16.mxu0 0
        %3418 = vmatpush1.bf16.msra.mxu0 %v3272
        %3419 = vmatprep.subr.bf16.mxu0 0
        %3420 = vmatpush1.bf16.msra.mxu0 %v3271
        %3421 = vmatprep.subr.bf16.mxu0 0
        %3422 = vmatpush1.bf16.msra.mxu0 %v3270
        %3423 = vmatprep.subr.bf16.mxu0 0
        %3424 = vmatpush1.bf16.msra.mxu0 %v3269
        %3425 = vmatprep.subr.bf16.mxu0 0
        %3426 = vmatpush1.bf16.msra.mxu0 %v3268
        %3427 = vmatprep.subr.bf16.mxu0 0
        %3428 = vmatpush1.bf16.msra.mxu0 %v3267
        %3429 = vmatprep.subr.bf16.mxu0 0
        %3430 = vmatpush1.bf16.msra.mxu0 %v3266
        %3431 = vmatprep.subr.bf16.mxu0 0
        %3432 = vmatpush1.bf16.msra.mxu0 %v3265
        %3433 = vmatprep.subr.bf16.mxu0 0
        %3434 = vmatpush2.bf16.msra.mxu0 %v3280
        %3435 = vmatprep.subr.bf16.mxu0 0
        %3436 = vmatpush2.bf16.msra.mxu0 %v3279
        %3437 = vmatprep.subr.bf16.mxu0 0
        %3438 = vmatpush2.bf16.msra.mxu0 %v3278
        %3439 = vmatprep.subr.bf16.mxu0 0
        %3440 = vmatpush2.bf16.msra.mxu0 %v3277
        %3441 = vmatprep.subr.bf16.mxu0 0
        %3442 = vmatpush2.bf16.msra.mxu0 %v3276
        %3443 = vmatprep.subr.bf16.mxu0 0
        %3444 = vmatpush2.bf16.msra.mxu0 %v3275
        %3445 = vmatprep.subr.bf16.mxu0 0
        %3446 = vmatpush2.bf16.msra.mxu0 %v3274
        %3447 = vmatprep.subr.bf16.mxu0 0
        %3448 = vmatpush2.bf16.msra.mxu0 %v3273
        %3449 = vmatprep.mubr.bf16.mxu0 %v2855
        %3450 = vmatmul.mubr.bf16.gmra.mxu0 %v2854
        %v3451 = vpop.f32.mrf.mxu0
        %v3452 = vadd.f32 %v3412, %v3451
        %v3453 = vpop.f32.mrf.mxu0
        %v3454 = vpop.f32.mrf.mxu0
        %v3455 = vpop.f32.mrf.mxu0
        %3456 = vdwg.mxu0
        %3457 = vmatprep.subr.bf16.mxu0 0
        %3458 = vmatpush1.bf16.msra.mxu0 %v3288
        %3459 = vmatprep.subr.bf16.mxu0 0
        %3460 = vmatpush1.bf16.msra.mxu0 %v3287
        %3461 = vmatprep.subr.bf16.mxu0 0
        %3462 = vmatpush1.bf16.msra.mxu0 %v3286
        %3463 = vmatprep.subr.bf16.mxu0 0
        %3464 = vmatpush1.bf16.msra.mxu0 %v3285
        %3465 = vmatprep.subr.bf16.mxu0 0
        %3466 = vmatpush1.bf16.msra.mxu0 %v3284
        %3467 = vmatprep.subr.bf16.mxu0 0
        %3468 = vmatpush1.bf16.msra.mxu0 %v3283
        %3469 = vmatprep.subr.bf16.mxu0 0
        %3470 = vmatpush1.bf16.msra.mxu0 %v3282
        %3471 = vmatprep.subr.bf16.mxu0 0
        %3472 = vmatpush1.bf16.msra.mxu0 %v3281
        %3473 = vmatprep.subr.bf16.mxu0 0
        %3474 = vmatpush2.bf16.msra.mxu0 %v3296
        %3475 = vmatprep.subr.bf16.mxu0 0
        %3476 = vmatpush2.bf16.msra.mxu0 %v3295
        %3477 = vmatprep.subr.bf16.mxu0 0
        %3478 = vmatpush2.bf16.msra.mxu0 %v3294
        %3479 = vmatprep.subr.bf16.mxu0 0
        %3480 = vmatpush2.bf16.msra.mxu0 %v3293
        %3481 = vmatprep.subr.bf16.mxu0 0
        %3482 = vmatpush2.bf16.msra.mxu0 %v3292
        %3483 = vmatprep.subr.bf16.mxu0 0
        %3484 = vmatpush2.bf16.msra.mxu0 %v3291
        %3485 = vmatprep.subr.bf16.mxu0 0
        %3486 = vmatpush2.bf16.msra.mxu0 %v3290
        %3487 = vmatprep.subr.bf16.mxu0 0
        %3488 = vmatpush2.bf16.msra.mxu0 %v3289
        %3489 = vmatprep.mubr.bf16.mxu0 %v2857
        %3490 = vmatmul.mubr.bf16.gmra.mxu0 %v2856
        %v3491 = vpop.f32.mrf.mxu0
        %v3492 = vadd.f32 %v3452, %v3491
        %v3493 = vpop.f32.mrf.mxu0
        %v3494 = vpop.f32.mrf.mxu0
        %v3495 = vpop.f32.mrf.mxu0
        %3496 = vdwg.mxu0
        %3497 = vmatprep.subr.bf16.mxu0 0
        %3498 = vmatpush1.bf16.msra.mxu0 %v3304
        %3499 = vmatprep.subr.bf16.mxu0 0
        %3500 = vmatpush1.bf16.msra.mxu0 %v3303
        %3501 = vmatprep.subr.bf16.mxu0 0
        %3502 = vmatpush1.bf16.msra.mxu0 %v3302
        %3503 = vmatprep.subr.bf16.mxu0 0
        %3504 = vmatpush1.bf16.msra.mxu0 %v3301
        %3505 = vmatprep.subr.bf16.mxu0 0
        %3506 = vmatpush1.bf16.msra.mxu0 %v3300
        %3507 = vmatprep.subr.bf16.mxu0 0
        %3508 = vmatpush1.bf16.msra.mxu0 %v3299
        %3509 = vmatprep.subr.bf16.mxu0 0
        %3510 = vmatpush1.bf16.msra.mxu0 %v3298
        %3511 = vmatprep.subr.bf16.mxu0 0
        %3512 = vmatpush1.bf16.msra.mxu0 %v3297
        %3513 = vmatprep.subr.bf16.mxu0 0
        %3514 = vmatpush2.bf16.msra.mxu0 %v3312
        %3515 = vmatprep.subr.bf16.mxu0 0
        %3516 = vmatpush2.bf16.msra.mxu0 %v3311
        %3517 = vmatprep.subr.bf16.mxu0 0
        %3518 = vmatpush2.bf16.msra.mxu0 %v3310
        %3519 = vmatprep.subr.bf16.mxu0 0
        %3520 = vmatpush2.bf16.msra.mxu0 %v3309
        %3521 = vmatprep.subr.bf16.mxu0 0
        %3522 = vmatpush2.bf16.msra.mxu0 %v3308
        %3523 = vmatprep.subr.bf16.mxu0 0
        %3524 = vmatpush2.bf16.msra.mxu0 %v3307
        %3525 = vmatprep.subr.bf16.mxu0 0
        %3526 = vmatpush2.bf16.msra.mxu0 %v3306
        %3527 = vmatprep.subr.bf16.mxu0 0
        %3528 = vmatpush2.bf16.msra.mxu0 %v3305
        %3529 = vmatprep.mubr.bf16.mxu0 %v2859
        %3530 = vmatmul.mubr.bf16.gmra.mxu0 %v2858
        %v3531 = vpop.f32.mrf.mxu0
        %v3532 = vadd.f32 %v3492, %v3531
        %v3533 = vpop.f32.mrf.mxu0
        %v3534 = vpop.f32.mrf.mxu0
        %v3535 = vpop.f32.mrf.mxu0
        %3536 = vdwg.mxu0
        %v3537 = vmax.f32 %v3532, 0.0
        %v3538 = vpack.c.bf16 %v3537, %v3537
        %v3539 = vld [vmem:[%s5] sm:$0xf]
        %v3540 = vld [vmem:[%s5 + $0x4] sm:$0xf]
        %v3541 = vld [vmem:[%s5 + $0x8] sm:$0xf]
        %v3542 = vld [vmem:[%s5 + $0xc] sm:$0xf]
        %v3543 = vld [vmem:[%s5 + $0x10] sm:$0xf]
        %v3544 = vld [vmem:[%s5 + $0x14] sm:$0xf]
        %v3545 = vld [vmem:[%s5 + $0x18] sm:$0xf]
        %v3546 = vld [vmem:[%s5 + $0x1c] sm:$0xf]
        %v3547 = vld [vmem:[%s5 + $0x20] sm:$0xf]
        %v3548 = vld [vmem:[%s5 + $0x24] sm:$0xf]
        %v3549 = vld [vmem:[%s5 + $0x28] sm:$0xf]
        %v3550 = vld [vmem:[%s5 + $0x2c] sm:$0xf]
        %v3551 = vld [vmem:[%s5 + $0x30] sm:$0xf]
        %v3552 = vld [vmem:[%s5 + $0x34] sm:$0xf]
        %v3553 = vld [vmem:[%s5 + $0x38] sm:$0xf]
        %v3554 = vld [vmem:[%s5 + $0x3c] sm:$0xf]
        %v3555 = vld [vmem:[%s6 + $0x3] sm:$0x1]
        %v3556 = vlaneseq
        %v3557 = vshrl.u32 %v3556, 7
        %v3558 = vsub.s32 0, %v3557
        %v3559 = vrot.slane %v3555, %v3558
        %v3576 = vunpack.c.l.b16 %v3539
        %v3577 = vunpack.c.l.b16 %v3540
        %v3578 = vunpack.c.l.b16 %v3541
        %v3579 = vunpack.c.l.b16 %v3542
        %v3580 = vunpack.c.l.b16 %v3543
        %v3581 = vunpack.c.l.b16 %v3544
        %v3582 = vunpack.c.l.b16 %v3545
        %v3583 = vunpack.c.l.b16 %v3546
        %v3584 = vunpack.c.l.b16 %v3547
        %v3585 = vunpack.c.l.b16 %v3548
        %v3586 = vunpack.c.l.b16 %v3549
        %v3587 = vunpack.c.l.b16 %v3550
        %v3588 = vunpack.c.l.b16 %v3551
        %v3589 = vunpack.c.l.b16 %v3552
        %v3590 = vunpack.c.l.b16 %v3553
        %v3591 = vunpack.c.l.b16 %v3554
        %v3592 = vpack.c.b16 %v3577, %v3576
        %v3593 = vpack.c.b16 %v3579, %v3578
        %v3594 = vpack.c.b16 %v3581, %v3580
        %v3595 = vpack.c.b16 %v3583, %v3582
        %v3596 = vpack.c.b16 %v3585, %v3584
        %v3597 = vpack.c.b16 %v3587, %v3586
        %v3598 = vpack.c.b16 %v3589, %v3588
        %v3599 = vpack.c.b16 %v3591, %v3590
        %3608 = vmatprep.subr.bf16.mxu0 0
        %3609 = vmatpush1.bf16.msra.mxu0 %v3599
        %3610 = vmatprep.subr.bf16.mxu0 0
        %3611 = vmatpush1.bf16.msra.mxu0 %v3598
        %3612 = vmatprep.subr.bf16.mxu0 0
        %3613 = vmatpush1.bf16.msra.mxu0 %v3597
        %3614 = vmatprep.subr.bf16.mxu0 0
        %3615 = vmatpush1.bf16.msra.mxu0 %v3596
        %3616 = vmatprep.subr.bf16.mxu0 0
        %3617 = vmatpush1.bf16.msra.mxu0 %v3595
        %3618 = vmatprep.subr.bf16.mxu0 0
        %3619 = vmatpush1.bf16.msra.mxu0 %v3594
        %3620 = vmatprep.subr.bf16.mxu0 0
        %3621 = vmatpush1.bf16.msra.mxu0 %v3593
        %3622 = vmatprep.subr.bf16.mxu0 0
        %3623 = vmatpush1.bf16.msra.mxu0 %v3592
        %3624 = vmatprep.subr.bf16.mxu0 0
        %3625 = vmatpush2.bf16.msra.mxu0 0
        %3626 = vmatprep.subr.bf16.mxu0 0
        %3627 = vmatpush2.bf16.msra.mxu0 0
        %3628 = vmatprep.subr.bf16.mxu0 0
        %3629 = vmatpush2.bf16.msra.mxu0 0
        %3630 = vmatprep.subr.bf16.mxu0 0
        %3631 = vmatpush2.bf16.msra.mxu0 0
        %3632 = vmatprep.subr.bf16.mxu0 0
        %3633 = vmatpush2.bf16.msra.mxu0 0
        %3634 = vmatprep.subr.bf16.mxu0 0
        %3635 = vmatpush2.bf16.msra.mxu0 0
        %3636 = vmatprep.subr.bf16.mxu0 0
        %3637 = vmatpush2.bf16.msra.mxu0 0
        %3638 = vmatprep.subr.bf16.mxu0 0
        %3639 = vmatpush2.bf16.msra.mxu0 0
        %3640 = vmatprep.mubr.bf16.mxu0 0
        %3641 = vmatmul.mubr.bf16.gmra.mxu0 %v3538
        %v3642 = vpop.f32.mrf.mxu0
        %v3643 = vadd.f32 %v3559, %v3642
        %v3644 = vpop.f32.mrf.mxu0
        %v3645 = vpop.f32.mrf.mxu0
        %v3646 = vpop.f32.mrf.mxu0
        %3647 = vdwg.mxu0
        %3648 = vst [vmem:[%s304] sm:$0xff] %v3643
        %s3649 = sand.u32 %s183, 1
        %s3650 = scalar_lea.sflag [#allocation4], %s3649
        %s3651 = sand.u32 %s183, 1
        %s3652 = smul.addr %s3651, 8
        %s3653 = scalar_lea.vmem [#allocation7], %s3652
        // Predicated region
        $region57: #{lenet_forward.1} parent=47 // pred_check
          %p3654 = pneg %p193
        $region58: #{lenet_forward.1} parent=47 // pred_check_branch
          %3656 = sbr.rel (%p3654) target = $region60
        $region59: #{lenet_forward.1} parent=47 // pred_region
          %s3658 = ssub.s32 128, 128
          %3659 = vsyncadd %s3650, %s3658
          %s3660 = smul.addr %s23, 128
          %s3661 = scalar_lea.hbm %s7, %s3660
          %s3663 = sshll.u32 %s3653, 4
          %s3664 = int_to_ptr.vmem [resolvable:$true] %s3663
          %3666 = dma.vmem_to_hbm [thread:$0]  %s3664, 128, %s3661, %s3650
        $region60: #{lenet_forward.1} parent=47 // pred_fallthru
          _
      $region48: #{lenet_forward.1} parent=5 // pred_fallthru
        _
      %p3667 = scmp.le.s32.totalorder 2, %s18
      // Predicated region
      $region61: #{lenet_forward.1} parent=5 // pred_check
        %p3668 = pneg %p3667
      $region62: #{lenet_forward.1} parent=5 // pred_check_branch
        %3670 = sbr.rel (%p3668) target = $region64
      $region63: #{lenet_forward.1} parent=5 // pred_region
        %s3671 = ssub.s32 %s18, 2
        // Predicated region
        $region65: #{lenet_forward.1} parent=63 // pred_check
          %p3672 = pneg %p199
        $region66: #{lenet_forward.1} parent=63 // pred_check_branch
          %3674 = sbr.rel (%p3672) target = $region68
        $region67: #{lenet_forward.1} parent=63 // pred_region
          %s3675 = sand.u32 %s184, 1
          %s3676 = scalar_lea.sflag [#allocation4], %s3675
          %s3677 = sand.u32 %s184, 1
          %s3678 = smul.addr %s3677, 8
          %s3679 = scalar_lea.vmem [#allocation7], %s3678
          %3680 = dma.done %s3676, 128
        $region68: #{lenet_forward.1} parent=63 // pred_fallthru
          _
      $region64: #{lenet_forward.1} parent=5 // pred_fallthru
        _
    $region6: #{lenet_forward.1} parent=1 // loop_footer
      %s22 = sadd.s32 1, %s18
    $region7: #{lenet_forward.1} parent=1 // loop_footer_branch
      %17 = sbr.rel target = $region3
    $region8: #{lenet_forward.1} parent=1 // loop_exit
      _
    %3681 = vsyncpa [#allocation3], 1
    %s3682 = scalar_lea.sflag [#allocation3], 1
    %3683 = vsyncpa %s3682, 1
    %3684 = vsyncpa [#allocation6], 1
    %3685 = vsyncpa [#allocation4], 1
    %s3686 = scalar_lea.sflag [#allocation4], 1
    %3687 = vsyncpa %s3686, 1

</llo_original>
